<compile_context>
chip_gen: v5e
topology: v5e:2x2
jax: 0.10.0
libtpu: 0.0.40
codegen_flags: <defaults>
</compile_context>

<pallas_src>
from functools import partial

import jax
import jax.numpy as jnp
from jax import lax
from jax.experimental import pallas as pl
from jax.experimental.pallas import tpu as pltpu

EPS = 1e-6  # TODO(synk): the custom RMSNorm's eps is not shown; assuming 1e-6
            # and that it normalizes over the channel axis of the [B,C,L] tensor.


def _fat_conv(inp_f32, w_ref, offsets, masks):
    """Same-padded 1D conv over the flattened row axis as ONE fat MXU matmul.

    inp_f32 : (N, C) f32 rows, N = TB*L (batch-major, per-batch length L)
    w_ref   : (len(offsets)*C, C) weight ref, taps stacked along the K axis
    offsets : static tap offsets, e.g. (-2,-1,0,1,2)
    masks   : {off: (N,1) f32 0/1} rows whose tap crosses a batch boundary or
              the sequence edge read zero (same-padding).
    Taps are cast to the weight dtype right before the concat, so the fat
    operand lives in bf16 in the production path while mask math stays f32.
    """
    N = inp_f32.shape[0]
    wdt = w_ref.dtype
    taps = []
    for off in offsets:
        if off == 0:
            taps.append(inp_f32.astype(wdt))
        else:
            rolled = pltpu.roll(inp_f32, shift=(-off) % N, axis=0)  # rolled[l] = inp[l+off]
            taps.append((rolled * masks[off]).astype(wdt))
    fat = jnp.concatenate(taps, axis=-1)                            # (N, ntaps*C)
    prec = lax.Precision.HIGHEST if wdt == jnp.float32 else None
    return jnp.dot(fat, w_ref[...], preferred_element_type=jnp.float32,
                   precision=prec)


def conv_block_kernel(x_ref, w1_ref, w2_ref, scal_ref, o_ref):
    TB, L, C = x_ref.shape
    N = TB * L
    x = x_ref[...].astype(jnp.float32).reshape(N, C)   # f32 rows for residual/norms

    # per-row position inside its own batch element; one cheap (N,1) column
    pos = lax.broadcasted_iota(jnp.int32, (N, 1), 0) % L
    masks = {off: ((pos + off >= 0) & (pos + off < L)).astype(jnp.float32)
             for off in (-2, -1, 1, 2)}

    b1 = scal_ref[0:1, :]
    g1 = scal_ref[1:2, :]
    g2 = scal_ref[2:3, :]
    beta2 = scal_ref[3:4, :]

    # Conv1d(C->C, k=5, stride=1, pad=2, bias=True): one (N,5C)x(5C,C) matmul
    y = _fat_conv(x, w1_ref, (-2, -1, 0, 1, 2), masks) + b1

    # RMSNorm over channels (scale only), then SiLU
    y = y * lax.rsqrt(jnp.mean(y * y, axis=-1, keepdims=True) + EPS) * g1
    y = y * jax.nn.sigmoid(y)

    # Conv2d(C->C, 3x3, pad=1, bias=False) on an H==1 signal: only the center
    # kernel row contributes -> 3-tap conv, one (N,3C)x(3C,C) matmul.
    # TODO(synk): valid only while the spatial height seen by the Conv2d is 1.
    y = _fat_conv(y, w2_ref, (-1, 0, 1), masks)

    # residual + RMSNorm(bias=True) over channels
    y = y + x
    y = y * lax.rsqrt(jnp.mean(y * y, axis=-1, keepdims=True) + EPS) * g2 + beta2

    # avg_pool1d(kernel=2, stride=2): pair-sum straight from registers, no
    # scratch round trip / strided read.
    # TODO(synk): F.dropout(p=0.2) runs in training mode in the reference; this
    # kernel implements the deterministic (eval) path, i.e. dropout = identity.
    pooled = 0.5 * jnp.sum(y.reshape(TB, L // 2, 2, C), axis=2)
    o_ref[...] = pooled.astype(o_ref.dtype)


def _vmem_capacity_bytes():
    try:
        return int(pltpu.get_tpu_info().vmem_capacity_bytes)
    except Exception:
        return 64 * 1024 * 1024  # conservative (v7x-sized) fallback


def _pick_tb(B, L, C, vmem_bytes):
    """Generation-aware block choice.

    v7x (<=96 MiB VMEM, 2 TensorCores): keep the input block <= ~2 MiB and
    prefer an even grid count >= 4 so both cores get pipelined, balanced work.
    v5e/v6e (128 MiB VMEM, 1 TC): the grid is a sequential loop, so take the
    largest block that fits a ~6 MiB budget (fewest, fattest steps).
    """
    two_cores = vmem_bytes <= 96 * 1024 * 1024
    max_block_bytes = (2 if two_cores else 6) * 1024 * 1024
    divs = [t for t in range(1, B + 1)
            if B % t == 0 and t * L * C * 4 <= max_block_bytes] or [1]
    if not two_cores:
        return max(divs)
    for pred in (lambda t: (B // t) % 2 == 0 and B // t >= 4,
                 lambda t: (B // t) % 2 == 0,
                 lambda t: True):
        ok = [t for t in divs if pred(t)]
        if ok:
            return max(ok)
    return max(divs)


@partial(jax.jit, static_argnames=("compute_dtype", "tb"))
def conv_block(x, w1, b1, g1, w2, g2, beta2, *,
               compute_dtype=jnp.bfloat16, tb=None):
    """x: (B, L, C), f32 or bf16 (output dtype follows x.dtype).
    Weights use PyTorch layouts: w1 (C,C,5), b1 (C,), g1 (C,), w2 (C,C,3,3),
    g2 (C,), beta2 (C,)."""
    B, L, C = x.shape
    assert L % 2 == 0, "avg_pool1d(2,2) needs even L"
    vmem_cap = _vmem_capacity_bytes()
    if tb is None:
        tb = _pick_tb(B, L, C, vmem_cap)
    assert B % tb == 0
    grid = (B // tb,)

    # Reorient weights so each tap is a (Cin, Cout) operand, stacked along K so
    # the whole conv is a single fat matmul inside the kernel.  (Fuses into the
    # same jit executable, so no per-call eager repacking dispatches.)
    w1_p = jnp.transpose(w1, (2, 1, 0)).reshape(5 * C, C).astype(compute_dtype)
    w2_p = (jnp.transpose(w2[:, :, 1, :], (2, 1, 0))       # center kernel row only
            .reshape(3 * C, C).astype(compute_dtype))
    scal = jnp.stack([b1, g1, g2, beta2], axis=0).astype(jnp.float32)   # (4, C)

    # VMEM budget: double-buffered x/out blocks, conv weights, fat bf16/f32
    # operands + f32 temporaries; clamped to ~75% of physical VMEM (48 MiB on
    # v7x, 96 MiB on v5e/v6e) so Mosaic keeps internal-scratch headroom.
    io_bytes = jnp.dtype(x.dtype).itemsize
    cd_bytes = jnp.dtype(compute_dtype).itemsize
    n = tb * L
    est = (2 * n * C * io_bytes + n * C * io_bytes
           + 2 * 8 * C * C * cd_bytes
           + n * C * (8 * cd_bytes + 10 * 4))
    vmem_limit = int(min((vmem_cap * 3) // 4, max(32 * 1024 * 1024, est)))

    # TODO(synk): with C < 128 the output stores are lane-masked; keep C a
    # multiple of 128 in production for lane-dense stores and full MXU N.
    return pl.pallas_call(
        conv_block_kernel,
        out_shape=jax.ShapeDtypeStruct((B, L // 2, C), x.dtype),
        grid=grid,
        in_specs=[
            pl.BlockSpec((tb, L, C), lambda g: (g, 0, 0)),
            pl.BlockSpec((5 * C, C), lambda g: (0, 0)),
            pl.BlockSpec((3 * C, C), lambda g: (0, 0)),
            pl.BlockSpec((4, C), lambda g: (0, 0)),
        ],
        out_specs=pl.BlockSpec((tb, L // 2, C), lambda g: (g, 0, 0)),
        compiler_params=pltpu.CompilerParams(
            dimension_semantics=("parallel",),
            vmem_limit_bytes=vmem_limit),
    )(x, w1_p, w2_p, scal)


def ref_forward(x, w1, b1, g1, w2, g2, beta2):
    """Pure-JAX reference of the intended forward (NCL internally, like PyTorch)."""
    xt = jnp.transpose(x, (0, 2, 1))                                   # (B, C, L)
    y = lax.conv_general_dilated(xt, w1, (1,), [(2, 2)],
                                 dimension_numbers=("NCH", "OIH", "NCH"),
                                 precision=lax.Precision.HIGHEST)
    y = y + b1[None, :, None]
    ms = jnp.mean(y * y, axis=1, keepdims=True)
    y = y * lax.rsqrt(ms + EPS) * g1[None, :, None]
    y = y * jax.nn.sigmoid(y)
    y = lax.conv_general_dilated(y, w2[:, :, 1, :], (1,), [(1, 1)],
                                 dimension_numbers=("NCH", "OIH", "NCH"),
                                 precision=lax.Precision.HIGHEST)
    y = y + xt
    ms = jnp.mean(y * y, axis=1, keepdims=True)
    y = y * lax.rsqrt(ms + EPS) * g2[None, :, None] + beta2[None, :, None]
    B, C, L = y.shape
    y = y.reshape(B, C, L // 2, 2).mean(-1)                            # avg_pool1d(2,2)
    return jnp.transpose(y, (0, 2, 1))


if __name__ == "__main__":
    # Residual path requires in_channels == out_channels; C=128 keeps the MXU /
    # stores lane-dense while the overall demo problem stays tiny.  (Real
    # workloads should aim for TB*L >= ~512 rows per grid step.)
    B, L, C = 8, 16, 128
    key = jax.random.PRNGKey(0)
    ks = jax.random.split(key, 7)
    x = jax.random.normal(ks[0], (B, L, C), jnp.float32)
    w1 = jax.random.normal(ks[1], (C, C, 5), jnp.float32) * 0.1
    b1 = jax.random.normal(ks[2], (C,), jnp.float32) * 0.1
    g1 = 1.0 + 0.05 * jax.random.normal(ks[3], (C,), jnp.float32)
    w2 = jax.random.normal(ks[4], (C, C, 3, 3), jnp.float32) * 0.1
    g2 = 1.0 + 0.05 * jax.random.normal(ks[5], (C,), jnp.float32)
    beta2 = 0.05 * jax.random.normal(ks[6], (C,), jnp.float32)

    ref = ref_forward(x, w1, b1, g1, w2, g2, beta2)

    # exact path: f32 I/O + f32 MXU operands at HIGHEST precision -> tight check
    out = jax.block_until_ready(
        conv_block(x, w1, b1, g1, w2, g2, beta2, compute_dtype=jnp.float32))
    assert out.shape == (B, L // 2, C), out.shape
    if not jnp.allclose(out, ref, rtol=1e-3, atol=1e-3):
        max_err = float(jnp.max(jnp.abs(out - ref)))
        raise AssertionError(f"f32 kernel mismatch vs reference, max_err={max_err}")

    # production path: bf16 HBM I/O + bf16 MXU operands (f32 accumulation/norms)
    out_bf16 = jax.block_until_ready(
        conv_block(x.astype(jnp.bfloat16), w1, b1, g1, w2, g2, beta2,
                   compute_dtype=jnp.bfloat16))
    assert out_bf16.dtype == jnp.bfloat16
    if not jnp.allclose(out_bf16.astype(jnp.float32), ref, rtol=8e-2, atol=1.5e-1):
        max_err = float(jnp.max(jnp.abs(out_bf16.astype(jnp.float32) - ref)))
        raise AssertionError(f"bf16 kernel mismatch vs reference, max_err={max_err}")

    print("KERNEL_OK")
</pallas_src>

<mosaic_0001>
module attributes {stable_mosaic.version = 11 : i64} {
  func.func @conv_block_kernel(%arg0: i32, %arg1: memref<2x16x128xf32, #tpu.memory_space<vmem>>, %arg2: memref<640x128xf32, #tpu.memory_space<vmem>>, %arg3: memref<384x128xf32, #tpu.memory_space<vmem>>, %arg4: memref<4x128xf32, #tpu.memory_space<vmem>>, %arg5: memref<2x8x128xf32, #tpu.memory_space<vmem>>) attributes {dimension_semantics = [#tpu.dimension_semantics<parallel>], iteration_bounds = array<i64: 4>, scalar_prefetch = 0 : i64, scratch_operands = 0 : i64, tpu.core_type = #tpu.core_type<tc>, window_params = [{transform_indices = @transform_0, window_bounds = array<i64: 2, 16, 128>}, {pipeline_mode = #tpu.pipeline_mode<synchronous>, transform_indices = @transform_1, window_bounds = array<i64: 640, 128>}, {pipeline_mode = #tpu.pipeline_mode<synchronous>, transform_indices = @transform_2, window_bounds = array<i64: 384, 128>}, {pipeline_mode = #tpu.pipeline_mode<synchronous>, transform_indices = @transform_3, window_bounds = array<i64: 4, 128>}, {transform_indices = @transform_4, window_bounds = array<i64: 2, 8, 128>}]} {
    %c0 = arith.constant 0 : index
    %c0_0 = arith.constant 0 : index
    %c0_1 = arith.constant 0 : index
    %0 = vector.load %arg1[%c0, %c0_0, %c0_1] : memref<2x16x128xf32, #tpu.memory_space<vmem>>, vector<2x16x128xf32>
    %1 = vector.shape_cast %0 : vector<2x16x128xf32> to vector<32x128xf32>
    %2 = tpu.iota {dimensions = array<i32: 0>} : vector<32x1xi32>
    %c16_i32 = arith.constant 16 : i32
    %c0_i32 = arith.constant 0 : i32
    %3 = arith.cmpi eq, %c16_i32, %c0_i32 : i32
    %c1_i32 = arith.constant 1 : i32
    %4 = arith.select %3, %c1_i32, %c16_i32 : i32
    %5 = vector.broadcast %4 : i32 to vector<32x1xi32>
    %6 = arith.remsi %2, %5 : vector<32x1xi32>
    %c0_i32_2 = arith.constant 0 : i32
    %7 = vector.broadcast %c0_i32_2 : i32 to vector<32x1xi32>
    %8 = arith.cmpi ne, %6, %7 : vector<32x1xi32>
    %c0_i32_3 = arith.constant 0 : i32
    %9 = vector.broadcast %c0_i32_3 : i32 to vector<32x1xi32>
    %10 = arith.cmpi slt, %6, %9 : vector<32x1xi32>
    %c0_i32_4 = arith.constant 0 : i32
    %11 = arith.cmpi slt, %4, %c0_i32_4 : i32
    %12 = vector.broadcast %11 : i1 to vector<32x1xi1>
    %13 = vector.broadcast %12 : vector<32x1xi1> to vector<32x1xi1>
    %14 = arith.xori %10, %13 : vector<32x1xi1>
    %15 = arith.andi %14, %8 : vector<32x1xi1>
    %16 = vector.broadcast %4 : i32 to vector<32x1xi32>
    %17 = arith.addi %6, %16 : vector<32x1xi32>
    %18 = arith.select %15, %17, %6 : vector<32x1xi1>, vector<32x1xi32>
    %c-2_i32 = arith.constant -2 : i32
    %19 = vector.broadcast %c-2_i32 : i32 to vector<32x1xi32>
    %20 = arith.addi %18, %19 : vector<32x1xi32>
    %c0_i32_5 = arith.constant 0 : i32
    %21 = vector.broadcast %c0_i32_5 : i32 to vector<32x1xi32>
    %22 = arith.cmpi sge, %20, %21 : vector<32x1xi32>
    %c-2_i32_6 = arith.constant -2 : i32
    %23 = vector.broadcast %c-2_i32_6 : i32 to vector<32x1xi32>
    %24 = arith.addi %18, %23 : vector<32x1xi32>
    %c16_i32_7 = arith.constant 16 : i32
    %25 = vector.broadcast %c16_i32_7 : i32 to vector<32x1xi32>
    %26 = arith.cmpi slt, %24, %25 : vector<32x1xi32>
    %27 = arith.andi %22, %26 : vector<32x1xi1>
    %28 = arith.extui %27 : vector<32x1xi1> to vector<32x1xi32>
    %29 = arith.sitofp %28 : vector<32x1xi32> to vector<32x1xf32>
    %c-1_i32 = arith.constant -1 : i32
    %30 = vector.broadcast %c-1_i32 : i32 to vector<32x1xi32>
    %31 = arith.addi %18, %30 : vector<32x1xi32>
    %c0_i32_8 = arith.constant 0 : i32
    %32 = vector.broadcast %c0_i32_8 : i32 to vector<32x1xi32>
    %33 = arith.cmpi sge, %31, %32 : vector<32x1xi32>
    %c-1_i32_9 = arith.constant -1 : i32
    %34 = vector.broadcast %c-1_i32_9 : i32 to vector<32x1xi32>
    %35 = arith.addi %18, %34 : vector<32x1xi32>
    %c16_i32_10 = arith.constant 16 : i32
    %36 = vector.broadcast %c16_i32_10 : i32 to vector<32x1xi32>
    %37 = arith.cmpi slt, %35, %36 : vector<32x1xi32>
    %38 = arith.andi %33, %37 : vector<32x1xi1>
    %39 = arith.extui %38 : vector<32x1xi1> to vector<32x1xi32>
    %40 = arith.sitofp %39 : vector<32x1xi32> to vector<32x1xf32>
    %c1_i32_11 = arith.constant 1 : i32
    %41 = vector.broadcast %c1_i32_11 : i32 to vector<32x1xi32>
    %42 = arith.addi %18, %41 : vector<32x1xi32>
    %c0_i32_12 = arith.constant 0 : i32
    %43 = vector.broadcast %c0_i32_12 : i32 to vector<32x1xi32>
    %44 = arith.cmpi sge, %42, %43 : vector<32x1xi32>
    %c1_i32_13 = arith.constant 1 : i32
    %45 = vector.broadcast %c1_i32_13 : i32 to vector<32x1xi32>
    %46 = arith.addi %18, %45 : vector<32x1xi32>
    %c16_i32_14 = arith.constant 16 : i32
    %47 = vector.broadcast %c16_i32_14 : i32 to vector<32x1xi32>
    %48 = arith.cmpi slt, %46, %47 : vector<32x1xi32>
    %49 = arith.andi %44, %48 : vector<32x1xi1>
    %50 = arith.extui %49 : vector<32x1xi1> to vector<32x1xi32>
    %51 = arith.sitofp %50 : vector<32x1xi32> to vector<32x1xf32>
    %c2_i32 = arith.constant 2 : i32
    %52 = vector.broadcast %c2_i32 : i32 to vector<32x1xi32>
    %53 = arith.addi %18, %52 : vector<32x1xi32>
    %c0_i32_15 = arith.constant 0 : i32
    %54 = vector.broadcast %c0_i32_15 : i32 to vector<32x1xi32>
    %55 = arith.cmpi sge, %53, %54 : vector<32x1xi32>
    %c2_i32_16 = arith.constant 2 : i32
    %56 = vector.broadcast %c2_i32_16 : i32 to vector<32x1xi32>
    %57 = arith.addi %18, %56 : vector<32x1xi32>
    %c16_i32_17 = arith.constant 16 : i32
    %58 = vector.broadcast %c16_i32_17 : i32 to vector<32x1xi32>
    %59 = arith.cmpi slt, %57, %58 : vector<32x1xi32>
    %60 = arith.andi %55, %59 : vector<32x1xi1>
    %61 = arith.extui %60 : vector<32x1xi1> to vector<32x1xi32>
    %62 = arith.sitofp %61 : vector<32x1xi32> to vector<32x1xf32>
    %c0_18 = arith.constant 0 : index
    %c0_19 = arith.constant 0 : index
    %63 = vector.load %arg4[%c0_18, %c0_19] : memref<4x128xf32, #tpu.memory_space<vmem>>, vector<1x128xf32>
    %c1 = arith.constant 1 : index
    %c0_20 = arith.constant 0 : index
    %64 = vector.load %arg4[%c1, %c0_20] : memref<4x128xf32, #tpu.memory_space<vmem>>, vector<1x128xf32>
    %c2 = arith.constant 2 : index
    %c0_21 = arith.constant 0 : index
    %65 = vector.load %arg4[%c2, %c0_21] : memref<4x128xf32, #tpu.memory_space<vmem>>, vector<1x128xf32>
    %c3 = arith.constant 3 : index
    %c0_22 = arith.constant 0 : index
    %66 = vector.load %arg4[%c3, %c0_22] : memref<4x128xf32, #tpu.memory_space<vmem>>, vector<1x128xf32>
    %c2_i32_23 = arith.constant 2 : i32
    %67 = tpu.dynamic_rotate %1 by %c2_i32_23 dim 0 : vector<32x128xf32>, i32 -> vector<32x128xf32>
    %68 = vector.broadcast %29 : vector<32x1xf32> to vector<32x128xf32>
    %69 = arith.mulf %67, %68 : vector<32x128xf32>
    %c1_i32_24 = arith.constant 1 : i32
    %70 = tpu.dynamic_rotate %1 by %c1_i32_24 dim 0 : vector<32x128xf32>, i32 -> vector<32x128xf32>
    %71 = vector.broadcast %40 : vector<32x1xf32> to vector<32x128xf32>
    %72 = arith.mulf %70, %71 : vector<32x128xf32>
    %c31_i32 = arith.constant 31 : i32
    %73 = tpu.dynamic_rotate %1 by %c31_i32 dim 0 : vector<32x128xf32>, i32 -> vector<32x128xf32>
    %74 = vector.broadcast %51 : vector<32x1xf32> to vector<32x128xf32>
    %75 = arith.mulf %73, %74 : vector<32x128xf32>
    %c30_i32 = arith.constant 30 : i32
    %76 = tpu.dynamic_rotate %1 by %c30_i32 dim 0 : vector<32x128xf32>, i32 -> vector<32x128xf32>
    %77 = vector.broadcast %62 : vector<32x1xf32> to vector<32x128xf32>
    %78 = arith.mulf %76, %77 : vector<32x128xf32>
    %79 = tpu.concatenate %69, %72, %1, %75, %78 in 1 : vector<32x128xf32>, vector<32x128xf32>, vector<32x128xf32>, vector<32x128xf32>, vector<32x128xf32> -> vector<32x640xf32>
    %c0_25 = arith.constant 0 : index
    %c0_26 = arith.constant 0 : index
    %80 = vector.load %arg2[%c0_25, %c0_26] : memref<640x128xf32, #tpu.memory_space<vmem>>, vector<640x128xf32>
    %cst = arith.constant dense<0.000000e+00> : vector<32x128xf32>
    %81 = tpu.matmul %79, %80, %cst {dimension_numbers = #tpu.dot_dimension_numbers<[1], [0], [0], [1], [0, 0, 1, 1], [], []>, precision = #tpu.contract_precision<fp32>} : vector<32x640xf32>, vector<640x128xf32>, vector<32x128xf32> -> vector<32x128xf32>
    %82 = vector.broadcast %63 : vector<1x128xf32> to vector<32x128xf32>
    %83 = arith.addf %81, %82 : vector<32x128xf32>
    %84 = arith.mulf %83, %83 : vector<32x128xf32>
    %cst_27 = arith.constant dense<0.000000e+00> : vector<32xf32>
    %85 = vector.multi_reduction <add>, %84, %cst_27 [1] : vector<32x128xf32> to vector<32xf32>
    %86 = vector.shape_cast %85 : vector<32xf32> to vector<32x1xf32>
    %cst_28 = arith.constant 1.280000e+02 : f32
    %87 = vector.broadcast %cst_28 : f32 to vector<32x1xf32>
    %88 = arith.divf %86, %87 : vector<32x1xf32>
    %cst_29 = arith.constant 9.99999997E-7 : f32
    %89 = vector.broadcast %cst_29 : f32 to vector<32x1xf32>
    %90 = arith.addf %88, %89 : vector<32x1xf32>
    %91 = math.rsqrt %90 : vector<32x1xf32>
    %92 = vector.broadcast %91 : vector<32x1xf32> to vector<32x128xf32>
    %93 = arith.mulf %83, %92 : vector<32x128xf32>
    %94 = vector.broadcast %64 : vector<1x128xf32> to vector<32x128xf32>
    %95 = arith.mulf %93, %94 : vector<32x128xf32>
    %96 = arith.negf %95 : vector<32x128xf32>
    %97 = math.exp %96 : vector<32x128xf32>
    %cst_30 = arith.constant 1.000000e+00 : f32
    %98 = vector.broadcast %cst_30 : f32 to vector<32x128xf32>
    %99 = arith.addf %98, %97 : vector<32x128xf32>
    %100 = arith.divf %98, %99 : vector<32x128xf32>
    %101 = arith.mulf %95, %100 : vector<32x128xf32>
    %c1_i32_31 = arith.constant 1 : i32
    %102 = tpu.dynamic_rotate %101 by %c1_i32_31 dim 0 : vector<32x128xf32>, i32 -> vector<32x128xf32>
    %103 = vector.broadcast %40 : vector<32x1xf32> to vector<32x128xf32>
    %104 = arith.mulf %102, %103 : vector<32x128xf32>
    %c31_i32_32 = arith.constant 31 : i32
    %105 = tpu.dynamic_rotate %101 by %c31_i32_32 dim 0 : vector<32x128xf32>, i32 -> vector<32x128xf32>
    %106 = vector.broadcast %51 : vector<32x1xf32> to vector<32x128xf32>
    %107 = arith.mulf %105, %106 : vector<32x128xf32>
    %108 = tpu.concatenate %104, %101, %107 in 1 : vector<32x128xf32>, vector<32x128xf32>, vector<32x128xf32> -> vector<32x384xf32>
    %c0_33 = arith.constant 0 : index
    %c0_34 = arith.constant 0 : index
    %109 = vector.load %arg3[%c0_33, %c0_34] : memref<384x128xf32, #tpu.memory_space<vmem>>, vector<384x128xf32>
    %cst_35 = arith.constant dense<0.000000e+00> : vector<32x128xf32>
    %110 = tpu.matmul %108, %109, %cst_35 {dimension_numbers = #tpu.dot_dimension_numbers<[1], [0], [0], [1], [0, 0, 1, 1], [], []>, precision = #tpu.contract_precision<fp32>} : vector<32x384xf32>, vector<384x128xf32>, vector<32x128xf32> -> vector<32x128xf32>
    %111 = arith.addf %110, %1 : vector<32x128xf32>
    %112 = arith.mulf %111, %111 : vector<32x128xf32>
    %cst_36 = arith.constant dense<0.000000e+00> : vector<32xf32>
    %113 = vector.multi_reduction <add>, %112, %cst_36 [1] : vector<32x128xf32> to vector<32xf32>
    %114 = vector.shape_cast %113 : vector<32xf32> to vector<32x1xf32>
    %cst_37 = arith.constant 1.280000e+02 : f32
    %115 = vector.broadcast %cst_37 : f32 to vector<32x1xf32>
    %116 = arith.divf %114, %115 : vector<32x1xf32>
    %cst_38 = arith.constant 9.99999997E-7 : f32
    %117 = vector.broadcast %cst_38 : f32 to vector<32x1xf32>
    %118 = arith.addf %116, %117 : vector<32x1xf32>
    %119 = math.rsqrt %118 : vector<32x1xf32>
    %120 = vector.broadcast %119 : vector<32x1xf32> to vector<32x128xf32>
    %121 = arith.mulf %111, %120 : vector<32x128xf32>
    %122 = vector.broadcast %65 : vector<1x128xf32> to vector<32x128xf32>
    %123 = arith.mulf %121, %122 : vector<32x128xf32>
    %124 = vector.broadcast %66 : vector<1x128xf32> to vector<32x128xf32>
    %125 = arith.addf %123, %124 : vector<32x128xf32>
    %126 = vector.shape_cast %125 : vector<32x128xf32> to vector<2x8x2x128xf32>
    %cst_39 = arith.constant dense<0.000000e+00> : vector<2x8x128xf32>
    %127 = vector.multi_reduction <add>, %126, %cst_39 [2] : vector<2x8x2x128xf32> to vector<2x8x128xf32>
    %cst_40 = arith.constant 5.000000e-01 : f32
    %128 = vector.broadcast %cst_40 : f32 to vector<2x8x128xf32>
    %129 = arith.mulf %128, %127 : vector<2x8x128xf32>
    %c0_41 = arith.constant 0 : index
    %c0_42 = arith.constant 0 : index
    %c0_43 = arith.constant 0 : index
    %130 = vector.load %arg5[%c0_41, %c0_42, %c0_43] : memref<2x8x128xf32, #tpu.memory_space<vmem>>, vector<2x8x128xf32>
    tpu.vector_store %arg5[%c0_41, %c0_42, %c0_43], %129 {strides = array<i32>} : memref<2x8x128xf32, #tpu.memory_space<vmem>>, vector<2x8x128xf32>,
    return
  }
  func.func @transform_0(%arg0: i32) -> (i32, i32, i32) {
    %c0_i32 = arith.constant 0 : i32
    %c0_i32_0 = arith.constant 0 : i32
    %c0_i32_1 = arith.constant 0 : i32
    return %arg0, %c0_i32, %c0_i32_0 : i32, i32, i32
  }
  func.func @transform_1(%arg0: i32) -> (i32, i32) {
    %c0_i32 = arith.constant 0 : i32
    %c0_i32_0 = arith.constant 0 : i32
    %c0_i32_1 = arith.constant 0 : i32
    return %c0_i32, %c0_i32_0 : i32, i32
  }
  func.func @transform_2(%arg0: i32) -> (i32, i32) {
    %c0_i32 = arith.constant 0 : i32
    %c0_i32_0 = arith.constant 0 : i32
    %c0_i32_1 = arith.constant 0 : i32
    return %c0_i32, %c0_i32_0 : i32, i32
  }
  func.func @transform_3(%arg0: i32) -> (i32, i32) {
    %c0_i32 = arith.constant 0 : i32
    %c0_i32_0 = arith.constant 0 : i32
    %c0_i32_1 = arith.constant 0 : i32
    return %c0_i32, %c0_i32_0 : i32, i32
  }
  func.func @transform_4(%arg0: i32) -> (i32, i32, i32) {
    %c0_i32 = arith.constant 0 : i32
    %c0_i32_0 = arith.constant 0 : i32
    %c0_i32_1 = arith.constant 0 : i32
    return %arg0, %c0_i32, %c0_i32_0 : i32, i32, i32
  }
}

</mosaic_0001>

<llo_original>
// kernel: conv_block.1
$region0: #{conv_block.1}
  #allocation0 [shape = 'u32[]', space=smem, size = 0x4, offset = 0x4, fixed_abs, tag = 'smem constant byte address 0x4 - core index']
  #allocation1 [shape = 'u32[72,128]{1,0:T(1,128)}', space=vmem, size = 0x9000, scoped, tag = 'internal scratch']
  %s0 = inlined_call_operand.vmem [shape: f32[8,16,128], index: 0, kind: input, shape index: {}]
  %s1 = inlined_call_operand.vmem [shape: f32[640,128], index: 1, kind: input, shape index: {}]
  %s2 = inlined_call_operand.vmem [shape: f32[384,128], index: 2, kind: input, shape index: {}]
  %s3 = inlined_call_operand.vmem [shape: f32[4,128], index: 3, kind: input, shape index: {}]
  %s4 = inlined_call_operand.hbm [shape: f32[8,8,128], index: 4, kind: output, shape index: {}]
  %s5 = sld [smem:[#allocation0]]
  $region49: #{conv_block.1} parent=0
    _
  %s7 = ssub.s32 1, %s5
  %s8 = scalar_select 0, %s7, %s5
  $region1: #{conv_block.1} parent=0
    #allocation2 [shape = 'u8[16384]{0}', space=vmem, size = 0x4000, scoped, tag = 'output window, operand 0']
    #allocation3 [shape = 's32[2]{0}', space=sflag, size = 0x8, scoped, tag = 'scoped memory for conv_block.1']
    %9 = vsyncpa [#allocation3], 0
    %s10 = scalar_lea.sflag [#allocation3], 1
    %11 = vsyncpa %s10, 0
    loop: start=0, step=1, limit=6
    $region2: #{conv_block.1} parent=1 // loop_pre_header
      _
    $region3: #{conv_block.1} parent=1 // loop_header
      %s13 = sphi 0, %s17
      %p14 = scmp.ge.s32.totalorder %s13, 6
      %s23 = sphi 0, %s25
      %s26 = sphi 0, %s23
      %s27 = sphi 0, %s26
      %s43 = sphi 0, %s27
      %s47 = sphi 0, %s47
      %s49 = sphi 0, %s47
      %s50 = sphi 0, %s49
      %s64 = sphi 0, %s50
      %s68 = sphi 0, %s68
      %s70 = sphi 0, %s68
      %s71 = sphi 0, %s70
      %s85 = sphi 0, %s71
      %s89 = sphi 0, %s89
      %s91 = sphi 0, %s89
      %s92 = sphi 0, %s91
      %s106 = sphi 0, %s92
      %s112 = sphi 0, %s114
      %s115 = sphi 0, %s112
      %s116 = sphi 0, %s115
      %s132 = sphi 0, %s116
    $region4: #{conv_block.1} parent=1 // loop_header_branch
      %16 = sbr.rel (%p14) target = $region8
    $region5: #{conv_block.1} parent=1 // loop_body
      %s18 = ssub.s32 %s13, 1
      %s19 = ssub.s32 %s13, 2
      %s20 = sadd.s32 %s13, 1
      %s21 = ssub.s32 %s13, %s20
      %p22 = scmp.eq.s32.totalorder %s21, 0
      %s24 = sadd.s32 %s23, 1
      %s25 = scalar_select %p22, %s23, %s24
      %p28 = pneg %p22
      %p29 = scmp.eq.s32.totalorder %s13, 3
      %p30 = por %p28, %p29
      %p31 = scmp.ne.s32.totalorder %s23, %s26
      %p32 = scmp.eq.s32.totalorder %s13, 0
      %p33 = por %p31, %p32
      %p34 = scmp.ne.s32.totalorder %s23, %s26
      %p35 = scmp.eq.s32.totalorder %s18, 3
      %p36 = por %p34, %p35
      %p37 = scmp.ne.s32.totalorder %s26, %s27
      %p38 = scmp.eq.s32.totalorder %s18, 0
      %p39 = por %p37, %p38
      %p40 = scmp.ne.s32.totalorder %s26, %s27
      %p41 = scmp.eq.s32.totalorder %s19, 3
      %p42 = por %p40, %p41
      %p44 = scmp.ne.s32.totalorder %s27, %s43
      %p45 = scmp.eq.s32.totalorder %s19, 0
      %p46 = por %p44, %p45
      %s48 = sadd.s32 %s47, 1
      %p51 = scmp.eq.s32.totalorder %s13, 3
      %p52 = scmp.ne.s32.totalorder %s47, %s49
      %p53 = scmp.eq.s32.totalorder %s13, 0
      %p54 = por %p52, %p53
      %p55 = scmp.ne.s32.totalorder %s47, %s49
      %p56 = scmp.eq.s32.totalorder %s18, 3
      %p57 = por %p55, %p56
      %p58 = scmp.ne.s32.totalorder %s49, %s50
      %p59 = scmp.eq.s32.totalorder %s18, 0
      %p60 = por %p58, %p59
      %p61 = scmp.ne.s32.totalorder %s49, %s50
      %p62 = scmp.eq.s32.totalorder %s19, 3
      %p63 = por %p61, %p62
      %p65 = scmp.ne.s32.totalorder %s50, %s64
      %p66 = scmp.eq.s32.totalorder %s19, 0
      %p67 = por %p65, %p66
      %s69 = sadd.s32 %s68, 1
      %p72 = scmp.eq.s32.totalorder %s13, 3
      %p73 = scmp.ne.s32.totalorder %s68, %s70
      %p74 = scmp.eq.s32.totalorder %s13, 0
      %p75 = por %p73, %p74
      %p76 = scmp.ne.s32.totalorder %s68, %s70
      %p77 = scmp.eq.s32.totalorder %s18, 3
      %p78 = por %p76, %p77
      %p79 = scmp.ne.s32.totalorder %s70, %s71
      %p80 = scmp.eq.s32.totalorder %s18, 0
      %p81 = por %p79, %p80
      %p82 = scmp.ne.s32.totalorder %s70, %s71
      %p83 = scmp.eq.s32.totalorder %s19, 3
      %p84 = por %p82, %p83
      %p86 = scmp.ne.s32.totalorder %s71, %s85
      %p87 = scmp.eq.s32.totalorder %s19, 0
      %p88 = por %p86, %p87
      %s90 = sadd.s32 %s89, 1
      %p93 = scmp.eq.s32.totalorder %s13, 3
      %p94 = scmp.ne.s32.totalorder %s89, %s91
      %p95 = scmp.eq.s32.totalorder %s13, 0
      %p96 = por %p94, %p95
      %p97 = scmp.ne.s32.totalorder %s89, %s91
      %p98 = scmp.eq.s32.totalorder %s18, 3
      %p99 = por %p97, %p98
      %p100 = scmp.ne.s32.totalorder %s91, %s92
      %p101 = scmp.eq.s32.totalorder %s18, 0
      %p102 = por %p100, %p101
      %p103 = scmp.ne.s32.totalorder %s91, %s92
      %p104 = scmp.eq.s32.totalorder %s19, 3
      %p105 = por %p103, %p104
      %p107 = scmp.ne.s32.totalorder %s92, %s106
      %p108 = scmp.eq.s32.totalorder %s19, 0
      %p109 = por %p107, %p108
      %s110 = ssub.s32 %s13, %s20
      %p111 = scmp.eq.s32.totalorder %s110, 0
      %s113 = sadd.s32 %s112, 1
      %s114 = scalar_select %p111, %s112, %s113
      %p117 = pneg %p111
      %p118 = scmp.eq.s32.totalorder %s13, 3
      %p119 = por %p117, %p118
      %p120 = scmp.ne.s32.totalorder %s112, %s115
      %p121 = scmp.eq.s32.totalorder %s13, 0
      %p122 = por %p120, %p121
      %p123 = scmp.ne.s32.totalorder %s112, %s115
      %p124 = scmp.eq.s32.totalorder %s18, 3
      %p125 = por %p123, %p124
      %p126 = scmp.ne.s32.totalorder %s115, %s116
      %p127 = scmp.eq.s32.totalorder %s18, 0
      %p128 = por %p126, %p127
      %p129 = scmp.ne.s32.totalorder %s115, %s116
      %p130 = scmp.eq.s32.totalorder %s19, 3
      %p131 = por %p129, %p130
      %p133 = scmp.ne.s32.totalorder %s116, %s132
      %p134 = scmp.eq.s32.totalorder %s19, 0
      %p135 = por %p133, %p134
      %p136 = scmp.le.s32.totalorder 1, %s13
      %p137 = scmp.lt.s32.totalorder %s13, 5
      %p138 = pnand %p136, %p137
      %p139 = pneg %p138
      // Predicated region
      $region9: #{conv_block.1} parent=5 // pred_check
        _
      $region10: #{conv_block.1} parent=5 // pred_check_branch
        %141 = sbr.rel (%p138) target = $region12
      $region11: #{conv_block.1} parent=5 // pred_region
        %s142 = ssub.s32 %s13, 1
        // Predicated region
        $region13: #{conv_block.1} parent=11 // pred_check
          %p143 = pneg %p60
        $region14: #{conv_block.1} parent=11 // pred_check_branch
          %145 = sbr.rel (%p143) target = $region16
        $region15: #{conv_block.1} parent=11 // pred_region
          _
        $region16: #{conv_block.1} parent=11 // pred_fallthru
          _
        // Predicated region
        $region17: #{conv_block.1} parent=11 // pred_check
          %p146 = pneg %p81
        $region18: #{conv_block.1} parent=11 // pred_check_branch
          %148 = sbr.rel (%p146) target = $region20
        $region19: #{conv_block.1} parent=11 // pred_region
          _
        $region20: #{conv_block.1} parent=11 // pred_fallthru
          _
        // Predicated region
        $region21: #{conv_block.1} parent=11 // pred_check
          %p149 = pneg %p102
        $region22: #{conv_block.1} parent=11 // pred_check_branch
          %151 = sbr.rel (%p149) target = $region24
        $region23: #{conv_block.1} parent=11 // pred_region
          _
        $region24: #{conv_block.1} parent=11 // pred_fallthru
          _
      $region12: #{conv_block.1} parent=5 // pred_fallthru
        _
      %p152 = scmp.lt.s32.totalorder %s13, 4
      // Predicated region
      $region25: #{conv_block.1} parent=5 // pred_check
        %p153 = pneg %p152
      $region26: #{conv_block.1} parent=5 // pred_check_branch
        %155 = sbr.rel (%p153) target = $region28
      $region27: #{conv_block.1} parent=5 // pred_region
        // Predicated region
        $region29: #{conv_block.1} parent=27 // pred_check
          %p156 = pneg %p33
        $region30: #{conv_block.1} parent=27 // pred_check_branch
          %158 = sbr.rel (%p156) target = $region32
        $region31: #{conv_block.1} parent=27 // pred_region
          %s159 = smul.u32 2, %s13
          %p160 = scmp.lt.s32.totalorder %s159, 7
          %s161 = scalar_select %p160, %s159, 7
          %s162 = smul.addr %s161, 2
          %s163 = smul.addr %s162, 8
          %s164 = scalar_lea.vmem %s0, %s163
          %s165 = smul.u32 2, %s13
        $region32: #{conv_block.1} parent=27 // pred_fallthru
          _
      $region28: #{conv_block.1} parent=5 // pred_fallthru
        _
      %p166 = scmp.le.s32.totalorder 1, %s13
      %p167 = scmp.lt.s32.totalorder %s13, 5
      %p168 = pnand %p166, %p167
      %p169 = pneg %p168
      // Predicated region
      $region33: #{conv_block.1} parent=5 // pred_check
        _
      $region34: #{conv_block.1} parent=5 // pred_check_branch
        %171 = sbr.rel (%p168) target = $region36
      $region35: #{conv_block.1} parent=5 // pred_region
        %s172 = ssub.s32 %s13, 1
        %s173 = smul.u32 2, %s18
        %p174 = scmp.lt.s32.totalorder %s173, 7
        %s175 = scalar_select %p174, %s173, 7
        %s176 = smul.addr %s175, 2
        %s177 = smul.addr %s176, 8
        %s178 = scalar_lea.vmem %s0, %s177
        %p179 = pneg %p39
        %p180 = pneg %p36
        %p181 = pneg %p60
        %p182 = pneg %p57
        %p183 = pneg %p81
        %p184 = pneg %p78
        %p185 = pneg %p102
        %p186 = pneg %p99
        %p187 = pneg %p128
        %p188 = pneg %p125
        %s189 = sand.u32 %s115, 1
        %s190 = scalar_lea.sflag [#allocation3], %s189
        %s191 = sand.u32 %s115, 1
        %s192 = smul.addr %s191, 16
        %s193 = scalar_lea.vmem [#allocation2], %s192
        %s194 = smul.u32 2, %s18
        %p195 = scmp.lt.s32.totalorder %s194, 7
        %s196 = scalar_select %p195, %s194, 7
        %s197 = smul.addr %s196, 2
        %s198 = smul.addr %s197, 8
        %s199 = scalar_lea.vmem %s0, %s198
        %s200 = smul.u32 2, %s18
        %s201 = smul.u32 2, %s18
        %v202 = vld [vmem:[%s199] sm:$0xff]
        %v203 = vld [vmem:[%s199 + $0x8] sm:$0xff]
        %v204 = vld [vmem:[%s199 + $0x10] sm:$0xff]
        %v205 = vld [vmem:[%s199 + $0x18] sm:$0xff]
        %v206 = vlaneseq
        %v207 = vshrl.u32 %v206, 7
        %v208 = vadd.s32 %v207, 8
        %v209 = vadd.s32 %v207, 16
        %v210 = vadd.s32 %v207, 24
        %vm211 = vcmp.lt.s32.totalorder %v207, 0
        %v212 = vsub.s32 0, %v207
        %v213 = vsel %vm211, %v212, %v207
        %v214 = vshrl.u32 %v213, 4
        %v215 = vand.u32 %v213, 15
        %v216 = vsub.s32 0, %v215
        %v217 = vsel %vm211, %v216, %v215
        %vm218 = vcmp.lt.s32.totalorder %v208, 0
        %v219 = vsub.s32 0, %v208
        %v220 = vsel %vm218, %v219, %v208
        %v221 = vshrl.u32 %v220, 4
        %v222 = vand.u32 %v220, 15
        %v223 = vsub.s32 0, %v222
        %v224 = vsel %vm218, %v223, %v222
        %vm225 = vcmp.lt.s32.totalorder %v209, 0
        %v226 = vsub.s32 0, %v209
        %v227 = vsel %vm225, %v226, %v209
        %v228 = vshrl.u32 %v227, 4
        %v229 = vand.u32 %v227, 15
        %v230 = vsub.s32 0, %v229
        %v231 = vsel %vm225, %v230, %v229
        %vm232 = vcmp.lt.s32.totalorder %v210, 0
        %v233 = vsub.s32 0, %v210
        %v234 = vsel %vm232, %v233, %v210
        %v235 = vshrl.u32 %v234, 4
        %v236 = vand.u32 %v234, 15
        %v237 = vsub.s32 0, %v236
        %v238 = vsel %vm232, %v237, %v236
        %vm239 = vcmp.ne.s32.totalorder %v217, 0
        %vm240 = vcmp.ne.s32.totalorder %v224, 0
        %vm241 = vcmp.ne.s32.totalorder %v231, 0
        %vm242 = vcmp.ne.s32.totalorder %v238, 0
        %vm243 = vcmp.lt.s32.totalorder %v217, 0
        %vm244 = vcmp.lt.s32.totalorder %v224, 0
        %vm245 = vcmp.lt.s32.totalorder %v231, 0
        %vm246 = vcmp.lt.s32.totalorder %v238, 0
        %vm247 = vmand %vm243, %vm239
        %vm248 = vmand %vm244, %vm240
        %vm249 = vmand %vm245, %vm241
        %vm250 = vmand %vm246, %vm242
        %v251 = vadd.s32 %v217, 16
        %v252 = vadd.s32 %v224, 16
        %v253 = vadd.s32 %v231, 16
        %v254 = vadd.s32 %v238, 16
        %v255 = vsel %vm247, %v251, %v217
        %v256 = vsel %vm248, %v252, %v224
        %v257 = vsel %vm249, %v253, %v231
        %v258 = vsel %vm250, %v254, %v238
        %v259 = vadd.s32 %v255, 4294967294
        %v260 = vadd.s32 %v256, 4294967294
        %v261 = vadd.s32 %v257, 4294967294
        %v262 = vadd.s32 %v258, 4294967294
        %vm263 = vcmp.ge.s32.totalorder %v259, 0
        %vm264 = vcmp.ge.s32.totalorder %v260, 0
        %vm265 = vcmp.ge.s32.totalorder %v261, 0
        %vm266 = vcmp.ge.s32.totalorder %v262, 0
        %vm267 = vcmp.lt.s32.totalorder %v259, 16
        %vm268 = vcmp.lt.s32.totalorder %v260, 16
        %vm269 = vcmp.lt.s32.totalorder %v261, 16
        %vm270 = vcmp.lt.s32.totalorder %v262, 16
        %vm271 = vmand %vm263, %vm267
        %vm272 = vmand %vm264, %vm268
        %vm273 = vmand %vm265, %vm269
        %vm274 = vmand %vm266, %vm270
        %v275 = vsel %vm271, 1, 0
        %v276 = vsel %vm272, 1, 0
        %v277 = vsel %vm273, 1, 0
        %v278 = vsel %vm274, 1, 0
        %v279 = vcvt.s32.f32 %v275
        %v280 = vcvt.s32.f32 %v276
        %v281 = vcvt.s32.f32 %v277
        %v282 = vcvt.s32.f32 %v278
        %v283 = vadd.s32 %v255, 4294967295
        %v284 = vadd.s32 %v256, 4294967295
        %v285 = vadd.s32 %v257, 4294967295
        %v286 = vadd.s32 %v258, 4294967295
        %vm287 = vcmp.ge.s32.totalorder %v283, 0
        %vm288 = vcmp.ge.s32.totalorder %v284, 0
        %vm289 = vcmp.ge.s32.totalorder %v285, 0
        %vm290 = vcmp.ge.s32.totalorder %v286, 0
        %vm291 = vcmp.lt.s32.totalorder %v283, 16
        %vm292 = vcmp.lt.s32.totalorder %v284, 16
        %vm293 = vcmp.lt.s32.totalorder %v285, 16
        %vm294 = vcmp.lt.s32.totalorder %v286, 16
        %vm295 = vmand %vm287, %vm291
        %vm296 = vmand %vm288, %vm292
        %vm297 = vmand %vm289, %vm293
        %vm298 = vmand %vm290, %vm294
        %v299 = vsel %vm295, 1, 0
        %v300 = vsel %vm296, 1, 0
        %v301 = vsel %vm297, 1, 0
        %v302 = vsel %vm298, 1, 0
        %v303 = vcvt.s32.f32 %v299
        %v304 = vcvt.s32.f32 %v300
        %v305 = vcvt.s32.f32 %v301
        %v306 = vcvt.s32.f32 %v302
        %v307 = vadd.s32 %v255, 1
        %v308 = vadd.s32 %v256, 1
        %v309 = vadd.s32 %v257, 1
        %v310 = vadd.s32 %v258, 1
        %vm311 = vcmp.ge.s32.totalorder %v307, 0
        %vm312 = vcmp.ge.s32.totalorder %v308, 0
        %vm313 = vcmp.ge.s32.totalorder %v309, 0
        %vm314 = vcmp.ge.s32.totalorder %v310, 0
        %vm315 = vcmp.lt.s32.totalorder %v307, 16
        %vm316 = vcmp.lt.s32.totalorder %v308, 16
        %vm317 = vcmp.lt.s32.totalorder %v309, 16
        %vm318 = vcmp.lt.s32.totalorder %v310, 16
        %vm319 = vmand %vm311, %vm315
        %vm320 = vmand %vm312, %vm316
        %vm321 = vmand %vm313, %vm317
        %vm322 = vmand %vm314, %vm318
        %v323 = vsel %vm319, 1, 0
        %v324 = vsel %vm320, 1, 0
        %v325 = vsel %vm321, 1, 0
        %v326 = vsel %vm322, 1, 0
        %v327 = vcvt.s32.f32 %v323
        %v328 = vcvt.s32.f32 %v324
        %v329 = vcvt.s32.f32 %v325
        %v330 = vcvt.s32.f32 %v326
        %v331 = vadd.s32 %v255, 2
        %v332 = vadd.s32 %v256, 2
        %v333 = vadd.s32 %v257, 2
        %v334 = vadd.s32 %v258, 2
        %vm335 = vcmp.ge.s32.totalorder %v331, 0
        %vm336 = vcmp.ge.s32.totalorder %v332, 0
        %vm337 = vcmp.ge.s32.totalorder %v333, 0
        %vm338 = vcmp.ge.s32.totalorder %v334, 0
        %vm339 = vcmp.lt.s32.totalorder %v331, 16
        %vm340 = vcmp.lt.s32.totalorder %v332, 16
        %vm341 = vcmp.lt.s32.totalorder %v333, 16
        %vm342 = vcmp.lt.s32.totalorder %v334, 16
        %vm343 = vmand %vm335, %vm339
        %vm344 = vmand %vm336, %vm340
        %vm345 = vmand %vm337, %vm341
        %vm346 = vmand %vm338, %vm342
        %v347 = vsel %vm343, 1, 0
        %v348 = vsel %vm344, 1, 0
        %v349 = vsel %vm345, 1, 0
        %v350 = vsel %vm346, 1, 0
        %v351 = vcvt.s32.f32 %v347
        %v352 = vcvt.s32.f32 %v348
        %v353 = vcvt.s32.f32 %v349
        %v354 = vcvt.s32.f32 %v350
        %v355 = vld [vmem:[%s3] sm:$0x1]
        %v356 = vld [vmem:[%s3 + $0x1] sm:$0x1]
        %v357 = vld [vmem:[%s3 + $0x2] sm:$0x1]
        %v358 = vld [vmem:[%s3 + $0x3] sm:$0x1]
        %v359 = vrot.slane %v202, 6
        %v360 = vrot.slane %v203, 6
        %v361 = vrot.slane %v204, 6
        %v362 = vrot.slane %v205, 6
        %vm363 = vcmp.lt.s32.totalorder %v207, 2
        %v364 = vsel %vm363, %v361, %v362
        %v365 = vsel %vm363, %v360, %v361
        %v366 = vsel %vm363, %v359, %v360
        %v367 = vsel %vm363, %v362, %v359
        %v368 = vmul.f32 %v367, %v279
        %v369 = vmul.f32 %v366, %v280
        %v370 = vmul.f32 %v365, %v281
        %v371 = vmul.f32 %v364, %v282
        %v372 = vrot.slane %v202, 7
        %v373 = vrot.slane %v203, 7
        %v374 = vrot.slane %v204, 7
        %v375 = vrot.slane %v205, 7
        %vm376 = vcmp.lt.s32.totalorder %v207, 1
        %v377 = vsel %vm376, %v374, %v375
        %v378 = vsel %vm376, %v373, %v374
        %v379 = vsel %vm376, %v372, %v373
        %v380 = vsel %vm376, %v375, %v372
        %v381 = vmul.f32 %v380, %v303
        %v382 = vmul.f32 %v379, %v304
        %v383 = vmul.f32 %v378, %v305
        %v384 = vmul.f32 %v377, %v306
        %v385 = vrot.slane %v202, 1
        %v386 = vrot.slane %v203, 1
        %v387 = vrot.slane %v204, 1
        %v388 = vrot.slane %v205, 1
        %vm389 = vcmp.lt.s32.totalorder %v207, 7
        %v390 = vsel %vm389, %v387, %v388
        %v391 = vsel %vm389, %v386, %v387
        %v392 = vsel %vm389, %v385, %v386
        %v393 = vsel %vm389, %v388, %v385
        %v394 = vmul.f32 %v392, %v327
        %v395 = vmul.f32 %v391, %v328
        %v396 = vmul.f32 %v390, %v329
        %v397 = vmul.f32 %v393, %v330
        %v398 = vrot.slane %v202, 2
        %v399 = vrot.slane %v203, 2
        %v400 = vrot.slane %v204, 2
        %v401 = vrot.slane %v205, 2
        %vm402 = vcmp.lt.s32.totalorder %v207, 6
        %v403 = vsel %vm402, %v400, %v401
        %v404 = vsel %vm402, %v399, %v400
        %v405 = vsel %vm402, %v398, %v399
        %v406 = vsel %vm402, %v401, %v398
        %v407 = vmul.f32 %v405, %v351
        %v408 = vmul.f32 %v404, %v352
        %v409 = vmul.f32 %v403, %v353
        %v410 = vmul.f32 %v406, %v354
        %v411 = vld [vmem:[%s1] sm:$0xff]
        %v412 = vld [vmem:[%s1 + $0x8] sm:$0xff]
        %v413 = vld [vmem:[%s1 + $0x10] sm:$0xff]
        %v414 = vld [vmem:[%s1 + $0x18] sm:$0xff]
        %v415 = vld [vmem:[%s1 + $0x20] sm:$0xff]
        %v416 = vld [vmem:[%s1 + $0x28] sm:$0xff]
        %v417 = vld [vmem:[%s1 + $0x30] sm:$0xff]
        %v418 = vld [vmem:[%s1 + $0x38] sm:$0xff]
        %v419 = vld [vmem:[%s1 + $0x40] sm:$0xff]
        %v420 = vld [vmem:[%s1 + $0x48] sm:$0xff]
        %v421 = vld [vmem:[%s1 + $0x50] sm:$0xff]
        %v422 = vld [vmem:[%s1 + $0x58] sm:$0xff]
        %v423 = vld [vmem:[%s1 + $0x60] sm:$0xff]
        %v424 = vld [vmem:[%s1 + $0x68] sm:$0xff]
        %v425 = vld [vmem:[%s1 + $0x70] sm:$0xff]
        %v426 = vld [vmem:[%s1 + $0x78] sm:$0xff]
        %v427 = vld [vmem:[%s1 + $0x80] sm:$0xff]
        %v428 = vld [vmem:[%s1 + $0x88] sm:$0xff]
        %v429 = vld [vmem:[%s1 + $0x90] sm:$0xff]
        %v430 = vld [vmem:[%s1 + $0x98] sm:$0xff]
        %v431 = vld [vmem:[%s1 + $0xa0] sm:$0xff]
        %v432 = vld [vmem:[%s1 + $0xa8] sm:$0xff]
        %v433 = vld [vmem:[%s1 + $0xb0] sm:$0xff]
        %v434 = vld [vmem:[%s1 + $0xb8] sm:$0xff]
        %v435 = vld [vmem:[%s1 + $0xc0] sm:$0xff]
        %v436 = vld [vmem:[%s1 + $0xc8] sm:$0xff]
        %v437 = vld [vmem:[%s1 + $0xd0] sm:$0xff]
        %v438 = vld [vmem:[%s1 + $0xd8] sm:$0xff]
        %v439 = vld [vmem:[%s1 + $0xe0] sm:$0xff]
        %v440 = vld [vmem:[%s1 + $0xe8] sm:$0xff]
        %v441 = vld [vmem:[%s1 + $0xf0] sm:$0xff]
        %v442 = vld [vmem:[%s1 + $0xf8] sm:$0xff]
        %v443 = vld [vmem:[%s1 + $0x100] sm:$0xff]
        %v444 = vld [vmem:[%s1 + $0x108] sm:$0xff]
        %v445 = vld [vmem:[%s1 + $0x110] sm:$0xff]
        %v446 = vld [vmem:[%s1 + $0x118] sm:$0xff]
        %v447 = vld [vmem:[%s1 + $0x120] sm:$0xff]
        %v448 = vld [vmem:[%s1 + $0x128] sm:$0xff]
        %v449 = vld [vmem:[%s1 + $0x130] sm:$0xff]
        %v450 = vld [vmem:[%s1 + $0x138] sm:$0xff]
        %v451 = vld [vmem:[%s1 + $0x140] sm:$0xff]
        %v452 = vld [vmem:[%s1 + $0x148] sm:$0xff]
        %v453 = vld [vmem:[%s1 + $0x150] sm:$0xff]
        %v454 = vld [vmem:[%s1 + $0x158] sm:$0xff]
        %v455 = vld [vmem:[%s1 + $0x160] sm:$0xff]
        %v456 = vld [vmem:[%s1 + $0x168] sm:$0xff]
        %v457 = vld [vmem:[%s1 + $0x170] sm:$0xff]
        %v458 = vld [vmem:[%s1 + $0x178] sm:$0xff]
        %v459 = vld [vmem:[%s1 + $0x180] sm:$0xff]
        %v460 = vld [vmem:[%s1 + $0x188] sm:$0xff]
        %v461 = vld [vmem:[%s1 + $0x190] sm:$0xff]
        %v462 = vld [vmem:[%s1 + $0x198] sm:$0xff]
        %v463 = vld [vmem:[%s1 + $0x1a0] sm:$0xff]
        %v464 = vld [vmem:[%s1 + $0x1a8] sm:$0xff]
        %v465 = vld [vmem:[%s1 + $0x1b0] sm:$0xff]
        %v466 = vld [vmem:[%s1 + $0x1b8] sm:$0xff]
        %v467 = vld [vmem:[%s1 + $0x1c0] sm:$0xff]
        %v468 = vld [vmem:[%s1 + $0x1c8] sm:$0xff]
        %v469 = vld [vmem:[%s1 + $0x1d0] sm:$0xff]
        %v470 = vld [vmem:[%s1 + $0x1d8] sm:$0xff]
        %v471 = vld [vmem:[%s1 + $0x1e0] sm:$0xff]
        %v472 = vld [vmem:[%s1 + $0x1e8] sm:$0xff]
        %v473 = vld [vmem:[%s1 + $0x1f0] sm:$0xff]
        %v474 = vld [vmem:[%s1 + $0x1f8] sm:$0xff]
        %v475 = vld [vmem:[%s1 + $0x200] sm:$0xff]
        %v476 = vld [vmem:[%s1 + $0x208] sm:$0xff]
        %v477 = vld [vmem:[%s1 + $0x210] sm:$0xff]
        %v478 = vld [vmem:[%s1 + $0x218] sm:$0xff]
        %v479 = vld [vmem:[%s1 + $0x220] sm:$0xff]
        %v480 = vld [vmem:[%s1 + $0x228] sm:$0xff]
        %v481 = vld [vmem:[%s1 + $0x230] sm:$0xff]
        %v482 = vld [vmem:[%s1 + $0x238] sm:$0xff]
        %v483 = vld [vmem:[%s1 + $0x240] sm:$0xff]
        %v484 = vld [vmem:[%s1 + $0x248] sm:$0xff]
        %v485 = vld [vmem:[%s1 + $0x250] sm:$0xff]
        %v486 = vld [vmem:[%s1 + $0x258] sm:$0xff]
        %v487 = vld [vmem:[%s1 + $0x260] sm:$0xff]
        %v488 = vld [vmem:[%s1 + $0x268] sm:$0xff]
        %v489 = vld [vmem:[%s1 + $0x270] sm:$0xff]
        %v490 = vld [vmem:[%s1 + $0x278] sm:$0xff]
        %v491 = vperm.slane %v355, 0
        %v492 = vand.u32 %v426, 4294901760
        %493 = vmatpush.msra.mxu0 %v492
        %v494 = vand.u32 %v425, 4294901760
        %495 = vmatpush.msra.mxu0 %v494
        %v496 = vand.u32 %v424, 4294901760
        %497 = vmatpush.msra.mxu0 %v496
        %v498 = vand.u32 %v423, 4294901760
        %499 = vmatpush.msra.mxu0 %v498
        %v500 = vand.u32 %v422, 4294901760
        %501 = vmatpush.msra.mxu0 %v500
        %v502 = vand.u32 %v421, 4294901760
        %503 = vmatpush.msra.mxu0 %v502
        %v504 = vand.u32 %v420, 4294901760
        %505 = vmatpush.msra.mxu0 %v504
        %v506 = vand.u32 %v419, 4294901760
        %507 = vmatpush.msra.mxu0 %v506
        %v508 = vand.u32 %v418, 4294901760
        %509 = vmatpush.msra.mxu0 %v508
        %v510 = vand.u32 %v417, 4294901760
        %511 = vmatpush.msra.mxu0 %v510
        %v512 = vand.u32 %v416, 4294901760
        %513 = vmatpush.msra.mxu0 %v512
        %v514 = vand.u32 %v415, 4294901760
        %515 = vmatpush.msra.mxu0 %v514
        %v516 = vand.u32 %v414, 4294901760
        %517 = vmatpush.msra.mxu0 %v516
        %v518 = vand.u32 %v413, 4294901760
        %519 = vmatpush.msra.mxu0 %v518
        %v520 = vand.u32 %v412, 4294901760
        %521 = vmatpush.msra.mxu0 %v520
        %v522 = vand.u32 %v411, 4294901760
        %523 = vmatpush.msra.mxu0 %v522
        %v524 = vand.u32 %v368, 4294901760
        %v525 = vsub.f32 %v368, %v524
        %v526 = vand.u32 %v525, 4294901760
        %v527 = vsub.f32 %v525, %v526
        %v528 = vand.u32 %v527, 4294901760
        %529 = vmatmul.f32.gmra.mxu0 %v528
        %v530 = vpop.f32.mrf.mxu0
        %v531 = vadd.f32 %v491, %v530
        %v532 = vand.u32 %v369, 4294901760
        %v533 = vsub.f32 %v369, %v532
        %v534 = vand.u32 %v533, 4294901760
        %v535 = vsub.f32 %v533, %v534
        %v536 = vand.u32 %v535, 4294901760
        %537 = vmatmul.f32.gmra.mxu0 %v536
        %v538 = vpop.f32.mrf.mxu0
        %v539 = vadd.f32 %v491, %v538
        %v540 = vand.u32 %v370, 4294901760
        %v541 = vsub.f32 %v370, %v540
        %v542 = vand.u32 %v541, 4294901760
        %v543 = vsub.f32 %v541, %v542
        %v544 = vand.u32 %v543, 4294901760
        %545 = vmatmul.f32.gmra.mxu0 %v544
        %v546 = vpop.f32.mrf.mxu0
        %v547 = vadd.f32 %v491, %v546
        %v548 = vand.u32 %v371, 4294901760
        %v549 = vsub.f32 %v371, %v548
        %v550 = vand.u32 %v549, 4294901760
        %v551 = vsub.f32 %v549, %v550
        %v552 = vand.u32 %v551, 4294901760
        %553 = vmatmul.f32.gmra.mxu0 %v552
        %v554 = vpop.f32.mrf.mxu0
        %v555 = vadd.f32 %v491, %v554
        %556 = vdwg.mxu0
        %v557 = vand.u32 %v426, 4294901760
        %v558 = vsub.f32 %v426, %v557
        %v559 = vand.u32 %v558, 4294901760
        %v560 = vsub.f32 %v558, %v559
        %v561 = vand.u32 %v560, 4294901760
        %562 = vmatpush.msra.mxu0 %v561
        %v563 = vand.u32 %v425, 4294901760
        %v564 = vsub.f32 %v425, %v563
        %v565 = vand.u32 %v564, 4294901760
        %v566 = vsub.f32 %v564, %v565
        %v567 = vand.u32 %v566, 4294901760
        %568 = vmatpush.msra.mxu0 %v567
        %v569 = vand.u32 %v424, 4294901760
        %v570 = vsub.f32 %v424, %v569
        %v571 = vand.u32 %v570, 4294901760
        %v572 = vsub.f32 %v570, %v571
        %v573 = vand.u32 %v572, 4294901760
        %574 = vmatpush.msra.mxu0 %v573
        %v575 = vand.u32 %v423, 4294901760
        %v576 = vsub.f32 %v423, %v575
        %v577 = vand.u32 %v576, 4294901760
        %v578 = vsub.f32 %v576, %v577
        %v579 = vand.u32 %v578, 4294901760
        %580 = vmatpush.msra.mxu0 %v579
        %v581 = vand.u32 %v422, 4294901760
        %v582 = vsub.f32 %v422, %v581
        %v583 = vand.u32 %v582, 4294901760
        %v584 = vsub.f32 %v582, %v583
        %v585 = vand.u32 %v584, 4294901760
        %586 = vmatpush.msra.mxu0 %v585
        %v587 = vand.u32 %v421, 4294901760
        %v588 = vsub.f32 %v421, %v587
        %v589 = vand.u32 %v588, 4294901760
        %v590 = vsub.f32 %v588, %v589
        %v591 = vand.u32 %v590, 4294901760
        %592 = vmatpush.msra.mxu0 %v591
        %v593 = vand.u32 %v420, 4294901760
        %v594 = vsub.f32 %v420, %v593
        %v595 = vand.u32 %v594, 4294901760
        %v596 = vsub.f32 %v594, %v595
        %v597 = vand.u32 %v596, 4294901760
        %598 = vmatpush.msra.mxu0 %v597
        %v599 = vand.u32 %v419, 4294901760
        %v600 = vsub.f32 %v419, %v599
        %v601 = vand.u32 %v600, 4294901760
        %v602 = vsub.f32 %v600, %v601
        %v603 = vand.u32 %v602, 4294901760
        %604 = vmatpush.msra.mxu0 %v603
        %v605 = vand.u32 %v418, 4294901760
        %v606 = vsub.f32 %v418, %v605
        %v607 = vand.u32 %v606, 4294901760
        %v608 = vsub.f32 %v606, %v607
        %v609 = vand.u32 %v608, 4294901760
        %610 = vmatpush.msra.mxu0 %v609
        %v611 = vand.u32 %v417, 4294901760
        %v612 = vsub.f32 %v417, %v611
        %v613 = vand.u32 %v612, 4294901760
        %v614 = vsub.f32 %v612, %v613
        %v615 = vand.u32 %v614, 4294901760
        %616 = vmatpush.msra.mxu0 %v615
        %v617 = vand.u32 %v416, 4294901760
        %v618 = vsub.f32 %v416, %v617
        %v619 = vand.u32 %v618, 4294901760
        %v620 = vsub.f32 %v618, %v619
        %v621 = vand.u32 %v620, 4294901760
        %622 = vmatpush.msra.mxu0 %v621
        %v623 = vand.u32 %v415, 4294901760
        %v624 = vsub.f32 %v415, %v623
        %v625 = vand.u32 %v624, 4294901760
        %v626 = vsub.f32 %v624, %v625
        %v627 = vand.u32 %v626, 4294901760
        %628 = vmatpush.msra.mxu0 %v627
        %v629 = vand.u32 %v414, 4294901760
        %v630 = vsub.f32 %v414, %v629
        %v631 = vand.u32 %v630, 4294901760
        %v632 = vsub.f32 %v630, %v631
        %v633 = vand.u32 %v632, 4294901760
        %634 = vmatpush.msra.mxu0 %v633
        %v635 = vand.u32 %v413, 4294901760
        %v636 = vsub.f32 %v413, %v635
        %v637 = vand.u32 %v636, 4294901760
        %v638 = vsub.f32 %v636, %v637
        %v639 = vand.u32 %v638, 4294901760
        %640 = vmatpush.msra.mxu0 %v639
        %v641 = vand.u32 %v412, 4294901760
        %v642 = vsub.f32 %v412, %v641
        %v643 = vand.u32 %v642, 4294901760
        %v644 = vsub.f32 %v642, %v643
        %v645 = vand.u32 %v644, 4294901760
        %646 = vmatpush.msra.mxu0 %v645
        %v647 = vand.u32 %v411, 4294901760
        %v648 = vsub.f32 %v411, %v647
        %v649 = vand.u32 %v648, 4294901760
        %v650 = vsub.f32 %v648, %v649
        %v651 = vand.u32 %v650, 4294901760
        %652 = vmatpush.msra.mxu0 %v651
        %v653 = vand.u32 %v368, 4294901760
        %654 = vmatmul.f32.gmra.mxu0 %v653
        %v655 = vpop.f32.mrf.mxu0
        %v656 = vadd.f32 %v531, %v655
        %v657 = vand.u32 %v369, 4294901760
        %658 = vmatmul.f32.gmra.mxu0 %v657
        %v659 = vpop.f32.mrf.mxu0
        %v660 = vadd.f32 %v539, %v659
        %v661 = vand.u32 %v370, 4294901760
        %662 = vmatmul.f32.gmra.mxu0 %v661
        %v663 = vpop.f32.mrf.mxu0
        %v664 = vadd.f32 %v547, %v663
        %v665 = vand.u32 %v371, 4294901760
        %666 = vmatmul.f32.gmra.mxu0 %v665
        %v667 = vpop.f32.mrf.mxu0
        %v668 = vadd.f32 %v555, %v667
        %669 = vdwg.mxu0
        %v670 = vand.u32 %v426, 4294901760
        %v671 = vsub.f32 %v426, %v670
        %672 = vmatpush.msra.mxu0 %v671
        %v673 = vand.u32 %v425, 4294901760
        %v674 = vsub.f32 %v425, %v673
        %675 = vmatpush.msra.mxu0 %v674
        %v676 = vand.u32 %v424, 4294901760
        %v677 = vsub.f32 %v424, %v676
        %678 = vmatpush.msra.mxu0 %v677
        %v679 = vand.u32 %v423, 4294901760
        %v680 = vsub.f32 %v423, %v679
        %681 = vmatpush.msra.mxu0 %v680
        %v682 = vand.u32 %v422, 4294901760
        %v683 = vsub.f32 %v422, %v682
        %684 = vmatpush.msra.mxu0 %v683
        %v685 = vand.u32 %v421, 4294901760
        %v686 = vsub.f32 %v421, %v685
        %687 = vmatpush.msra.mxu0 %v686
        %v688 = vand.u32 %v420, 4294901760
        %v689 = vsub.f32 %v420, %v688
        %690 = vmatpush.msra.mxu0 %v689
        %v691 = vand.u32 %v419, 4294901760
        %v692 = vsub.f32 %v419, %v691
        %693 = vmatpush.msra.mxu0 %v692
        %v694 = vand.u32 %v418, 4294901760
        %v695 = vsub.f32 %v418, %v694
        %696 = vmatpush.msra.mxu0 %v695
        %v697 = vand.u32 %v417, 4294901760
        %v698 = vsub.f32 %v417, %v697
        %699 = vmatpush.msra.mxu0 %v698
        %v700 = vand.u32 %v416, 4294901760
        %v701 = vsub.f32 %v416, %v700
        %702 = vmatpush.msra.mxu0 %v701
        %v703 = vand.u32 %v415, 4294901760
        %v704 = vsub.f32 %v415, %v703
        %705 = vmatpush.msra.mxu0 %v704
        %v706 = vand.u32 %v414, 4294901760
        %v707 = vsub.f32 %v414, %v706
        %708 = vmatpush.msra.mxu0 %v707
        %v709 = vand.u32 %v413, 4294901760
        %v710 = vsub.f32 %v413, %v709
        %711 = vmatpush.msra.mxu0 %v710
        %v712 = vand.u32 %v412, 4294901760
        %v713 = vsub.f32 %v412, %v712
        %714 = vmatpush.msra.mxu0 %v713
        %v715 = vand.u32 %v411, 4294901760
        %v716 = vsub.f32 %v411, %v715
        %717 = vmatpush.msra.mxu0 %v716
        %v718 = vand.u32 %v368, 4294901760
        %v719 = vsub.f32 %v368, %v718
        %720 = vmatmul.f32.gmra.mxu0 %v719
        %v721 = vpop.f32.mrf.mxu0
        %v722 = vadd.f32 %v656, %v721
        %v723 = vand.u32 %v369, 4294901760
        %v724 = vsub.f32 %v369, %v723
        %725 = vmatmul.f32.gmra.mxu0 %v724
        %v726 = vpop.f32.mrf.mxu0
        %v727 = vadd.f32 %v660, %v726
        %v728 = vand.u32 %v370, 4294901760
        %v729 = vsub.f32 %v370, %v728
        %730 = vmatmul.f32.gmra.mxu0 %v729
        %v731 = vpop.f32.mrf.mxu0
        %v732 = vadd.f32 %v664, %v731
        %v733 = vand.u32 %v371, 4294901760
        %v734 = vsub.f32 %v371, %v733
        %735 = vmatmul.f32.gmra.mxu0 %v734
        %v736 = vpop.f32.mrf.mxu0
        %v737 = vadd.f32 %v668, %v736
        %738 = vdwg.mxu0
        %v739 = vand.u32 %v426, 4294901760
        %740 = vmatpush.msra.mxu0 %v739
        %v741 = vand.u32 %v425, 4294901760
        %742 = vmatpush.msra.mxu0 %v741
        %v743 = vand.u32 %v424, 4294901760
        %744 = vmatpush.msra.mxu0 %v743
        %v745 = vand.u32 %v423, 4294901760
        %746 = vmatpush.msra.mxu0 %v745
        %v747 = vand.u32 %v422, 4294901760
        %748 = vmatpush.msra.mxu0 %v747
        %v749 = vand.u32 %v421, 4294901760
        %750 = vmatpush.msra.mxu0 %v749
        %v751 = vand.u32 %v420, 4294901760
        %752 = vmatpush.msra.mxu0 %v751
        %v753 = vand.u32 %v419, 4294901760
        %754 = vmatpush.msra.mxu0 %v753
        %v755 = vand.u32 %v418, 4294901760
        %756 = vmatpush.msra.mxu0 %v755
        %v757 = vand.u32 %v417, 4294901760
        %758 = vmatpush.msra.mxu0 %v757
        %v759 = vand.u32 %v416, 4294901760
        %760 = vmatpush.msra.mxu0 %v759
        %v761 = vand.u32 %v415, 4294901760
        %762 = vmatpush.msra.mxu0 %v761
        %v763 = vand.u32 %v414, 4294901760
        %764 = vmatpush.msra.mxu0 %v763
        %v765 = vand.u32 %v413, 4294901760
        %766 = vmatpush.msra.mxu0 %v765
        %v767 = vand.u32 %v412, 4294901760
        %768 = vmatpush.msra.mxu0 %v767
        %v769 = vand.u32 %v411, 4294901760
        %770 = vmatpush.msra.mxu0 %v769
        %v771 = vand.u32 %v368, 4294901760
        %v772 = vsub.f32 %v368, %v771
        %v773 = vand.u32 %v772, 4294901760
        %774 = vmatmul.f32.gmra.mxu0 %v773
        %v775 = vpop.f32.mrf.mxu0
        %v776 = vadd.f32 %v722, %v775
        %v777 = vand.u32 %v369, 4294901760
        %v778 = vsub.f32 %v369, %v777
        %v779 = vand.u32 %v778, 4294901760
        %780 = vmatmul.f32.gmra.mxu0 %v779
        %v781 = vpop.f32.mrf.mxu0
        %v782 = vadd.f32 %v727, %v781
        %v783 = vand.u32 %v370, 4294901760
        %v784 = vsub.f32 %v370, %v783
        %v785 = vand.u32 %v784, 4294901760
        %786 = vmatmul.f32.gmra.mxu0 %v785
        %v787 = vpop.f32.mrf.mxu0
        %v788 = vadd.f32 %v732, %v787
        %v789 = vand.u32 %v371, 4294901760
        %v790 = vsub.f32 %v371, %v789
        %v791 = vand.u32 %v790, 4294901760
        %792 = vmatmul.f32.gmra.mxu0 %v791
        %v793 = vpop.f32.mrf.mxu0
        %v794 = vadd.f32 %v737, %v793
        %795 = vdwg.mxu0
        %v796 = vand.u32 %v426, 4294901760
        %v797 = vsub.f32 %v426, %v796
        %v798 = vand.u32 %v797, 4294901760
        %799 = vmatpush.msra.mxu0 %v798
        %v800 = vand.u32 %v425, 4294901760
        %v801 = vsub.f32 %v425, %v800
        %v802 = vand.u32 %v801, 4294901760
        %803 = vmatpush.msra.mxu0 %v802
        %v804 = vand.u32 %v424, 4294901760
        %v805 = vsub.f32 %v424, %v804
        %v806 = vand.u32 %v805, 4294901760
        %807 = vmatpush.msra.mxu0 %v806
        %v808 = vand.u32 %v423, 4294901760
        %v809 = vsub.f32 %v423, %v808
        %v810 = vand.u32 %v809, 4294901760
        %811 = vmatpush.msra.mxu0 %v810
        %v812 = vand.u32 %v422, 4294901760
        %v813 = vsub.f32 %v422, %v812
        %v814 = vand.u32 %v813, 4294901760
        %815 = vmatpush.msra.mxu0 %v814
        %v816 = vand.u32 %v421, 4294901760
        %v817 = vsub.f32 %v421, %v816
        %v818 = vand.u32 %v817, 4294901760
        %819 = vmatpush.msra.mxu0 %v818
        %v820 = vand.u32 %v420, 4294901760
        %v821 = vsub.f32 %v420, %v820
        %v822 = vand.u32 %v821, 4294901760
        %823 = vmatpush.msra.mxu0 %v822
        %v824 = vand.u32 %v419, 4294901760
        %v825 = vsub.f32 %v419, %v824
        %v826 = vand.u32 %v825, 4294901760
        %827 = vmatpush.msra.mxu0 %v826
        %v828 = vand.u32 %v418, 4294901760
        %v829 = vsub.f32 %v418, %v828
        %v830 = vand.u32 %v829, 4294901760
        %831 = vmatpush.msra.mxu0 %v830
        %v832 = vand.u32 %v417, 4294901760
        %v833 = vsub.f32 %v417, %v832
        %v834 = vand.u32 %v833, 4294901760
        %835 = vmatpush.msra.mxu0 %v834
        %v836 = vand.u32 %v416, 4294901760
        %v837 = vsub.f32 %v416, %v836
        %v838 = vand.u32 %v837, 4294901760
        %839 = vmatpush.msra.mxu0 %v838
        %v840 = vand.u32 %v415, 4294901760
        %v841 = vsub.f32 %v415, %v840
        %v842 = vand.u32 %v841, 4294901760
        %843 = vmatpush.msra.mxu0 %v842
        %v844 = vand.u32 %v414, 4294901760
        %v845 = vsub.f32 %v414, %v844
        %v846 = vand.u32 %v845, 4294901760
        %847 = vmatpush.msra.mxu0 %v846
        %v848 = vand.u32 %v413, 4294901760
        %v849 = vsub.f32 %v413, %v848
        %v850 = vand.u32 %v849, 4294901760
        %851 = vmatpush.msra.mxu0 %v850
        %v852 = vand.u32 %v412, 4294901760
        %v853 = vsub.f32 %v412, %v852
        %v854 = vand.u32 %v853, 4294901760
        %855 = vmatpush.msra.mxu0 %v854
        %v856 = vand.u32 %v411, 4294901760
        %v857 = vsub.f32 %v411, %v856
        %v858 = vand.u32 %v857, 4294901760
        %859 = vmatpush.msra.mxu0 %v858
        %v860 = vand.u32 %v368, 4294901760
        %861 = vmatmul.f32.gmra.mxu0 %v860
        %v862 = vpop.f32.mrf.mxu0
        %v863 = vadd.f32 %v776, %v862
        %v864 = vand.u32 %v369, 4294901760
        %865 = vmatmul.f32.gmra.mxu0 %v864
        %v866 = vpop.f32.mrf.mxu0
        %v867 = vadd.f32 %v782, %v866
        %v868 = vand.u32 %v370, 4294901760
        %869 = vmatmul.f32.gmra.mxu0 %v868
        %v870 = vpop.f32.mrf.mxu0
        %v871 = vadd.f32 %v788, %v870
        %v872 = vand.u32 %v371, 4294901760
        %873 = vmatmul.f32.gmra.mxu0 %v872
        %v874 = vpop.f32.mrf.mxu0
        %v875 = vadd.f32 %v794, %v874
        %876 = vdwg.mxu0
        %v877 = vand.u32 %v426, 4294901760
        %878 = vmatpush.msra.mxu0 %v877
        %v879 = vand.u32 %v425, 4294901760
        %880 = vmatpush.msra.mxu0 %v879
        %v881 = vand.u32 %v424, 4294901760
        %882 = vmatpush.msra.mxu0 %v881
        %v883 = vand.u32 %v423, 4294901760
        %884 = vmatpush.msra.mxu0 %v883
        %v885 = vand.u32 %v422, 4294901760
        %886 = vmatpush.msra.mxu0 %v885
        %v887 = vand.u32 %v421, 4294901760
        %888 = vmatpush.msra.mxu0 %v887
        %v889 = vand.u32 %v420, 4294901760
        %890 = vmatpush.msra.mxu0 %v889
        %v891 = vand.u32 %v419, 4294901760
        %892 = vmatpush.msra.mxu0 %v891
        %v893 = vand.u32 %v418, 4294901760
        %894 = vmatpush.msra.mxu0 %v893
        %v895 = vand.u32 %v417, 4294901760
        %896 = vmatpush.msra.mxu0 %v895
        %v897 = vand.u32 %v416, 4294901760
        %898 = vmatpush.msra.mxu0 %v897
        %v899 = vand.u32 %v415, 4294901760
        %900 = vmatpush.msra.mxu0 %v899
        %v901 = vand.u32 %v414, 4294901760
        %902 = vmatpush.msra.mxu0 %v901
        %v903 = vand.u32 %v413, 4294901760
        %904 = vmatpush.msra.mxu0 %v903
        %v905 = vand.u32 %v412, 4294901760
        %906 = vmatpush.msra.mxu0 %v905
        %v907 = vand.u32 %v411, 4294901760
        %908 = vmatpush.msra.mxu0 %v907
        %v909 = vand.u32 %v368, 4294901760
        %910 = vmatmul.f32.gmra.mxu0 %v909
        %v911 = vpop.f32.mrf.mxu0
        %v912 = vadd.f32 %v863, %v911
        %v913 = vand.u32 %v369, 4294901760
        %914 = vmatmul.f32.gmra.mxu0 %v913
        %v915 = vpop.f32.mrf.mxu0
        %v916 = vadd.f32 %v867, %v915
        %v917 = vand.u32 %v370, 4294901760
        %918 = vmatmul.f32.gmra.mxu0 %v917
        %v919 = vpop.f32.mrf.mxu0
        %v920 = vadd.f32 %v871, %v919
        %v921 = vand.u32 %v371, 4294901760
        %922 = vmatmul.f32.gmra.mxu0 %v921
        %v923 = vpop.f32.mrf.mxu0
        %v924 = vadd.f32 %v875, %v923
        %925 = vdwg.mxu0
        %v926 = vand.u32 %v442, 4294901760
        %927 = vmatpush.msra.mxu0 %v926
        %v928 = vand.u32 %v441, 4294901760
        %929 = vmatpush.msra.mxu0 %v928
        %v930 = vand.u32 %v440, 4294901760
        %931 = vmatpush.msra.mxu0 %v930
        %v932 = vand.u32 %v439, 4294901760
        %933 = vmatpush.msra.mxu0 %v932
        %v934 = vand.u32 %v438, 4294901760
        %935 = vmatpush.msra.mxu0 %v934
        %v936 = vand.u32 %v437, 4294901760
        %937 = vmatpush.msra.mxu0 %v936
        %v938 = vand.u32 %v436, 4294901760
        %939 = vmatpush.msra.mxu0 %v938
        %v940 = vand.u32 %v435, 4294901760
        %941 = vmatpush.msra.mxu0 %v940
        %v942 = vand.u32 %v434, 4294901760
        %943 = vmatpush.msra.mxu0 %v942
        %v944 = vand.u32 %v433, 4294901760
        %945 = vmatpush.msra.mxu0 %v944
        %v946 = vand.u32 %v432, 4294901760
        %947 = vmatpush.msra.mxu0 %v946
        %v948 = vand.u32 %v431, 4294901760
        %949 = vmatpush.msra.mxu0 %v948
        %v950 = vand.u32 %v430, 4294901760
        %951 = vmatpush.msra.mxu0 %v950
        %v952 = vand.u32 %v429, 4294901760
        %953 = vmatpush.msra.mxu0 %v952
        %v954 = vand.u32 %v428, 4294901760
        %955 = vmatpush.msra.mxu0 %v954
        %v956 = vand.u32 %v427, 4294901760
        %957 = vmatpush.msra.mxu0 %v956
        %v958 = vand.u32 %v381, 4294901760
        %v959 = vsub.f32 %v381, %v958
        %v960 = vand.u32 %v959, 4294901760
        %v961 = vsub.f32 %v959, %v960
        %v962 = vand.u32 %v961, 4294901760
        %963 = vmatmul.f32.gmra.mxu0 %v962
        %v964 = vpop.f32.mrf.mxu0
        %v965 = vadd.f32 %v912, %v964
        %v966 = vand.u32 %v382, 4294901760
        %v967 = vsub.f32 %v382, %v966
        %v968 = vand.u32 %v967, 4294901760
        %v969 = vsub.f32 %v967, %v968
        %v970 = vand.u32 %v969, 4294901760
        %971 = vmatmul.f32.gmra.mxu0 %v970
        %v972 = vpop.f32.mrf.mxu0
        %v973 = vadd.f32 %v916, %v972
        %v974 = vand.u32 %v383, 4294901760
        %v975 = vsub.f32 %v383, %v974
        %v976 = vand.u32 %v975, 4294901760
        %v977 = vsub.f32 %v975, %v976
        %v978 = vand.u32 %v977, 4294901760
        %979 = vmatmul.f32.gmra.mxu0 %v978
        %v980 = vpop.f32.mrf.mxu0
        %v981 = vadd.f32 %v920, %v980
        %v982 = vand.u32 %v384, 4294901760
        %v983 = vsub.f32 %v384, %v982
        %v984 = vand.u32 %v983, 4294901760
        %v985 = vsub.f32 %v983, %v984
        %v986 = vand.u32 %v985, 4294901760
        %987 = vmatmul.f32.gmra.mxu0 %v986
        %v988 = vpop.f32.mrf.mxu0
        %v989 = vadd.f32 %v924, %v988
        %990 = vdwg.mxu0
        %v991 = vand.u32 %v442, 4294901760
        %v992 = vsub.f32 %v442, %v991
        %v993 = vand.u32 %v992, 4294901760
        %v994 = vsub.f32 %v992, %v993
        %v995 = vand.u32 %v994, 4294901760
        %996 = vmatpush.msra.mxu0 %v995
        %v997 = vand.u32 %v441, 4294901760
        %v998 = vsub.f32 %v441, %v997
        %v999 = vand.u32 %v998, 4294901760
        %v1000 = vsub.f32 %v998, %v999
        %v1001 = vand.u32 %v1000, 4294901760
        %1002 = vmatpush.msra.mxu0 %v1001
        %v1003 = vand.u32 %v440, 4294901760
        %v1004 = vsub.f32 %v440, %v1003
        %v1005 = vand.u32 %v1004, 4294901760
        %v1006 = vsub.f32 %v1004, %v1005
        %v1007 = vand.u32 %v1006, 4294901760
        %1008 = vmatpush.msra.mxu0 %v1007
        %v1009 = vand.u32 %v439, 4294901760
        %v1010 = vsub.f32 %v439, %v1009
        %v1011 = vand.u32 %v1010, 4294901760
        %v1012 = vsub.f32 %v1010, %v1011
        %v1013 = vand.u32 %v1012, 4294901760
        %1014 = vmatpush.msra.mxu0 %v1013
        %v1015 = vand.u32 %v438, 4294901760
        %v1016 = vsub.f32 %v438, %v1015
        %v1017 = vand.u32 %v1016, 4294901760
        %v1018 = vsub.f32 %v1016, %v1017
        %v1019 = vand.u32 %v1018, 4294901760
        %1020 = vmatpush.msra.mxu0 %v1019
        %v1021 = vand.u32 %v437, 4294901760
        %v1022 = vsub.f32 %v437, %v1021
        %v1023 = vand.u32 %v1022, 4294901760
        %v1024 = vsub.f32 %v1022, %v1023
        %v1025 = vand.u32 %v1024, 4294901760
        %1026 = vmatpush.msra.mxu0 %v1025
        %v1027 = vand.u32 %v436, 4294901760
        %v1028 = vsub.f32 %v436, %v1027
        %v1029 = vand.u32 %v1028, 4294901760
        %v1030 = vsub.f32 %v1028, %v1029
        %v1031 = vand.u32 %v1030, 4294901760
        %1032 = vmatpush.msra.mxu0 %v1031
        %v1033 = vand.u32 %v435, 4294901760
        %v1034 = vsub.f32 %v435, %v1033
        %v1035 = vand.u32 %v1034, 4294901760
        %v1036 = vsub.f32 %v1034, %v1035
        %v1037 = vand.u32 %v1036, 4294901760
        %1038 = vmatpush.msra.mxu0 %v1037
        %v1039 = vand.u32 %v434, 4294901760
        %v1040 = vsub.f32 %v434, %v1039
        %v1041 = vand.u32 %v1040, 4294901760
        %v1042 = vsub.f32 %v1040, %v1041
        %v1043 = vand.u32 %v1042, 4294901760
        %1044 = vmatpush.msra.mxu0 %v1043
        %v1045 = vand.u32 %v433, 4294901760
        %v1046 = vsub.f32 %v433, %v1045
        %v1047 = vand.u32 %v1046, 4294901760
        %v1048 = vsub.f32 %v1046, %v1047
        %v1049 = vand.u32 %v1048, 4294901760
        %1050 = vmatpush.msra.mxu0 %v1049
        %v1051 = vand.u32 %v432, 4294901760
        %v1052 = vsub.f32 %v432, %v1051
        %v1053 = vand.u32 %v1052, 4294901760
        %v1054 = vsub.f32 %v1052, %v1053
        %v1055 = vand.u32 %v1054, 4294901760
        %1056 = vmatpush.msra.mxu0 %v1055
        %v1057 = vand.u32 %v431, 4294901760
        %v1058 = vsub.f32 %v431, %v1057
        %v1059 = vand.u32 %v1058, 4294901760
        %v1060 = vsub.f32 %v1058, %v1059
        %v1061 = vand.u32 %v1060, 4294901760
        %1062 = vmatpush.msra.mxu0 %v1061
        %v1063 = vand.u32 %v430, 4294901760
        %v1064 = vsub.f32 %v430, %v1063
        %v1065 = vand.u32 %v1064, 4294901760
        %v1066 = vsub.f32 %v1064, %v1065
        %v1067 = vand.u32 %v1066, 4294901760
        %1068 = vmatpush.msra.mxu0 %v1067
        %v1069 = vand.u32 %v429, 4294901760
        %v1070 = vsub.f32 %v429, %v1069
        %v1071 = vand.u32 %v1070, 4294901760
        %v1072 = vsub.f32 %v1070, %v1071
        %v1073 = vand.u32 %v1072, 4294901760
        %1074 = vmatpush.msra.mxu0 %v1073
        %v1075 = vand.u32 %v428, 4294901760
        %v1076 = vsub.f32 %v428, %v1075
        %v1077 = vand.u32 %v1076, 4294901760
        %v1078 = vsub.f32 %v1076, %v1077
        %v1079 = vand.u32 %v1078, 4294901760
        %1080 = vmatpush.msra.mxu0 %v1079
        %v1081 = vand.u32 %v427, 4294901760
        %v1082 = vsub.f32 %v427, %v1081
        %v1083 = vand.u32 %v1082, 4294901760
        %v1084 = vsub.f32 %v1082, %v1083
        %v1085 = vand.u32 %v1084, 4294901760
        %1086 = vmatpush.msra.mxu0 %v1085
        %v1087 = vand.u32 %v381, 4294901760
        %1088 = vmatmul.f32.gmra.mxu0 %v1087
        %v1089 = vpop.f32.mrf.mxu0
        %v1090 = vadd.f32 %v965, %v1089
        %v1091 = vand.u32 %v382, 4294901760
        %1092 = vmatmul.f32.gmra.mxu0 %v1091
        %v1093 = vpop.f32.mrf.mxu0
        %v1094 = vadd.f32 %v973, %v1093
        %v1095 = vand.u32 %v383, 4294901760
        %1096 = vmatmul.f32.gmra.mxu0 %v1095
        %v1097 = vpop.f32.mrf.mxu0
        %v1098 = vadd.f32 %v981, %v1097
        %v1099 = vand.u32 %v384, 4294901760
        %1100 = vmatmul.f32.gmra.mxu0 %v1099
        %v1101 = vpop.f32.mrf.mxu0
        %v1102 = vadd.f32 %v989, %v1101
        %1103 = vdwg.mxu0
        %v1104 = vand.u32 %v442, 4294901760
        %v1105 = vsub.f32 %v442, %v1104
        %1106 = vmatpush.msra.mxu0 %v1105
        %v1107 = vand.u32 %v441, 4294901760
        %v1108 = vsub.f32 %v441, %v1107
        %1109 = vmatpush.msra.mxu0 %v1108
        %v1110 = vand.u32 %v440, 4294901760
        %v1111 = vsub.f32 %v440, %v1110
        %1112 = vmatpush.msra.mxu0 %v1111
        %v1113 = vand.u32 %v439, 4294901760
        %v1114 = vsub.f32 %v439, %v1113
        %1115 = vmatpush.msra.mxu0 %v1114
        %v1116 = vand.u32 %v438, 4294901760
        %v1117 = vsub.f32 %v438, %v1116
        %1118 = vmatpush.msra.mxu0 %v1117
        %v1119 = vand.u32 %v437, 4294901760
        %v1120 = vsub.f32 %v437, %v1119
        %1121 = vmatpush.msra.mxu0 %v1120
        %v1122 = vand.u32 %v436, 4294901760
        %v1123 = vsub.f32 %v436, %v1122
        %1124 = vmatpush.msra.mxu0 %v1123
        %v1125 = vand.u32 %v435, 4294901760
        %v1126 = vsub.f32 %v435, %v1125
        %1127 = vmatpush.msra.mxu0 %v1126
        %v1128 = vand.u32 %v434, 4294901760
        %v1129 = vsub.f32 %v434, %v1128
        %1130 = vmatpush.msra.mxu0 %v1129
        %v1131 = vand.u32 %v433, 4294901760
        %v1132 = vsub.f32 %v433, %v1131
        %1133 = vmatpush.msra.mxu0 %v1132
        %v1134 = vand.u32 %v432, 4294901760
        %v1135 = vsub.f32 %v432, %v1134
        %1136 = vmatpush.msra.mxu0 %v1135
        %v1137 = vand.u32 %v431, 4294901760
        %v1138 = vsub.f32 %v431, %v1137
        %1139 = vmatpush.msra.mxu0 %v1138
        %v1140 = vand.u32 %v430, 4294901760
        %v1141 = vsub.f32 %v430, %v1140
        %1142 = vmatpush.msra.mxu0 %v1141
        %v1143 = vand.u32 %v429, 4294901760
        %v1144 = vsub.f32 %v429, %v1143
        %1145 = vmatpush.msra.mxu0 %v1144
        %v1146 = vand.u32 %v428, 4294901760
        %v1147 = vsub.f32 %v428, %v1146
        %1148 = vmatpush.msra.mxu0 %v1147
        %v1149 = vand.u32 %v427, 4294901760
        %v1150 = vsub.f32 %v427, %v1149
        %1151 = vmatpush.msra.mxu0 %v1150
        %v1152 = vand.u32 %v381, 4294901760
        %v1153 = vsub.f32 %v381, %v1152
        %1154 = vmatmul.f32.gmra.mxu0 %v1153
        %v1155 = vpop.f32.mrf.mxu0
        %v1156 = vadd.f32 %v1090, %v1155
        %v1157 = vand.u32 %v382, 4294901760
        %v1158 = vsub.f32 %v382, %v1157
        %1159 = vmatmul.f32.gmra.mxu0 %v1158
        %v1160 = vpop.f32.mrf.mxu0
        %v1161 = vadd.f32 %v1094, %v1160
        %v1162 = vand.u32 %v383, 4294901760
        %v1163 = vsub.f32 %v383, %v1162
        %1164 = vmatmul.f32.gmra.mxu0 %v1163
        %v1165 = vpop.f32.mrf.mxu0
        %v1166 = vadd.f32 %v1098, %v1165
        %v1167 = vand.u32 %v384, 4294901760
        %v1168 = vsub.f32 %v384, %v1167
        %1169 = vmatmul.f32.gmra.mxu0 %v1168
        %v1170 = vpop.f32.mrf.mxu0
        %v1171 = vadd.f32 %v1102, %v1170
        %1172 = vdwg.mxu0
        %v1173 = vand.u32 %v442, 4294901760
        %1174 = vmatpush.msra.mxu0 %v1173
        %v1175 = vand.u32 %v441, 4294901760
        %1176 = vmatpush.msra.mxu0 %v1175
        %v1177 = vand.u32 %v440, 4294901760
        %1178 = vmatpush.msra.mxu0 %v1177
        %v1179 = vand.u32 %v439, 4294901760
        %1180 = vmatpush.msra.mxu0 %v1179
        %v1181 = vand.u32 %v438, 4294901760
        %1182 = vmatpush.msra.mxu0 %v1181
        %v1183 = vand.u32 %v437, 4294901760
        %1184 = vmatpush.msra.mxu0 %v1183
        %v1185 = vand.u32 %v436, 4294901760
        %1186 = vmatpush.msra.mxu0 %v1185
        %v1187 = vand.u32 %v435, 4294901760
        %1188 = vmatpush.msra.mxu0 %v1187
        %v1189 = vand.u32 %v434, 4294901760
        %1190 = vmatpush.msra.mxu0 %v1189
        %v1191 = vand.u32 %v433, 4294901760
        %1192 = vmatpush.msra.mxu0 %v1191
        %v1193 = vand.u32 %v432, 4294901760
        %1194 = vmatpush.msra.mxu0 %v1193
        %v1195 = vand.u32 %v431, 4294901760
        %1196 = vmatpush.msra.mxu0 %v1195
        %v1197 = vand.u32 %v430, 4294901760
        %1198 = vmatpush.msra.mxu0 %v1197
        %v1199 = vand.u32 %v429, 4294901760
        %1200 = vmatpush.msra.mxu0 %v1199
        %v1201 = vand.u32 %v428, 4294901760
        %1202 = vmatpush.msra.mxu0 %v1201
        %v1203 = vand.u32 %v427, 4294901760
        %1204 = vmatpush.msra.mxu0 %v1203
        %v1205 = vand.u32 %v381, 4294901760
        %v1206 = vsub.f32 %v381, %v1205
        %v1207 = vand.u32 %v1206, 4294901760
        %1208 = vmatmul.f32.gmra.mxu0 %v1207
        %v1209 = vpop.f32.mrf.mxu0
        %v1210 = vadd.f32 %v1156, %v1209
        %v1211 = vand.u32 %v382, 4294901760
        %v1212 = vsub.f32 %v382, %v1211
        %v1213 = vand.u32 %v1212, 4294901760
        %1214 = vmatmul.f32.gmra.mxu0 %v1213
        %v1215 = vpop.f32.mrf.mxu0
        %v1216 = vadd.f32 %v1161, %v1215
        %v1217 = vand.u32 %v383, 4294901760
        %v1218 = vsub.f32 %v383, %v1217
        %v1219 = vand.u32 %v1218, 4294901760
        %1220 = vmatmul.f32.gmra.mxu0 %v1219
        %v1221 = vpop.f32.mrf.mxu0
        %v1222 = vadd.f32 %v1166, %v1221
        %v1223 = vand.u32 %v384, 4294901760
        %v1224 = vsub.f32 %v384, %v1223
        %v1225 = vand.u32 %v1224, 4294901760
        %1226 = vmatmul.f32.gmra.mxu0 %v1225
        %v1227 = vpop.f32.mrf.mxu0
        %v1228 = vadd.f32 %v1171, %v1227
        %1229 = vdwg.mxu0
        %v1230 = vand.u32 %v442, 4294901760
        %v1231 = vsub.f32 %v442, %v1230
        %v1232 = vand.u32 %v1231, 4294901760
        %1233 = vmatpush.msra.mxu0 %v1232
        %v1234 = vand.u32 %v441, 4294901760
        %v1235 = vsub.f32 %v441, %v1234
        %v1236 = vand.u32 %v1235, 4294901760
        %1237 = vmatpush.msra.mxu0 %v1236
        %v1238 = vand.u32 %v440, 4294901760
        %v1239 = vsub.f32 %v440, %v1238
        %v1240 = vand.u32 %v1239, 4294901760
        %1241 = vmatpush.msra.mxu0 %v1240
        %v1242 = vand.u32 %v439, 4294901760
        %v1243 = vsub.f32 %v439, %v1242
        %v1244 = vand.u32 %v1243, 4294901760
        %1245 = vmatpush.msra.mxu0 %v1244
        %v1246 = vand.u32 %v438, 4294901760
        %v1247 = vsub.f32 %v438, %v1246
        %v1248 = vand.u32 %v1247, 4294901760
        %1249 = vmatpush.msra.mxu0 %v1248
        %v1250 = vand.u32 %v437, 4294901760
        %v1251 = vsub.f32 %v437, %v1250
        %v1252 = vand.u32 %v1251, 4294901760
        %1253 = vmatpush.msra.mxu0 %v1252
        %v1254 = vand.u32 %v436, 4294901760
        %v1255 = vsub.f32 %v436, %v1254
        %v1256 = vand.u32 %v1255, 4294901760
        %1257 = vmatpush.msra.mxu0 %v1256
        %v1258 = vand.u32 %v435, 4294901760
        %v1259 = vsub.f32 %v435, %v1258
        %v1260 = vand.u32 %v1259, 4294901760
        %1261 = vmatpush.msra.mxu0 %v1260
        %v1262 = vand.u32 %v434, 4294901760
        %v1263 = vsub.f32 %v434, %v1262
        %v1264 = vand.u32 %v1263, 4294901760
        %1265 = vmatpush.msra.mxu0 %v1264
        %v1266 = vand.u32 %v433, 4294901760
        %v1267 = vsub.f32 %v433, %v1266
        %v1268 = vand.u32 %v1267, 4294901760
        %1269 = vmatpush.msra.mxu0 %v1268
        %v1270 = vand.u32 %v432, 4294901760
        %v1271 = vsub.f32 %v432, %v1270
        %v1272 = vand.u32 %v1271, 4294901760
        %1273 = vmatpush.msra.mxu0 %v1272
        %v1274 = vand.u32 %v431, 4294901760
        %v1275 = vsub.f32 %v431, %v1274
        %v1276 = vand.u32 %v1275, 4294901760
        %1277 = vmatpush.msra.mxu0 %v1276
        %v1278 = vand.u32 %v430, 4294901760
        %v1279 = vsub.f32 %v430, %v1278
        %v1280 = vand.u32 %v1279, 4294901760
        %1281 = vmatpush.msra.mxu0 %v1280
        %v1282 = vand.u32 %v429, 4294901760
        %v1283 = vsub.f32 %v429, %v1282
        %v1284 = vand.u32 %v1283, 4294901760
        %1285 = vmatpush.msra.mxu0 %v1284
        %v1286 = vand.u32 %v428, 4294901760
        %v1287 = vsub.f32 %v428, %v1286
        %v1288 = vand.u32 %v1287, 4294901760
        %1289 = vmatpush.msra.mxu0 %v1288
        %v1290 = vand.u32 %v427, 4294901760
        %v1291 = vsub.f32 %v427, %v1290
        %v1292 = vand.u32 %v1291, 4294901760
        %1293 = vmatpush.msra.mxu0 %v1292
        %v1294 = vand.u32 %v381, 4294901760
        %1295 = vmatmul.f32.gmra.mxu0 %v1294
        %v1296 = vpop.f32.mrf.mxu0
        %v1297 = vadd.f32 %v1210, %v1296
        %v1298 = vand.u32 %v382, 4294901760
        %1299 = vmatmul.f32.gmra.mxu0 %v1298
        %v1300 = vpop.f32.mrf.mxu0
        %v1301 = vadd.f32 %v1216, %v1300
        %v1302 = vand.u32 %v383, 4294901760
        %1303 = vmatmul.f32.gmra.mxu0 %v1302
        %v1304 = vpop.f32.mrf.mxu0
        %v1305 = vadd.f32 %v1222, %v1304
        %v1306 = vand.u32 %v384, 4294901760
        %1307 = vmatmul.f32.gmra.mxu0 %v1306
        %v1308 = vpop.f32.mrf.mxu0
        %v1309 = vadd.f32 %v1228, %v1308
        %1310 = vdwg.mxu0
        %v1311 = vand.u32 %v442, 4294901760
        %1312 = vmatpush.msra.mxu0 %v1311
        %v1313 = vand.u32 %v441, 4294901760
        %1314 = vmatpush.msra.mxu0 %v1313
        %v1315 = vand.u32 %v440, 4294901760
        %1316 = vmatpush.msra.mxu0 %v1315
        %v1317 = vand.u32 %v439, 4294901760
        %1318 = vmatpush.msra.mxu0 %v1317
        %v1319 = vand.u32 %v438, 4294901760
        %1320 = vmatpush.msra.mxu0 %v1319
        %v1321 = vand.u32 %v437, 4294901760
        %1322 = vmatpush.msra.mxu0 %v1321
        %v1323 = vand.u32 %v436, 4294901760
        %1324 = vmatpush.msra.mxu0 %v1323
        %v1325 = vand.u32 %v435, 4294901760
        %1326 = vmatpush.msra.mxu0 %v1325
        %v1327 = vand.u32 %v434, 4294901760
        %1328 = vmatpush.msra.mxu0 %v1327
        %v1329 = vand.u32 %v433, 4294901760
        %1330 = vmatpush.msra.mxu0 %v1329
        %v1331 = vand.u32 %v432, 4294901760
        %1332 = vmatpush.msra.mxu0 %v1331
        %v1333 = vand.u32 %v431, 4294901760
        %1334 = vmatpush.msra.mxu0 %v1333
        %v1335 = vand.u32 %v430, 4294901760
        %1336 = vmatpush.msra.mxu0 %v1335
        %v1337 = vand.u32 %v429, 4294901760
        %1338 = vmatpush.msra.mxu0 %v1337
        %v1339 = vand.u32 %v428, 4294901760
        %1340 = vmatpush.msra.mxu0 %v1339
        %v1341 = vand.u32 %v427, 4294901760
        %1342 = vmatpush.msra.mxu0 %v1341
        %v1343 = vand.u32 %v381, 4294901760
        %1344 = vmatmul.f32.gmra.mxu0 %v1343
        %v1345 = vpop.f32.mrf.mxu0
        %v1346 = vadd.f32 %v1297, %v1345
        %v1347 = vand.u32 %v382, 4294901760
        %1348 = vmatmul.f32.gmra.mxu0 %v1347
        %v1349 = vpop.f32.mrf.mxu0
        %v1350 = vadd.f32 %v1301, %v1349
        %v1351 = vand.u32 %v383, 4294901760
        %1352 = vmatmul.f32.gmra.mxu0 %v1351
        %v1353 = vpop.f32.mrf.mxu0
        %v1354 = vadd.f32 %v1305, %v1353
        %v1355 = vand.u32 %v384, 4294901760
        %1356 = vmatmul.f32.gmra.mxu0 %v1355
        %v1357 = vpop.f32.mrf.mxu0
        %v1358 = vadd.f32 %v1309, %v1357
        %1359 = vdwg.mxu0
        %v1360 = vand.u32 %v458, 4294901760
        %1361 = vmatpush.msra.mxu0 %v1360
        %v1362 = vand.u32 %v457, 4294901760
        %1363 = vmatpush.msra.mxu0 %v1362
        %v1364 = vand.u32 %v456, 4294901760
        %1365 = vmatpush.msra.mxu0 %v1364
        %v1366 = vand.u32 %v455, 4294901760
        %1367 = vmatpush.msra.mxu0 %v1366
        %v1368 = vand.u32 %v454, 4294901760
        %1369 = vmatpush.msra.mxu0 %v1368
        %v1370 = vand.u32 %v453, 4294901760
        %1371 = vmatpush.msra.mxu0 %v1370
        %v1372 = vand.u32 %v452, 4294901760
        %1373 = vmatpush.msra.mxu0 %v1372
        %v1374 = vand.u32 %v451, 4294901760
        %1375 = vmatpush.msra.mxu0 %v1374
        %v1376 = vand.u32 %v450, 4294901760
        %1377 = vmatpush.msra.mxu0 %v1376
        %v1378 = vand.u32 %v449, 4294901760
        %1379 = vmatpush.msra.mxu0 %v1378
        %v1380 = vand.u32 %v448, 4294901760
        %1381 = vmatpush.msra.mxu0 %v1380
        %v1382 = vand.u32 %v447, 4294901760
        %1383 = vmatpush.msra.mxu0 %v1382
        %v1384 = vand.u32 %v446, 4294901760
        %1385 = vmatpush.msra.mxu0 %v1384
        %v1386 = vand.u32 %v445, 4294901760
        %1387 = vmatpush.msra.mxu0 %v1386
        %v1388 = vand.u32 %v444, 4294901760
        %1389 = vmatpush.msra.mxu0 %v1388
        %v1390 = vand.u32 %v443, 4294901760
        %1391 = vmatpush.msra.mxu0 %v1390
        %v1392 = vand.u32 %v202, 4294901760
        %v1393 = vsub.f32 %v202, %v1392
        %v1394 = vand.u32 %v1393, 4294901760
        %v1395 = vsub.f32 %v1393, %v1394
        %v1396 = vand.u32 %v1395, 4294901760
        %1397 = vmatmul.f32.gmra.mxu0 %v1396
        %v1398 = vpop.f32.mrf.mxu0
        %v1399 = vadd.f32 %v1346, %v1398
        %v1400 = vand.u32 %v203, 4294901760
        %v1401 = vsub.f32 %v203, %v1400
        %v1402 = vand.u32 %v1401, 4294901760
        %v1403 = vsub.f32 %v1401, %v1402
        %v1404 = vand.u32 %v1403, 4294901760
        %1405 = vmatmul.f32.gmra.mxu0 %v1404
        %v1406 = vpop.f32.mrf.mxu0
        %v1407 = vadd.f32 %v1350, %v1406
        %v1408 = vand.u32 %v204, 4294901760
        %v1409 = vsub.f32 %v204, %v1408
        %v1410 = vand.u32 %v1409, 4294901760
        %v1411 = vsub.f32 %v1409, %v1410
        %v1412 = vand.u32 %v1411, 4294901760
        %1413 = vmatmul.f32.gmra.mxu0 %v1412
        %v1414 = vpop.f32.mrf.mxu0
        %v1415 = vadd.f32 %v1354, %v1414
        %v1416 = vand.u32 %v205, 4294901760
        %v1417 = vsub.f32 %v205, %v1416
        %v1418 = vand.u32 %v1417, 4294901760
        %v1419 = vsub.f32 %v1417, %v1418
        %v1420 = vand.u32 %v1419, 4294901760
        %1421 = vmatmul.f32.gmra.mxu0 %v1420
        %v1422 = vpop.f32.mrf.mxu0
        %v1423 = vadd.f32 %v1358, %v1422
        %1424 = vdwg.mxu0
        %v1425 = vand.u32 %v458, 4294901760
        %v1426 = vsub.f32 %v458, %v1425
        %v1427 = vand.u32 %v1426, 4294901760
        %v1428 = vsub.f32 %v1426, %v1427
        %v1429 = vand.u32 %v1428, 4294901760
        %1430 = vmatpush.msra.mxu0 %v1429
        %v1431 = vand.u32 %v457, 4294901760
        %v1432 = vsub.f32 %v457, %v1431
        %v1433 = vand.u32 %v1432, 4294901760
        %v1434 = vsub.f32 %v1432, %v1433
        %v1435 = vand.u32 %v1434, 4294901760
        %1436 = vmatpush.msra.mxu0 %v1435
        %v1437 = vand.u32 %v456, 4294901760
        %v1438 = vsub.f32 %v456, %v1437
        %v1439 = vand.u32 %v1438, 4294901760
        %v1440 = vsub.f32 %v1438, %v1439
        %v1441 = vand.u32 %v1440, 4294901760
        %1442 = vmatpush.msra.mxu0 %v1441
        %v1443 = vand.u32 %v455, 4294901760
        %v1444 = vsub.f32 %v455, %v1443
        %v1445 = vand.u32 %v1444, 4294901760
        %v1446 = vsub.f32 %v1444, %v1445
        %v1447 = vand.u32 %v1446, 4294901760
        %1448 = vmatpush.msra.mxu0 %v1447
        %v1449 = vand.u32 %v454, 4294901760
        %v1450 = vsub.f32 %v454, %v1449
        %v1451 = vand.u32 %v1450, 4294901760
        %v1452 = vsub.f32 %v1450, %v1451
        %v1453 = vand.u32 %v1452, 4294901760
        %1454 = vmatpush.msra.mxu0 %v1453
        %v1455 = vand.u32 %v453, 4294901760
        %v1456 = vsub.f32 %v453, %v1455
        %v1457 = vand.u32 %v1456, 4294901760
        %v1458 = vsub.f32 %v1456, %v1457
        %v1459 = vand.u32 %v1458, 4294901760
        %1460 = vmatpush.msra.mxu0 %v1459
        %v1461 = vand.u32 %v452, 4294901760
        %v1462 = vsub.f32 %v452, %v1461
        %v1463 = vand.u32 %v1462, 4294901760
        %v1464 = vsub.f32 %v1462, %v1463
        %v1465 = vand.u32 %v1464, 4294901760
        %1466 = vmatpush.msra.mxu0 %v1465
        %v1467 = vand.u32 %v451, 4294901760
        %v1468 = vsub.f32 %v451, %v1467
        %v1469 = vand.u32 %v1468, 4294901760
        %v1470 = vsub.f32 %v1468, %v1469
        %v1471 = vand.u32 %v1470, 4294901760
        %1472 = vmatpush.msra.mxu0 %v1471
        %v1473 = vand.u32 %v450, 4294901760
        %v1474 = vsub.f32 %v450, %v1473
        %v1475 = vand.u32 %v1474, 4294901760
        %v1476 = vsub.f32 %v1474, %v1475
        %v1477 = vand.u32 %v1476, 4294901760
        %1478 = vmatpush.msra.mxu0 %v1477
        %v1479 = vand.u32 %v449, 4294901760
        %v1480 = vsub.f32 %v449, %v1479
        %v1481 = vand.u32 %v1480, 4294901760
        %v1482 = vsub.f32 %v1480, %v1481
        %v1483 = vand.u32 %v1482, 4294901760
        %1484 = vmatpush.msra.mxu0 %v1483
        %v1485 = vand.u32 %v448, 4294901760
        %v1486 = vsub.f32 %v448, %v1485
        %v1487 = vand.u32 %v1486, 4294901760
        %v1488 = vsub.f32 %v1486, %v1487
        %v1489 = vand.u32 %v1488, 4294901760
        %1490 = vmatpush.msra.mxu0 %v1489
        %v1491 = vand.u32 %v447, 4294901760
        %v1492 = vsub.f32 %v447, %v1491
        %v1493 = vand.u32 %v1492, 4294901760
        %v1494 = vsub.f32 %v1492, %v1493
        %v1495 = vand.u32 %v1494, 4294901760
        %1496 = vmatpush.msra.mxu0 %v1495
        %v1497 = vand.u32 %v446, 4294901760
        %v1498 = vsub.f32 %v446, %v1497
        %v1499 = vand.u32 %v1498, 4294901760
        %v1500 = vsub.f32 %v1498, %v1499
        %v1501 = vand.u32 %v1500, 4294901760
        %1502 = vmatpush.msra.mxu0 %v1501
        %v1503 = vand.u32 %v445, 4294901760
        %v1504 = vsub.f32 %v445, %v1503
        %v1505 = vand.u32 %v1504, 4294901760
        %v1506 = vsub.f32 %v1504, %v1505
        %v1507 = vand.u32 %v1506, 4294901760
        %1508 = vmatpush.msra.mxu0 %v1507
        %v1509 = vand.u32 %v444, 4294901760
        %v1510 = vsub.f32 %v444, %v1509
        %v1511 = vand.u32 %v1510, 4294901760
        %v1512 = vsub.f32 %v1510, %v1511
        %v1513 = vand.u32 %v1512, 4294901760
        %1514 = vmatpush.msra.mxu0 %v1513
        %v1515 = vand.u32 %v443, 4294901760
        %v1516 = vsub.f32 %v443, %v1515
        %v1517 = vand.u32 %v1516, 4294901760
        %v1518 = vsub.f32 %v1516, %v1517
        %v1519 = vand.u32 %v1518, 4294901760
        %1520 = vmatpush.msra.mxu0 %v1519
        %v1521 = vand.u32 %v202, 4294901760
        %1522 = vmatmul.f32.gmra.mxu0 %v1521
        %v1523 = vpop.f32.mrf.mxu0
        %v1524 = vadd.f32 %v1399, %v1523
        %v1525 = vand.u32 %v203, 4294901760
        %1526 = vmatmul.f32.gmra.mxu0 %v1525
        %v1527 = vpop.f32.mrf.mxu0
        %v1528 = vadd.f32 %v1407, %v1527
        %v1529 = vand.u32 %v204, 4294901760
        %1530 = vmatmul.f32.gmra.mxu0 %v1529
        %v1531 = vpop.f32.mrf.mxu0
        %v1532 = vadd.f32 %v1415, %v1531
        %v1533 = vand.u32 %v205, 4294901760
        %1534 = vmatmul.f32.gmra.mxu0 %v1533
        %v1535 = vpop.f32.mrf.mxu0
        %v1536 = vadd.f32 %v1423, %v1535
        %1537 = vdwg.mxu0
        %v1538 = vand.u32 %v458, 4294901760
        %v1539 = vsub.f32 %v458, %v1538
        %1540 = vmatpush.msra.mxu0 %v1539
        %v1541 = vand.u32 %v457, 4294901760
        %v1542 = vsub.f32 %v457, %v1541
        %1543 = vmatpush.msra.mxu0 %v1542
        %v1544 = vand.u32 %v456, 4294901760
        %v1545 = vsub.f32 %v456, %v1544
        %1546 = vmatpush.msra.mxu0 %v1545
        %v1547 = vand.u32 %v455, 4294901760
        %v1548 = vsub.f32 %v455, %v1547
        %1549 = vmatpush.msra.mxu0 %v1548
        %v1550 = vand.u32 %v454, 4294901760
        %v1551 = vsub.f32 %v454, %v1550
        %1552 = vmatpush.msra.mxu0 %v1551
        %v1553 = vand.u32 %v453, 4294901760
        %v1554 = vsub.f32 %v453, %v1553
        %1555 = vmatpush.msra.mxu0 %v1554
        %v1556 = vand.u32 %v452, 4294901760
        %v1557 = vsub.f32 %v452, %v1556
        %1558 = vmatpush.msra.mxu0 %v1557
        %v1559 = vand.u32 %v451, 4294901760
        %v1560 = vsub.f32 %v451, %v1559
        %1561 = vmatpush.msra.mxu0 %v1560
        %v1562 = vand.u32 %v450, 4294901760
        %v1563 = vsub.f32 %v450, %v1562
        %1564 = vmatpush.msra.mxu0 %v1563
        %v1565 = vand.u32 %v449, 4294901760
        %v1566 = vsub.f32 %v449, %v1565
        %1567 = vmatpush.msra.mxu0 %v1566
        %v1568 = vand.u32 %v448, 4294901760
        %v1569 = vsub.f32 %v448, %v1568
        %1570 = vmatpush.msra.mxu0 %v1569
        %v1571 = vand.u32 %v447, 4294901760
        %v1572 = vsub.f32 %v447, %v1571
        %1573 = vmatpush.msra.mxu0 %v1572
        %v1574 = vand.u32 %v446, 4294901760
        %v1575 = vsub.f32 %v446, %v1574
        %1576 = vmatpush.msra.mxu0 %v1575
        %v1577 = vand.u32 %v445, 4294901760
        %v1578 = vsub.f32 %v445, %v1577
        %1579 = vmatpush.msra.mxu0 %v1578
        %v1580 = vand.u32 %v444, 4294901760
        %v1581 = vsub.f32 %v444, %v1580
        %1582 = vmatpush.msra.mxu0 %v1581
        %v1583 = vand.u32 %v443, 4294901760
        %v1584 = vsub.f32 %v443, %v1583
        %1585 = vmatpush.msra.mxu0 %v1584
        %v1586 = vand.u32 %v202, 4294901760
        %v1587 = vsub.f32 %v202, %v1586
        %1588 = vmatmul.f32.gmra.mxu0 %v1587
        %v1589 = vpop.f32.mrf.mxu0
        %v1590 = vadd.f32 %v1524, %v1589
        %v1591 = vand.u32 %v203, 4294901760
        %v1592 = vsub.f32 %v203, %v1591
        %1593 = vmatmul.f32.gmra.mxu0 %v1592
        %v1594 = vpop.f32.mrf.mxu0
        %v1595 = vadd.f32 %v1528, %v1594
        %v1596 = vand.u32 %v204, 4294901760
        %v1597 = vsub.f32 %v204, %v1596
        %1598 = vmatmul.f32.gmra.mxu0 %v1597
        %v1599 = vpop.f32.mrf.mxu0
        %v1600 = vadd.f32 %v1532, %v1599
        %v1601 = vand.u32 %v205, 4294901760
        %v1602 = vsub.f32 %v205, %v1601
        %1603 = vmatmul.f32.gmra.mxu0 %v1602
        %v1604 = vpop.f32.mrf.mxu0
        %v1605 = vadd.f32 %v1536, %v1604
        %1606 = vdwg.mxu0
        %v1607 = vand.u32 %v458, 4294901760
        %1608 = vmatpush.msra.mxu0 %v1607
        %v1609 = vand.u32 %v457, 4294901760
        %1610 = vmatpush.msra.mxu0 %v1609
        %v1611 = vand.u32 %v456, 4294901760
        %1612 = vmatpush.msra.mxu0 %v1611
        %v1613 = vand.u32 %v455, 4294901760
        %1614 = vmatpush.msra.mxu0 %v1613
        %v1615 = vand.u32 %v454, 4294901760
        %1616 = vmatpush.msra.mxu0 %v1615
        %v1617 = vand.u32 %v453, 4294901760
        %1618 = vmatpush.msra.mxu0 %v1617
        %v1619 = vand.u32 %v452, 4294901760
        %1620 = vmatpush.msra.mxu0 %v1619
        %v1621 = vand.u32 %v451, 4294901760
        %1622 = vmatpush.msra.mxu0 %v1621
        %v1623 = vand.u32 %v450, 4294901760
        %1624 = vmatpush.msra.mxu0 %v1623
        %v1625 = vand.u32 %v449, 4294901760
        %1626 = vmatpush.msra.mxu0 %v1625
        %v1627 = vand.u32 %v448, 4294901760
        %1628 = vmatpush.msra.mxu0 %v1627
        %v1629 = vand.u32 %v447, 4294901760
        %1630 = vmatpush.msra.mxu0 %v1629
        %v1631 = vand.u32 %v446, 4294901760
        %1632 = vmatpush.msra.mxu0 %v1631
        %v1633 = vand.u32 %v445, 4294901760
        %1634 = vmatpush.msra.mxu0 %v1633
        %v1635 = vand.u32 %v444, 4294901760
        %1636 = vmatpush.msra.mxu0 %v1635
        %v1637 = vand.u32 %v443, 4294901760
        %1638 = vmatpush.msra.mxu0 %v1637
        %v1639 = vand.u32 %v202, 4294901760
        %v1640 = vsub.f32 %v202, %v1639
        %v1641 = vand.u32 %v1640, 4294901760
        %1642 = vmatmul.f32.gmra.mxu0 %v1641
        %v1643 = vpop.f32.mrf.mxu0
        %v1644 = vadd.f32 %v1590, %v1643
        %v1645 = vand.u32 %v203, 4294901760
        %v1646 = vsub.f32 %v203, %v1645
        %v1647 = vand.u32 %v1646, 4294901760
        %1648 = vmatmul.f32.gmra.mxu0 %v1647
        %v1649 = vpop.f32.mrf.mxu0
        %v1650 = vadd.f32 %v1595, %v1649
        %v1651 = vand.u32 %v204, 4294901760
        %v1652 = vsub.f32 %v204, %v1651
        %v1653 = vand.u32 %v1652, 4294901760
        %1654 = vmatmul.f32.gmra.mxu0 %v1653
        %v1655 = vpop.f32.mrf.mxu0
        %v1656 = vadd.f32 %v1600, %v1655
        %v1657 = vand.u32 %v205, 4294901760
        %v1658 = vsub.f32 %v205, %v1657
        %v1659 = vand.u32 %v1658, 4294901760
        %1660 = vmatmul.f32.gmra.mxu0 %v1659
        %v1661 = vpop.f32.mrf.mxu0
        %v1662 = vadd.f32 %v1605, %v1661
        %1663 = vdwg.mxu0
        %v1664 = vand.u32 %v458, 4294901760
        %v1665 = vsub.f32 %v458, %v1664
        %v1666 = vand.u32 %v1665, 4294901760
        %1667 = vmatpush.msra.mxu0 %v1666
        %v1668 = vand.u32 %v457, 4294901760
        %v1669 = vsub.f32 %v457, %v1668
        %v1670 = vand.u32 %v1669, 4294901760
        %1671 = vmatpush.msra.mxu0 %v1670
        %v1672 = vand.u32 %v456, 4294901760
        %v1673 = vsub.f32 %v456, %v1672
        %v1674 = vand.u32 %v1673, 4294901760
        %1675 = vmatpush.msra.mxu0 %v1674
        %v1676 = vand.u32 %v455, 4294901760
        %v1677 = vsub.f32 %v455, %v1676
        %v1678 = vand.u32 %v1677, 4294901760
        %1679 = vmatpush.msra.mxu0 %v1678
        %v1680 = vand.u32 %v454, 4294901760
        %v1681 = vsub.f32 %v454, %v1680
        %v1682 = vand.u32 %v1681, 4294901760
        %1683 = vmatpush.msra.mxu0 %v1682
        %v1684 = vand.u32 %v453, 4294901760
        %v1685 = vsub.f32 %v453, %v1684
        %v1686 = vand.u32 %v1685, 4294901760
        %1687 = vmatpush.msra.mxu0 %v1686
        %v1688 = vand.u32 %v452, 4294901760
        %v1689 = vsub.f32 %v452, %v1688
        %v1690 = vand.u32 %v1689, 4294901760
        %1691 = vmatpush.msra.mxu0 %v1690
        %v1692 = vand.u32 %v451, 4294901760
        %v1693 = vsub.f32 %v451, %v1692
        %v1694 = vand.u32 %v1693, 4294901760
        %1695 = vmatpush.msra.mxu0 %v1694
        %v1696 = vand.u32 %v450, 4294901760
        %v1697 = vsub.f32 %v450, %v1696
        %v1698 = vand.u32 %v1697, 4294901760
        %1699 = vmatpush.msra.mxu0 %v1698
        %v1700 = vand.u32 %v449, 4294901760
        %v1701 = vsub.f32 %v449, %v1700
        %v1702 = vand.u32 %v1701, 4294901760
        %1703 = vmatpush.msra.mxu0 %v1702
        %v1704 = vand.u32 %v448, 4294901760
        %v1705 = vsub.f32 %v448, %v1704
        %v1706 = vand.u32 %v1705, 4294901760
        %1707 = vmatpush.msra.mxu0 %v1706
        %v1708 = vand.u32 %v447, 4294901760
        %v1709 = vsub.f32 %v447, %v1708
        %v1710 = vand.u32 %v1709, 4294901760
        %1711 = vmatpush.msra.mxu0 %v1710
        %v1712 = vand.u32 %v446, 4294901760
        %v1713 = vsub.f32 %v446, %v1712
        %v1714 = vand.u32 %v1713, 4294901760
        %1715 = vmatpush.msra.mxu0 %v1714
        %v1716 = vand.u32 %v445, 4294901760
        %v1717 = vsub.f32 %v445, %v1716
        %v1718 = vand.u32 %v1717, 4294901760
        %1719 = vmatpush.msra.mxu0 %v1718
        %v1720 = vand.u32 %v444, 4294901760
        %v1721 = vsub.f32 %v444, %v1720
        %v1722 = vand.u32 %v1721, 4294901760
        %1723 = vmatpush.msra.mxu0 %v1722
        %v1724 = vand.u32 %v443, 4294901760
        %v1725 = vsub.f32 %v443, %v1724
        %v1726 = vand.u32 %v1725, 4294901760
        %1727 = vmatpush.msra.mxu0 %v1726
        %v1728 = vand.u32 %v202, 4294901760
        %1729 = vmatmul.f32.gmra.mxu0 %v1728
        %v1730 = vpop.f32.mrf.mxu0
        %v1731 = vadd.f32 %v1644, %v1730
        %v1732 = vand.u32 %v203, 4294901760
        %1733 = vmatmul.f32.gmra.mxu0 %v1732
        %v1734 = vpop.f32.mrf.mxu0
        %v1735 = vadd.f32 %v1650, %v1734
        %v1736 = vand.u32 %v204, 4294901760
        %1737 = vmatmul.f32.gmra.mxu0 %v1736
        %v1738 = vpop.f32.mrf.mxu0
        %v1739 = vadd.f32 %v1656, %v1738
        %v1740 = vand.u32 %v205, 4294901760
        %1741 = vmatmul.f32.gmra.mxu0 %v1740
        %v1742 = vpop.f32.mrf.mxu0
        %v1743 = vadd.f32 %v1662, %v1742
        %1744 = vdwg.mxu0
        %v1745 = vand.u32 %v458, 4294901760
        %1746 = vmatpush.msra.mxu0 %v1745
        %v1747 = vand.u32 %v457, 4294901760
        %1748 = vmatpush.msra.mxu0 %v1747
        %v1749 = vand.u32 %v456, 4294901760
        %1750 = vmatpush.msra.mxu0 %v1749
        %v1751 = vand.u32 %v455, 4294901760
        %1752 = vmatpush.msra.mxu0 %v1751
        %v1753 = vand.u32 %v454, 4294901760
        %1754 = vmatpush.msra.mxu0 %v1753
        %v1755 = vand.u32 %v453, 4294901760
        %1756 = vmatpush.msra.mxu0 %v1755
        %v1757 = vand.u32 %v452, 4294901760
        %1758 = vmatpush.msra.mxu0 %v1757
        %v1759 = vand.u32 %v451, 4294901760
        %1760 = vmatpush.msra.mxu0 %v1759
        %v1761 = vand.u32 %v450, 4294901760
        %1762 = vmatpush.msra.mxu0 %v1761
        %v1763 = vand.u32 %v449, 4294901760
        %1764 = vmatpush.msra.mxu0 %v1763
        %v1765 = vand.u32 %v448, 4294901760
        %1766 = vmatpush.msra.mxu0 %v1765
        %v1767 = vand.u32 %v447, 4294901760
        %1768 = vmatpush.msra.mxu0 %v1767
        %v1769 = vand.u32 %v446, 4294901760
        %1770 = vmatpush.msra.mxu0 %v1769
        %v1771 = vand.u32 %v445, 4294901760
        %1772 = vmatpush.msra.mxu0 %v1771
        %v1773 = vand.u32 %v444, 4294901760
        %1774 = vmatpush.msra.mxu0 %v1773
        %v1775 = vand.u32 %v443, 4294901760
        %1776 = vmatpush.msra.mxu0 %v1775
        %v1777 = vand.u32 %v202, 4294901760
        %1778 = vmatmul.f32.gmra.mxu0 %v1777
        %v1779 = vpop.f32.mrf.mxu0
        %v1780 = vadd.f32 %v1731, %v1779
        %v1781 = vand.u32 %v203, 4294901760
        %1782 = vmatmul.f32.gmra.mxu0 %v1781
        %v1783 = vpop.f32.mrf.mxu0
        %v1784 = vadd.f32 %v1735, %v1783
        %v1785 = vand.u32 %v204, 4294901760
        %1786 = vmatmul.f32.gmra.mxu0 %v1785
        %v1787 = vpop.f32.mrf.mxu0
        %v1788 = vadd.f32 %v1739, %v1787
        %v1789 = vand.u32 %v205, 4294901760
        %1790 = vmatmul.f32.gmra.mxu0 %v1789
        %v1791 = vpop.f32.mrf.mxu0
        %v1792 = vadd.f32 %v1743, %v1791
        %1793 = vdwg.mxu0
        %v1794 = vand.u32 %v474, 4294901760
        %1795 = vmatpush.msra.mxu0 %v1794
        %v1796 = vand.u32 %v473, 4294901760
        %1797 = vmatpush.msra.mxu0 %v1796
        %v1798 = vand.u32 %v472, 4294901760
        %1799 = vmatpush.msra.mxu0 %v1798
        %v1800 = vand.u32 %v471, 4294901760
        %1801 = vmatpush.msra.mxu0 %v1800
        %v1802 = vand.u32 %v470, 4294901760
        %1803 = vmatpush.msra.mxu0 %v1802
        %v1804 = vand.u32 %v469, 4294901760
        %1805 = vmatpush.msra.mxu0 %v1804
        %v1806 = vand.u32 %v468, 4294901760
        %1807 = vmatpush.msra.mxu0 %v1806
        %v1808 = vand.u32 %v467, 4294901760
        %1809 = vmatpush.msra.mxu0 %v1808
        %v1810 = vand.u32 %v466, 4294901760
        %1811 = vmatpush.msra.mxu0 %v1810
        %v1812 = vand.u32 %v465, 4294901760
        %1813 = vmatpush.msra.mxu0 %v1812
        %v1814 = vand.u32 %v464, 4294901760
        %1815 = vmatpush.msra.mxu0 %v1814
        %v1816 = vand.u32 %v463, 4294901760
        %1817 = vmatpush.msra.mxu0 %v1816
        %v1818 = vand.u32 %v462, 4294901760
        %1819 = vmatpush.msra.mxu0 %v1818
        %v1820 = vand.u32 %v461, 4294901760
        %1821 = vmatpush.msra.mxu0 %v1820
        %v1822 = vand.u32 %v460, 4294901760
        %1823 = vmatpush.msra.mxu0 %v1822
        %v1824 = vand.u32 %v459, 4294901760
        %1825 = vmatpush.msra.mxu0 %v1824
        %v1826 = vand.u32 %v394, 4294901760
        %v1827 = vsub.f32 %v394, %v1826
        %v1828 = vand.u32 %v1827, 4294901760
        %v1829 = vsub.f32 %v1827, %v1828
        %v1830 = vand.u32 %v1829, 4294901760
        %1831 = vmatmul.f32.gmra.mxu0 %v1830
        %v1832 = vpop.f32.mrf.mxu0
        %v1833 = vadd.f32 %v1780, %v1832
        %v1834 = vand.u32 %v395, 4294901760
        %v1835 = vsub.f32 %v395, %v1834
        %v1836 = vand.u32 %v1835, 4294901760
        %v1837 = vsub.f32 %v1835, %v1836
        %v1838 = vand.u32 %v1837, 4294901760
        %1839 = vmatmul.f32.gmra.mxu0 %v1838
        %v1840 = vpop.f32.mrf.mxu0
        %v1841 = vadd.f32 %v1784, %v1840
        %v1842 = vand.u32 %v396, 4294901760
        %v1843 = vsub.f32 %v396, %v1842
        %v1844 = vand.u32 %v1843, 4294901760
        %v1845 = vsub.f32 %v1843, %v1844
        %v1846 = vand.u32 %v1845, 4294901760
        %1847 = vmatmul.f32.gmra.mxu0 %v1846
        %v1848 = vpop.f32.mrf.mxu0
        %v1849 = vadd.f32 %v1788, %v1848
        %v1850 = vand.u32 %v397, 4294901760
        %v1851 = vsub.f32 %v397, %v1850
        %v1852 = vand.u32 %v1851, 4294901760
        %v1853 = vsub.f32 %v1851, %v1852
        %v1854 = vand.u32 %v1853, 4294901760
        %1855 = vmatmul.f32.gmra.mxu0 %v1854
        %v1856 = vpop.f32.mrf.mxu0
        %v1857 = vadd.f32 %v1792, %v1856
        %1858 = vdwg.mxu0
        %v1859 = vand.u32 %v474, 4294901760
        %v1860 = vsub.f32 %v474, %v1859
        %v1861 = vand.u32 %v1860, 4294901760
        %v1862 = vsub.f32 %v1860, %v1861
        %v1863 = vand.u32 %v1862, 4294901760
        %1864 = vmatpush.msra.mxu0 %v1863
        %v1865 = vand.u32 %v473, 4294901760
        %v1866 = vsub.f32 %v473, %v1865
        %v1867 = vand.u32 %v1866, 4294901760
        %v1868 = vsub.f32 %v1866, %v1867
        %v1869 = vand.u32 %v1868, 4294901760
        %1870 = vmatpush.msra.mxu0 %v1869
        %v1871 = vand.u32 %v472, 4294901760
        %v1872 = vsub.f32 %v472, %v1871
        %v1873 = vand.u32 %v1872, 4294901760
        %v1874 = vsub.f32 %v1872, %v1873
        %v1875 = vand.u32 %v1874, 4294901760
        %1876 = vmatpush.msra.mxu0 %v1875
        %v1877 = vand.u32 %v471, 4294901760
        %v1878 = vsub.f32 %v471, %v1877
        %v1879 = vand.u32 %v1878, 4294901760
        %v1880 = vsub.f32 %v1878, %v1879
        %v1881 = vand.u32 %v1880, 4294901760
        %1882 = vmatpush.msra.mxu0 %v1881
        %v1883 = vand.u32 %v470, 4294901760
        %v1884 = vsub.f32 %v470, %v1883
        %v1885 = vand.u32 %v1884, 4294901760
        %v1886 = vsub.f32 %v1884, %v1885
        %v1887 = vand.u32 %v1886, 4294901760
        %1888 = vmatpush.msra.mxu0 %v1887
        %v1889 = vand.u32 %v469, 4294901760
        %v1890 = vsub.f32 %v469, %v1889
        %v1891 = vand.u32 %v1890, 4294901760
        %v1892 = vsub.f32 %v1890, %v1891
        %v1893 = vand.u32 %v1892, 4294901760
        %1894 = vmatpush.msra.mxu0 %v1893
        %v1895 = vand.u32 %v468, 4294901760
        %v1896 = vsub.f32 %v468, %v1895
        %v1897 = vand.u32 %v1896, 4294901760
        %v1898 = vsub.f32 %v1896, %v1897
        %v1899 = vand.u32 %v1898, 4294901760
        %1900 = vmatpush.msra.mxu0 %v1899
        %v1901 = vand.u32 %v467, 4294901760
        %v1902 = vsub.f32 %v467, %v1901
        %v1903 = vand.u32 %v1902, 4294901760
        %v1904 = vsub.f32 %v1902, %v1903
        %v1905 = vand.u32 %v1904, 4294901760
        %1906 = vmatpush.msra.mxu0 %v1905
        %v1907 = vand.u32 %v466, 4294901760
        %v1908 = vsub.f32 %v466, %v1907
        %v1909 = vand.u32 %v1908, 4294901760
        %v1910 = vsub.f32 %v1908, %v1909
        %v1911 = vand.u32 %v1910, 4294901760
        %1912 = vmatpush.msra.mxu0 %v1911
        %v1913 = vand.u32 %v465, 4294901760
        %v1914 = vsub.f32 %v465, %v1913
        %v1915 = vand.u32 %v1914, 4294901760
        %v1916 = vsub.f32 %v1914, %v1915
        %v1917 = vand.u32 %v1916, 4294901760
        %1918 = vmatpush.msra.mxu0 %v1917
        %v1919 = vand.u32 %v464, 4294901760
        %v1920 = vsub.f32 %v464, %v1919
        %v1921 = vand.u32 %v1920, 4294901760
        %v1922 = vsub.f32 %v1920, %v1921
        %v1923 = vand.u32 %v1922, 4294901760
        %1924 = vmatpush.msra.mxu0 %v1923
        %v1925 = vand.u32 %v463, 4294901760
        %v1926 = vsub.f32 %v463, %v1925
        %v1927 = vand.u32 %v1926, 4294901760
        %v1928 = vsub.f32 %v1926, %v1927
        %v1929 = vand.u32 %v1928, 4294901760
        %1930 = vmatpush.msra.mxu0 %v1929
        %v1931 = vand.u32 %v462, 4294901760
        %v1932 = vsub.f32 %v462, %v1931
        %v1933 = vand.u32 %v1932, 4294901760
        %v1934 = vsub.f32 %v1932, %v1933
        %v1935 = vand.u32 %v1934, 4294901760
        %1936 = vmatpush.msra.mxu0 %v1935
        %v1937 = vand.u32 %v461, 4294901760
        %v1938 = vsub.f32 %v461, %v1937
        %v1939 = vand.u32 %v1938, 4294901760
        %v1940 = vsub.f32 %v1938, %v1939
        %v1941 = vand.u32 %v1940, 4294901760
        %1942 = vmatpush.msra.mxu0 %v1941
        %v1943 = vand.u32 %v460, 4294901760
        %v1944 = vsub.f32 %v460, %v1943
        %v1945 = vand.u32 %v1944, 4294901760
        %v1946 = vsub.f32 %v1944, %v1945
        %v1947 = vand.u32 %v1946, 4294901760
        %1948 = vmatpush.msra.mxu0 %v1947
        %v1949 = vand.u32 %v459, 4294901760
        %v1950 = vsub.f32 %v459, %v1949
        %v1951 = vand.u32 %v1950, 4294901760
        %v1952 = vsub.f32 %v1950, %v1951
        %v1953 = vand.u32 %v1952, 4294901760
        %1954 = vmatpush.msra.mxu0 %v1953
        %v1955 = vand.u32 %v394, 4294901760
        %1956 = vmatmul.f32.gmra.mxu0 %v1955
        %v1957 = vpop.f32.mrf.mxu0
        %v1958 = vadd.f32 %v1833, %v1957
        %v1959 = vand.u32 %v395, 4294901760
        %1960 = vmatmul.f32.gmra.mxu0 %v1959
        %v1961 = vpop.f32.mrf.mxu0
        %v1962 = vadd.f32 %v1841, %v1961
        %v1963 = vand.u32 %v396, 4294901760
        %1964 = vmatmul.f32.gmra.mxu0 %v1963
        %v1965 = vpop.f32.mrf.mxu0
        %v1966 = vadd.f32 %v1849, %v1965
        %v1967 = vand.u32 %v397, 4294901760
        %1968 = vmatmul.f32.gmra.mxu0 %v1967
        %v1969 = vpop.f32.mrf.mxu0
        %v1970 = vadd.f32 %v1857, %v1969
        %1971 = vdwg.mxu0
        %v1972 = vand.u32 %v474, 4294901760
        %v1973 = vsub.f32 %v474, %v1972
        %1974 = vmatpush.msra.mxu0 %v1973
        %v1975 = vand.u32 %v473, 4294901760
        %v1976 = vsub.f32 %v473, %v1975
        %1977 = vmatpush.msra.mxu0 %v1976
        %v1978 = vand.u32 %v472, 4294901760
        %v1979 = vsub.f32 %v472, %v1978
        %1980 = vmatpush.msra.mxu0 %v1979
        %v1981 = vand.u32 %v471, 4294901760
        %v1982 = vsub.f32 %v471, %v1981
        %1983 = vmatpush.msra.mxu0 %v1982
        %v1984 = vand.u32 %v470, 4294901760
        %v1985 = vsub.f32 %v470, %v1984
        %1986 = vmatpush.msra.mxu0 %v1985
        %v1987 = vand.u32 %v469, 4294901760
        %v1988 = vsub.f32 %v469, %v1987
        %1989 = vmatpush.msra.mxu0 %v1988
        %v1990 = vand.u32 %v468, 4294901760
        %v1991 = vsub.f32 %v468, %v1990
        %1992 = vmatpush.msra.mxu0 %v1991
        %v1993 = vand.u32 %v467, 4294901760
        %v1994 = vsub.f32 %v467, %v1993
        %1995 = vmatpush.msra.mxu0 %v1994
        %v1996 = vand.u32 %v466, 4294901760
        %v1997 = vsub.f32 %v466, %v1996
        %1998 = vmatpush.msra.mxu0 %v1997
        %v1999 = vand.u32 %v465, 4294901760
        %v2000 = vsub.f32 %v465, %v1999
        %2001 = vmatpush.msra.mxu0 %v2000
        %v2002 = vand.u32 %v464, 4294901760
        %v2003 = vsub.f32 %v464, %v2002
        %2004 = vmatpush.msra.mxu0 %v2003
        %v2005 = vand.u32 %v463, 4294901760
        %v2006 = vsub.f32 %v463, %v2005
        %2007 = vmatpush.msra.mxu0 %v2006
        %v2008 = vand.u32 %v462, 4294901760
        %v2009 = vsub.f32 %v462, %v2008
        %2010 = vmatpush.msra.mxu0 %v2009
        %v2011 = vand.u32 %v461, 4294901760
        %v2012 = vsub.f32 %v461, %v2011
        %2013 = vmatpush.msra.mxu0 %v2012
        %v2014 = vand.u32 %v460, 4294901760
        %v2015 = vsub.f32 %v460, %v2014
        %2016 = vmatpush.msra.mxu0 %v2015
        %v2017 = vand.u32 %v459, 4294901760
        %v2018 = vsub.f32 %v459, %v2017
        %2019 = vmatpush.msra.mxu0 %v2018
        %v2020 = vand.u32 %v394, 4294901760
        %v2021 = vsub.f32 %v394, %v2020
        %2022 = vmatmul.f32.gmra.mxu0 %v2021
        %v2023 = vpop.f32.mrf.mxu0
        %v2024 = vadd.f32 %v1958, %v2023
        %v2025 = vand.u32 %v395, 4294901760
        %v2026 = vsub.f32 %v395, %v2025
        %2027 = vmatmul.f32.gmra.mxu0 %v2026
        %v2028 = vpop.f32.mrf.mxu0
        %v2029 = vadd.f32 %v1962, %v2028
        %v2030 = vand.u32 %v396, 4294901760
        %v2031 = vsub.f32 %v396, %v2030
        %2032 = vmatmul.f32.gmra.mxu0 %v2031
        %v2033 = vpop.f32.mrf.mxu0
        %v2034 = vadd.f32 %v1966, %v2033
        %v2035 = vand.u32 %v397, 4294901760
        %v2036 = vsub.f32 %v397, %v2035
        %2037 = vmatmul.f32.gmra.mxu0 %v2036
        %v2038 = vpop.f32.mrf.mxu0
        %v2039 = vadd.f32 %v1970, %v2038
        %2040 = vdwg.mxu0
        %v2041 = vand.u32 %v474, 4294901760
        %2042 = vmatpush.msra.mxu0 %v2041
        %v2043 = vand.u32 %v473, 4294901760
        %2044 = vmatpush.msra.mxu0 %v2043
        %v2045 = vand.u32 %v472, 4294901760
        %2046 = vmatpush.msra.mxu0 %v2045
        %v2047 = vand.u32 %v471, 4294901760
        %2048 = vmatpush.msra.mxu0 %v2047
        %v2049 = vand.u32 %v470, 4294901760
        %2050 = vmatpush.msra.mxu0 %v2049
        %v2051 = vand.u32 %v469, 4294901760
        %2052 = vmatpush.msra.mxu0 %v2051
        %v2053 = vand.u32 %v468, 4294901760
        %2054 = vmatpush.msra.mxu0 %v2053
        %v2055 = vand.u32 %v467, 4294901760
        %2056 = vmatpush.msra.mxu0 %v2055
        %v2057 = vand.u32 %v466, 4294901760
        %2058 = vmatpush.msra.mxu0 %v2057
        %v2059 = vand.u32 %v465, 4294901760
        %2060 = vmatpush.msra.mxu0 %v2059
        %v2061 = vand.u32 %v464, 4294901760
        %2062 = vmatpush.msra.mxu0 %v2061
        %v2063 = vand.u32 %v463, 4294901760
        %2064 = vmatpush.msra.mxu0 %v2063
        %v2065 = vand.u32 %v462, 4294901760
        %2066 = vmatpush.msra.mxu0 %v2065
        %v2067 = vand.u32 %v461, 4294901760
        %2068 = vmatpush.msra.mxu0 %v2067
        %v2069 = vand.u32 %v460, 4294901760
        %2070 = vmatpush.msra.mxu0 %v2069
        %v2071 = vand.u32 %v459, 4294901760
        %2072 = vmatpush.msra.mxu0 %v2071
        %v2073 = vand.u32 %v394, 4294901760
        %v2074 = vsub.f32 %v394, %v2073
        %v2075 = vand.u32 %v2074, 4294901760
        %2076 = vmatmul.f32.gmra.mxu0 %v2075
        %v2077 = vpop.f32.mrf.mxu0
        %v2078 = vadd.f32 %v2024, %v2077
        %v2079 = vand.u32 %v395, 4294901760
        %v2080 = vsub.f32 %v395, %v2079
        %v2081 = vand.u32 %v2080, 4294901760
        %2082 = vmatmul.f32.gmra.mxu0 %v2081
        %v2083 = vpop.f32.mrf.mxu0
        %v2084 = vadd.f32 %v2029, %v2083
        %v2085 = vand.u32 %v396, 4294901760
        %v2086 = vsub.f32 %v396, %v2085
        %v2087 = vand.u32 %v2086, 4294901760
        %2088 = vmatmul.f32.gmra.mxu0 %v2087
        %v2089 = vpop.f32.mrf.mxu0
        %v2090 = vadd.f32 %v2034, %v2089
        %v2091 = vand.u32 %v397, 4294901760
        %v2092 = vsub.f32 %v397, %v2091
        %v2093 = vand.u32 %v2092, 4294901760
        %2094 = vmatmul.f32.gmra.mxu0 %v2093
        %v2095 = vpop.f32.mrf.mxu0
        %v2096 = vadd.f32 %v2039, %v2095
        %2097 = vdwg.mxu0
        %v2098 = vand.u32 %v474, 4294901760
        %v2099 = vsub.f32 %v474, %v2098
        %v2100 = vand.u32 %v2099, 4294901760
        %2101 = vmatpush.msra.mxu0 %v2100
        %v2102 = vand.u32 %v473, 4294901760
        %v2103 = vsub.f32 %v473, %v2102
        %v2104 = vand.u32 %v2103, 4294901760
        %2105 = vmatpush.msra.mxu0 %v2104
        %v2106 = vand.u32 %v472, 4294901760
        %v2107 = vsub.f32 %v472, %v2106
        %v2108 = vand.u32 %v2107, 4294901760
        %2109 = vmatpush.msra.mxu0 %v2108
        %v2110 = vand.u32 %v471, 4294901760
        %v2111 = vsub.f32 %v471, %v2110
        %v2112 = vand.u32 %v2111, 4294901760
        %2113 = vmatpush.msra.mxu0 %v2112
        %v2114 = vand.u32 %v470, 4294901760
        %v2115 = vsub.f32 %v470, %v2114
        %v2116 = vand.u32 %v2115, 4294901760
        %2117 = vmatpush.msra.mxu0 %v2116
        %v2118 = vand.u32 %v469, 4294901760
        %v2119 = vsub.f32 %v469, %v2118
        %v2120 = vand.u32 %v2119, 4294901760
        %2121 = vmatpush.msra.mxu0 %v2120
        %v2122 = vand.u32 %v468, 4294901760
        %v2123 = vsub.f32 %v468, %v2122
        %v2124 = vand.u32 %v2123, 4294901760
        %2125 = vmatpush.msra.mxu0 %v2124
        %v2126 = vand.u32 %v467, 4294901760
        %v2127 = vsub.f32 %v467, %v2126
        %v2128 = vand.u32 %v2127, 4294901760
        %2129 = vmatpush.msra.mxu0 %v2128
        %v2130 = vand.u32 %v466, 4294901760
        %v2131 = vsub.f32 %v466, %v2130
        %v2132 = vand.u32 %v2131, 4294901760
        %2133 = vmatpush.msra.mxu0 %v2132
        %v2134 = vand.u32 %v465, 4294901760
        %v2135 = vsub.f32 %v465, %v2134
        %v2136 = vand.u32 %v2135, 4294901760
        %2137 = vmatpush.msra.mxu0 %v2136
        %v2138 = vand.u32 %v464, 4294901760
        %v2139 = vsub.f32 %v464, %v2138
        %v2140 = vand.u32 %v2139, 4294901760
        %2141 = vmatpush.msra.mxu0 %v2140
        %v2142 = vand.u32 %v463, 4294901760
        %v2143 = vsub.f32 %v463, %v2142
        %v2144 = vand.u32 %v2143, 4294901760
        %2145 = vmatpush.msra.mxu0 %v2144
        %v2146 = vand.u32 %v462, 4294901760
        %v2147 = vsub.f32 %v462, %v2146
        %v2148 = vand.u32 %v2147, 4294901760
        %2149 = vmatpush.msra.mxu0 %v2148
        %v2150 = vand.u32 %v461, 4294901760
        %v2151 = vsub.f32 %v461, %v2150
        %v2152 = vand.u32 %v2151, 4294901760
        %2153 = vmatpush.msra.mxu0 %v2152
        %v2154 = vand.u32 %v460, 4294901760
        %v2155 = vsub.f32 %v460, %v2154
        %v2156 = vand.u32 %v2155, 4294901760
        %2157 = vmatpush.msra.mxu0 %v2156
        %v2158 = vand.u32 %v459, 4294901760
        %v2159 = vsub.f32 %v459, %v2158
        %v2160 = vand.u32 %v2159, 4294901760
        %2161 = vmatpush.msra.mxu0 %v2160
        %v2162 = vand.u32 %v394, 4294901760
        %2163 = vmatmul.f32.gmra.mxu0 %v2162
        %v2164 = vpop.f32.mrf.mxu0
        %v2165 = vadd.f32 %v2078, %v2164
        %v2166 = vand.u32 %v395, 4294901760
        %2167 = vmatmul.f32.gmra.mxu0 %v2166
        %v2168 = vpop.f32.mrf.mxu0
        %v2169 = vadd.f32 %v2084, %v2168
        %v2170 = vand.u32 %v396, 4294901760
        %2171 = vmatmul.f32.gmra.mxu0 %v2170
        %v2172 = vpop.f32.mrf.mxu0
        %v2173 = vadd.f32 %v2090, %v2172
        %v2174 = vand.u32 %v397, 4294901760
        %2175 = vmatmul.f32.gmra.mxu0 %v2174
        %v2176 = vpop.f32.mrf.mxu0
        %v2177 = vadd.f32 %v2096, %v2176
        %2178 = vdwg.mxu0
        %v2179 = vand.u32 %v474, 4294901760
        %2180 = vmatpush.msra.mxu0 %v2179
        %v2181 = vand.u32 %v473, 4294901760
        %2182 = vmatpush.msra.mxu0 %v2181
        %v2183 = vand.u32 %v472, 4294901760
        %2184 = vmatpush.msra.mxu0 %v2183
        %v2185 = vand.u32 %v471, 4294901760
        %2186 = vmatpush.msra.mxu0 %v2185
        %v2187 = vand.u32 %v470, 4294901760
        %2188 = vmatpush.msra.mxu0 %v2187
        %v2189 = vand.u32 %v469, 4294901760
        %2190 = vmatpush.msra.mxu0 %v2189
        %v2191 = vand.u32 %v468, 4294901760
        %2192 = vmatpush.msra.mxu0 %v2191
        %v2193 = vand.u32 %v467, 4294901760
        %2194 = vmatpush.msra.mxu0 %v2193
        %v2195 = vand.u32 %v466, 4294901760
        %2196 = vmatpush.msra.mxu0 %v2195
        %v2197 = vand.u32 %v465, 4294901760
        %2198 = vmatpush.msra.mxu0 %v2197
        %v2199 = vand.u32 %v464, 4294901760
        %2200 = vmatpush.msra.mxu0 %v2199
        %v2201 = vand.u32 %v463, 4294901760
        %2202 = vmatpush.msra.mxu0 %v2201
        %v2203 = vand.u32 %v462, 4294901760
        %2204 = vmatpush.msra.mxu0 %v2203
        %v2205 = vand.u32 %v461, 4294901760
        %2206 = vmatpush.msra.mxu0 %v2205
        %v2207 = vand.u32 %v460, 4294901760
        %2208 = vmatpush.msra.mxu0 %v2207
        %v2209 = vand.u32 %v459, 4294901760
        %2210 = vmatpush.msra.mxu0 %v2209
        %v2211 = vand.u32 %v394, 4294901760
        %2212 = vmatmul.f32.gmra.mxu0 %v2211
        %v2213 = vpop.f32.mrf.mxu0
        %v2214 = vadd.f32 %v2165, %v2213
        %v2215 = vand.u32 %v395, 4294901760
        %2216 = vmatmul.f32.gmra.mxu0 %v2215
        %v2217 = vpop.f32.mrf.mxu0
        %v2218 = vadd.f32 %v2169, %v2217
        %v2219 = vand.u32 %v396, 4294901760
        %2220 = vmatmul.f32.gmra.mxu0 %v2219
        %v2221 = vpop.f32.mrf.mxu0
        %v2222 = vadd.f32 %v2173, %v2221
        %v2223 = vand.u32 %v397, 4294901760
        %2224 = vmatmul.f32.gmra.mxu0 %v2223
        %v2225 = vpop.f32.mrf.mxu0
        %v2226 = vadd.f32 %v2177, %v2225
        %2227 = vdwg.mxu0
        %v2228 = vand.u32 %v490, 4294901760
        %2229 = vmatpush.msra.mxu0 %v2228
        %v2230 = vand.u32 %v489, 4294901760
        %2231 = vmatpush.msra.mxu0 %v2230
        %v2232 = vand.u32 %v488, 4294901760
        %2233 = vmatpush.msra.mxu0 %v2232
        %v2234 = vand.u32 %v487, 4294901760
        %2235 = vmatpush.msra.mxu0 %v2234
        %v2236 = vand.u32 %v486, 4294901760
        %2237 = vmatpush.msra.mxu0 %v2236
        %v2238 = vand.u32 %v485, 4294901760
        %2239 = vmatpush.msra.mxu0 %v2238
        %v2240 = vand.u32 %v484, 4294901760
        %2241 = vmatpush.msra.mxu0 %v2240
        %v2242 = vand.u32 %v483, 4294901760
        %2243 = vmatpush.msra.mxu0 %v2242
        %v2244 = vand.u32 %v482, 4294901760
        %2245 = vmatpush.msra.mxu0 %v2244
        %v2246 = vand.u32 %v481, 4294901760
        %2247 = vmatpush.msra.mxu0 %v2246
        %v2248 = vand.u32 %v480, 4294901760
        %2249 = vmatpush.msra.mxu0 %v2248
        %v2250 = vand.u32 %v479, 4294901760
        %2251 = vmatpush.msra.mxu0 %v2250
        %v2252 = vand.u32 %v478, 4294901760
        %2253 = vmatpush.msra.mxu0 %v2252
        %v2254 = vand.u32 %v477, 4294901760
        %2255 = vmatpush.msra.mxu0 %v2254
        %v2256 = vand.u32 %v476, 4294901760
        %2257 = vmatpush.msra.mxu0 %v2256
        %v2258 = vand.u32 %v475, 4294901760
        %2259 = vmatpush.msra.mxu0 %v2258
        %v2260 = vand.u32 %v407, 4294901760
        %v2261 = vsub.f32 %v407, %v2260
        %v2262 = vand.u32 %v2261, 4294901760
        %v2263 = vsub.f32 %v2261, %v2262
        %v2264 = vand.u32 %v2263, 4294901760
        %2265 = vmatmul.f32.gmra.mxu0 %v2264
        %v2266 = vpop.f32.mrf.mxu0
        %v2267 = vadd.f32 %v2214, %v2266
        %v2268 = vand.u32 %v408, 4294901760
        %v2269 = vsub.f32 %v408, %v2268
        %v2270 = vand.u32 %v2269, 4294901760
        %v2271 = vsub.f32 %v2269, %v2270
        %v2272 = vand.u32 %v2271, 4294901760
        %2273 = vmatmul.f32.gmra.mxu0 %v2272
        %v2274 = vpop.f32.mrf.mxu0
        %v2275 = vadd.f32 %v2218, %v2274
        %v2276 = vand.u32 %v409, 4294901760
        %v2277 = vsub.f32 %v409, %v2276
        %v2278 = vand.u32 %v2277, 4294901760
        %v2279 = vsub.f32 %v2277, %v2278
        %v2280 = vand.u32 %v2279, 4294901760
        %2281 = vmatmul.f32.gmra.mxu0 %v2280
        %v2282 = vpop.f32.mrf.mxu0
        %v2283 = vadd.f32 %v2222, %v2282
        %v2284 = vand.u32 %v410, 4294901760
        %v2285 = vsub.f32 %v410, %v2284
        %v2286 = vand.u32 %v2285, 4294901760
        %v2287 = vsub.f32 %v2285, %v2286
        %v2288 = vand.u32 %v2287, 4294901760
        %2289 = vmatmul.f32.gmra.mxu0 %v2288
        %v2290 = vpop.f32.mrf.mxu0
        %v2291 = vadd.f32 %v2226, %v2290
        %2292 = vdwg.mxu0
        %v2293 = vand.u32 %v490, 4294901760
        %v2294 = vsub.f32 %v490, %v2293
        %v2295 = vand.u32 %v2294, 4294901760
        %v2296 = vsub.f32 %v2294, %v2295
        %v2297 = vand.u32 %v2296, 4294901760
        %2298 = vmatpush.msra.mxu0 %v2297
        %v2299 = vand.u32 %v489, 4294901760
        %v2300 = vsub.f32 %v489, %v2299
        %v2301 = vand.u32 %v2300, 4294901760
        %v2302 = vsub.f32 %v2300, %v2301
        %v2303 = vand.u32 %v2302, 4294901760
        %2304 = vmatpush.msra.mxu0 %v2303
        %v2305 = vand.u32 %v488, 4294901760
        %v2306 = vsub.f32 %v488, %v2305
        %v2307 = vand.u32 %v2306, 4294901760
        %v2308 = vsub.f32 %v2306, %v2307
        %v2309 = vand.u32 %v2308, 4294901760
        %2310 = vmatpush.msra.mxu0 %v2309
        %v2311 = vand.u32 %v487, 4294901760
        %v2312 = vsub.f32 %v487, %v2311
        %v2313 = vand.u32 %v2312, 4294901760
        %v2314 = vsub.f32 %v2312, %v2313
        %v2315 = vand.u32 %v2314, 4294901760
        %2316 = vmatpush.msra.mxu0 %v2315
        %v2317 = vand.u32 %v486, 4294901760
        %v2318 = vsub.f32 %v486, %v2317
        %v2319 = vand.u32 %v2318, 4294901760
        %v2320 = vsub.f32 %v2318, %v2319
        %v2321 = vand.u32 %v2320, 4294901760
        %2322 = vmatpush.msra.mxu0 %v2321
        %v2323 = vand.u32 %v485, 4294901760
        %v2324 = vsub.f32 %v485, %v2323
        %v2325 = vand.u32 %v2324, 4294901760
        %v2326 = vsub.f32 %v2324, %v2325
        %v2327 = vand.u32 %v2326, 4294901760
        %2328 = vmatpush.msra.mxu0 %v2327
        %v2329 = vand.u32 %v484, 4294901760
        %v2330 = vsub.f32 %v484, %v2329
        %v2331 = vand.u32 %v2330, 4294901760
        %v2332 = vsub.f32 %v2330, %v2331
        %v2333 = vand.u32 %v2332, 4294901760
        %2334 = vmatpush.msra.mxu0 %v2333
        %v2335 = vand.u32 %v483, 4294901760
        %v2336 = vsub.f32 %v483, %v2335
        %v2337 = vand.u32 %v2336, 4294901760
        %v2338 = vsub.f32 %v2336, %v2337
        %v2339 = vand.u32 %v2338, 4294901760
        %2340 = vmatpush.msra.mxu0 %v2339
        %v2341 = vand.u32 %v482, 4294901760
        %v2342 = vsub.f32 %v482, %v2341
        %v2343 = vand.u32 %v2342, 4294901760
        %v2344 = vsub.f32 %v2342, %v2343
        %v2345 = vand.u32 %v2344, 4294901760
        %2346 = vmatpush.msra.mxu0 %v2345
        %v2347 = vand.u32 %v481, 4294901760
        %v2348 = vsub.f32 %v481, %v2347
        %v2349 = vand.u32 %v2348, 4294901760
        %v2350 = vsub.f32 %v2348, %v2349
        %v2351 = vand.u32 %v2350, 4294901760
        %2352 = vmatpush.msra.mxu0 %v2351
        %v2353 = vand.u32 %v480, 4294901760
        %v2354 = vsub.f32 %v480, %v2353
        %v2355 = vand.u32 %v2354, 4294901760
        %v2356 = vsub.f32 %v2354, %v2355
        %v2357 = vand.u32 %v2356, 4294901760
        %2358 = vmatpush.msra.mxu0 %v2357
        %v2359 = vand.u32 %v479, 4294901760
        %v2360 = vsub.f32 %v479, %v2359
        %v2361 = vand.u32 %v2360, 4294901760
        %v2362 = vsub.f32 %v2360, %v2361
        %v2363 = vand.u32 %v2362, 4294901760
        %2364 = vmatpush.msra.mxu0 %v2363
        %v2365 = vand.u32 %v478, 4294901760
        %v2366 = vsub.f32 %v478, %v2365
        %v2367 = vand.u32 %v2366, 4294901760
        %v2368 = vsub.f32 %v2366, %v2367
        %v2369 = vand.u32 %v2368, 4294901760
        %2370 = vmatpush.msra.mxu0 %v2369
        %v2371 = vand.u32 %v477, 4294901760
        %v2372 = vsub.f32 %v477, %v2371
        %v2373 = vand.u32 %v2372, 4294901760
        %v2374 = vsub.f32 %v2372, %v2373
        %v2375 = vand.u32 %v2374, 4294901760
        %2376 = vmatpush.msra.mxu0 %v2375
        %v2377 = vand.u32 %v476, 4294901760
        %v2378 = vsub.f32 %v476, %v2377
        %v2379 = vand.u32 %v2378, 4294901760
        %v2380 = vsub.f32 %v2378, %v2379
        %v2381 = vand.u32 %v2380, 4294901760
        %2382 = vmatpush.msra.mxu0 %v2381
        %v2383 = vand.u32 %v475, 4294901760
        %v2384 = vsub.f32 %v475, %v2383
        %v2385 = vand.u32 %v2384, 4294901760
        %v2386 = vsub.f32 %v2384, %v2385
        %v2387 = vand.u32 %v2386, 4294901760
        %2388 = vmatpush.msra.mxu0 %v2387
        %v2389 = vand.u32 %v407, 4294901760
        %2390 = vmatmul.f32.gmra.mxu0 %v2389
        %v2391 = vpop.f32.mrf.mxu0
        %v2392 = vadd.f32 %v2267, %v2391
        %v2393 = vand.u32 %v408, 4294901760
        %2394 = vmatmul.f32.gmra.mxu0 %v2393
        %v2395 = vpop.f32.mrf.mxu0
        %v2396 = vadd.f32 %v2275, %v2395
        %v2397 = vand.u32 %v409, 4294901760
        %2398 = vmatmul.f32.gmra.mxu0 %v2397
        %v2399 = vpop.f32.mrf.mxu0
        %v2400 = vadd.f32 %v2283, %v2399
        %v2401 = vand.u32 %v410, 4294901760
        %2402 = vmatmul.f32.gmra.mxu0 %v2401
        %v2403 = vpop.f32.mrf.mxu0
        %v2404 = vadd.f32 %v2291, %v2403
        %2405 = vdwg.mxu0
        %v2406 = vand.u32 %v490, 4294901760
        %v2407 = vsub.f32 %v490, %v2406
        %2408 = vmatpush.msra.mxu0 %v2407
        %v2409 = vand.u32 %v489, 4294901760
        %v2410 = vsub.f32 %v489, %v2409
        %2411 = vmatpush.msra.mxu0 %v2410
        %v2412 = vand.u32 %v488, 4294901760
        %v2413 = vsub.f32 %v488, %v2412
        %2414 = vmatpush.msra.mxu0 %v2413
        %v2415 = vand.u32 %v487, 4294901760
        %v2416 = vsub.f32 %v487, %v2415
        %2417 = vmatpush.msra.mxu0 %v2416
        %v2418 = vand.u32 %v486, 4294901760
        %v2419 = vsub.f32 %v486, %v2418
        %2420 = vmatpush.msra.mxu0 %v2419
        %v2421 = vand.u32 %v485, 4294901760
        %v2422 = vsub.f32 %v485, %v2421
        %2423 = vmatpush.msra.mxu0 %v2422
        %v2424 = vand.u32 %v484, 4294901760
        %v2425 = vsub.f32 %v484, %v2424
        %2426 = vmatpush.msra.mxu0 %v2425
        %v2427 = vand.u32 %v483, 4294901760
        %v2428 = vsub.f32 %v483, %v2427
        %2429 = vmatpush.msra.mxu0 %v2428
        %v2430 = vand.u32 %v482, 4294901760
        %v2431 = vsub.f32 %v482, %v2430
        %2432 = vmatpush.msra.mxu0 %v2431
        %v2433 = vand.u32 %v481, 4294901760
        %v2434 = vsub.f32 %v481, %v2433
        %2435 = vmatpush.msra.mxu0 %v2434
        %v2436 = vand.u32 %v480, 4294901760
        %v2437 = vsub.f32 %v480, %v2436
        %2438 = vmatpush.msra.mxu0 %v2437
        %v2439 = vand.u32 %v479, 4294901760
        %v2440 = vsub.f32 %v479, %v2439
        %2441 = vmatpush.msra.mxu0 %v2440
        %v2442 = vand.u32 %v478, 4294901760
        %v2443 = vsub.f32 %v478, %v2442
        %2444 = vmatpush.msra.mxu0 %v2443
        %v2445 = vand.u32 %v477, 4294901760
        %v2446 = vsub.f32 %v477, %v2445
        %2447 = vmatpush.msra.mxu0 %v2446
        %v2448 = vand.u32 %v476, 4294901760
        %v2449 = vsub.f32 %v476, %v2448
        %2450 = vmatpush.msra.mxu0 %v2449
        %v2451 = vand.u32 %v475, 4294901760
        %v2452 = vsub.f32 %v475, %v2451
        %2453 = vmatpush.msra.mxu0 %v2452
        %v2454 = vand.u32 %v407, 4294901760
        %v2455 = vsub.f32 %v407, %v2454
        %2456 = vmatmul.f32.gmra.mxu0 %v2455
        %v2457 = vpop.f32.mrf.mxu0
        %v2458 = vadd.f32 %v2392, %v2457
        %v2459 = vand.u32 %v408, 4294901760
        %v2460 = vsub.f32 %v408, %v2459
        %2461 = vmatmul.f32.gmra.mxu0 %v2460
        %v2462 = vpop.f32.mrf.mxu0
        %v2463 = vadd.f32 %v2396, %v2462
        %v2464 = vand.u32 %v409, 4294901760
        %v2465 = vsub.f32 %v409, %v2464
        %2466 = vmatmul.f32.gmra.mxu0 %v2465
        %v2467 = vpop.f32.mrf.mxu0
        %v2468 = vadd.f32 %v2400, %v2467
        %v2469 = vand.u32 %v410, 4294901760
        %v2470 = vsub.f32 %v410, %v2469
        %2471 = vmatmul.f32.gmra.mxu0 %v2470
        %v2472 = vpop.f32.mrf.mxu0
        %v2473 = vadd.f32 %v2404, %v2472
        %2474 = vdwg.mxu0
        %v2475 = vand.u32 %v490, 4294901760
        %2476 = vmatpush.msra.mxu0 %v2475
        %v2477 = vand.u32 %v489, 4294901760
        %2478 = vmatpush.msra.mxu0 %v2477
        %v2479 = vand.u32 %v488, 4294901760
        %2480 = vmatpush.msra.mxu0 %v2479
        %v2481 = vand.u32 %v487, 4294901760
        %2482 = vmatpush.msra.mxu0 %v2481
        %v2483 = vand.u32 %v486, 4294901760
        %2484 = vmatpush.msra.mxu0 %v2483
        %v2485 = vand.u32 %v485, 4294901760
        %2486 = vmatpush.msra.mxu0 %v2485
        %v2487 = vand.u32 %v484, 4294901760
        %2488 = vmatpush.msra.mxu0 %v2487
        %v2489 = vand.u32 %v483, 4294901760
        %2490 = vmatpush.msra.mxu0 %v2489
        %v2491 = vand.u32 %v482, 4294901760
        %2492 = vmatpush.msra.mxu0 %v2491
        %v2493 = vand.u32 %v481, 4294901760
        %2494 = vmatpush.msra.mxu0 %v2493
        %v2495 = vand.u32 %v480, 4294901760
        %2496 = vmatpush.msra.mxu0 %v2495
        %v2497 = vand.u32 %v479, 4294901760
        %2498 = vmatpush.msra.mxu0 %v2497
        %v2499 = vand.u32 %v478, 4294901760
        %2500 = vmatpush.msra.mxu0 %v2499
        %v2501 = vand.u32 %v477, 4294901760
        %2502 = vmatpush.msra.mxu0 %v2501
        %v2503 = vand.u32 %v476, 4294901760
        %2504 = vmatpush.msra.mxu0 %v2503
        %v2505 = vand.u32 %v475, 4294901760
        %2506 = vmatpush.msra.mxu0 %v2505
        %v2507 = vand.u32 %v407, 4294901760
        %v2508 = vsub.f32 %v407, %v2507
        %v2509 = vand.u32 %v2508, 4294901760
        %2510 = vmatmul.f32.gmra.mxu0 %v2509
        %v2511 = vpop.f32.mrf.mxu0
        %v2512 = vadd.f32 %v2458, %v2511
        %v2513 = vand.u32 %v408, 4294901760
        %v2514 = vsub.f32 %v408, %v2513
        %v2515 = vand.u32 %v2514, 4294901760
        %2516 = vmatmul.f32.gmra.mxu0 %v2515
        %v2517 = vpop.f32.mrf.mxu0
        %v2518 = vadd.f32 %v2463, %v2517
        %v2519 = vand.u32 %v409, 4294901760
        %v2520 = vsub.f32 %v409, %v2519
        %v2521 = vand.u32 %v2520, 4294901760
        %2522 = vmatmul.f32.gmra.mxu0 %v2521
        %v2523 = vpop.f32.mrf.mxu0
        %v2524 = vadd.f32 %v2468, %v2523
        %v2525 = vand.u32 %v410, 4294901760
        %v2526 = vsub.f32 %v410, %v2525
        %v2527 = vand.u32 %v2526, 4294901760
        %2528 = vmatmul.f32.gmra.mxu0 %v2527
        %v2529 = vpop.f32.mrf.mxu0
        %v2530 = vadd.f32 %v2473, %v2529
        %2531 = vdwg.mxu0
        %v2532 = vand.u32 %v490, 4294901760
        %v2533 = vsub.f32 %v490, %v2532
        %v2534 = vand.u32 %v2533, 4294901760
        %2535 = vmatpush.msra.mxu0 %v2534
        %v2536 = vand.u32 %v489, 4294901760
        %v2537 = vsub.f32 %v489, %v2536
        %v2538 = vand.u32 %v2537, 4294901760
        %2539 = vmatpush.msra.mxu0 %v2538
        %v2540 = vand.u32 %v488, 4294901760
        %v2541 = vsub.f32 %v488, %v2540
        %v2542 = vand.u32 %v2541, 4294901760
        %2543 = vmatpush.msra.mxu0 %v2542
        %v2544 = vand.u32 %v487, 4294901760
        %v2545 = vsub.f32 %v487, %v2544
        %v2546 = vand.u32 %v2545, 4294901760
        %2547 = vmatpush.msra.mxu0 %v2546
        %v2548 = vand.u32 %v486, 4294901760
        %v2549 = vsub.f32 %v486, %v2548
        %v2550 = vand.u32 %v2549, 4294901760
        %2551 = vmatpush.msra.mxu0 %v2550
        %v2552 = vand.u32 %v485, 4294901760
        %v2553 = vsub.f32 %v485, %v2552
        %v2554 = vand.u32 %v2553, 4294901760
        %2555 = vmatpush.msra.mxu0 %v2554
        %v2556 = vand.u32 %v484, 4294901760
        %v2557 = vsub.f32 %v484, %v2556
        %v2558 = vand.u32 %v2557, 4294901760
        %2559 = vmatpush.msra.mxu0 %v2558
        %v2560 = vand.u32 %v483, 4294901760
        %v2561 = vsub.f32 %v483, %v2560
        %v2562 = vand.u32 %v2561, 4294901760
        %2563 = vmatpush.msra.mxu0 %v2562
        %v2564 = vand.u32 %v482, 4294901760
        %v2565 = vsub.f32 %v482, %v2564
        %v2566 = vand.u32 %v2565, 4294901760
        %2567 = vmatpush.msra.mxu0 %v2566
        %v2568 = vand.u32 %v481, 4294901760
        %v2569 = vsub.f32 %v481, %v2568
        %v2570 = vand.u32 %v2569, 4294901760
        %2571 = vmatpush.msra.mxu0 %v2570
        %v2572 = vand.u32 %v480, 4294901760
        %v2573 = vsub.f32 %v480, %v2572
        %v2574 = vand.u32 %v2573, 4294901760
        %2575 = vmatpush.msra.mxu0 %v2574
        %v2576 = vand.u32 %v479, 4294901760
        %v2577 = vsub.f32 %v479, %v2576
        %v2578 = vand.u32 %v2577, 4294901760
        %2579 = vmatpush.msra.mxu0 %v2578
        %v2580 = vand.u32 %v478, 4294901760
        %v2581 = vsub.f32 %v478, %v2580
        %v2582 = vand.u32 %v2581, 4294901760
        %2583 = vmatpush.msra.mxu0 %v2582
        %v2584 = vand.u32 %v477, 4294901760
        %v2585 = vsub.f32 %v477, %v2584
        %v2586 = vand.u32 %v2585, 4294901760
        %2587 = vmatpush.msra.mxu0 %v2586
        %v2588 = vand.u32 %v476, 4294901760
        %v2589 = vsub.f32 %v476, %v2588
        %v2590 = vand.u32 %v2589, 4294901760
        %2591 = vmatpush.msra.mxu0 %v2590
        %v2592 = vand.u32 %v475, 4294901760
        %v2593 = vsub.f32 %v475, %v2592
        %v2594 = vand.u32 %v2593, 4294901760
        %2595 = vmatpush.msra.mxu0 %v2594
        %v2596 = vand.u32 %v407, 4294901760
        %2597 = vmatmul.f32.gmra.mxu0 %v2596
        %v2598 = vpop.f32.mrf.mxu0
        %v2599 = vadd.f32 %v2512, %v2598
        %v2600 = vand.u32 %v408, 4294901760
        %2601 = vmatmul.f32.gmra.mxu0 %v2600
        %v2602 = vpop.f32.mrf.mxu0
        %v2603 = vadd.f32 %v2518, %v2602
        %v2604 = vand.u32 %v409, 4294901760
        %2605 = vmatmul.f32.gmra.mxu0 %v2604
        %v2606 = vpop.f32.mrf.mxu0
        %v2607 = vadd.f32 %v2524, %v2606
        %v2608 = vand.u32 %v410, 4294901760
        %2609 = vmatmul.f32.gmra.mxu0 %v2608
        %v2610 = vpop.f32.mrf.mxu0
        %v2611 = vadd.f32 %v2530, %v2610
        %2612 = vdwg.mxu0
        %v2613 = vand.u32 %v490, 4294901760
        %2614 = vmatpush.msra.mxu0 %v2613
        %v2615 = vand.u32 %v489, 4294901760
        %2616 = vmatpush.msra.mxu0 %v2615
        %v2617 = vand.u32 %v488, 4294901760
        %2618 = vmatpush.msra.mxu0 %v2617
        %v2619 = vand.u32 %v487, 4294901760
        %2620 = vmatpush.msra.mxu0 %v2619
        %v2621 = vand.u32 %v486, 4294901760
        %2622 = vmatpush.msra.mxu0 %v2621
        %v2623 = vand.u32 %v485, 4294901760
        %2624 = vmatpush.msra.mxu0 %v2623
        %v2625 = vand.u32 %v484, 4294901760
        %2626 = vmatpush.msra.mxu0 %v2625
        %v2627 = vand.u32 %v483, 4294901760
        %2628 = vmatpush.msra.mxu0 %v2627
        %v2629 = vand.u32 %v482, 4294901760
        %2630 = vmatpush.msra.mxu0 %v2629
        %v2631 = vand.u32 %v481, 4294901760
        %2632 = vmatpush.msra.mxu0 %v2631
        %v2633 = vand.u32 %v480, 4294901760
        %2634 = vmatpush.msra.mxu0 %v2633
        %v2635 = vand.u32 %v479, 4294901760
        %2636 = vmatpush.msra.mxu0 %v2635
        %v2637 = vand.u32 %v478, 4294901760
        %2638 = vmatpush.msra.mxu0 %v2637
        %v2639 = vand.u32 %v477, 4294901760
        %2640 = vmatpush.msra.mxu0 %v2639
        %v2641 = vand.u32 %v476, 4294901760
        %2642 = vmatpush.msra.mxu0 %v2641
        %v2643 = vand.u32 %v475, 4294901760
        %2644 = vmatpush.msra.mxu0 %v2643
        %v2645 = vand.u32 %v407, 4294901760
        %2646 = vmatmul.f32.gmra.mxu0 %v2645
        %v2647 = vpop.f32.mrf.mxu0
        %v2648 = vadd.f32 %v2599, %v2647
        %v2649 = vand.u32 %v408, 4294901760
        %2650 = vmatmul.f32.gmra.mxu0 %v2649
        %v2651 = vpop.f32.mrf.mxu0
        %v2652 = vadd.f32 %v2603, %v2651
        %v2653 = vand.u32 %v409, 4294901760
        %2654 = vmatmul.f32.gmra.mxu0 %v2653
        %v2655 = vpop.f32.mrf.mxu0
        %v2656 = vadd.f32 %v2607, %v2655
        %v2657 = vand.u32 %v410, 4294901760
        %2658 = vmatmul.f32.gmra.mxu0 %v2657
        %v2659 = vpop.f32.mrf.mxu0
        %v2660 = vadd.f32 %v2611, %v2659
        %2661 = vdwg.mxu0
        %v2662 = vmul.f32 %v2648, %v2648
        %v2663 = vmul.f32 %v2652, %v2652
        %v2664 = vmul.f32 %v2656, %v2656
        %v2665 = vmul.f32 %v2660, %v2660
        %2666 = vadd.xlane.f32.xlu0 %v2662
        %v2667 = vpop.xlane.xlu0 %2666
        %2668 = vadd.xlane.f32.xlu0 %v2663
        %v2669 = vpop.xlane.xlu0 %2668
        %2670 = vadd.xlane.f32.xlu0 %v2664
        %v2671 = vpop.xlane.xlu0 %2670
        %2672 = vadd.xlane.f32.xlu0 %v2665
        %v2673 = vpop.xlane.xlu0 %2672
        %v2674 = vrcp.pop 128.0
        %v2675 = vmul.f32 128.0, %v2674
        %v2676 = vsub.f32 1.0, %v2675
        %v2677 = vmul.f32 %v2674, %v2676
        %v2678 = vadd.f32 %v2674, %v2677
        %vm2679 = vweird.f32 %v2674
        %v2680 = vsel %vm2679, %v2674, %v2678
        %v2681 = vmul.f32 %v2667, %v2680
        %v2682 = vmul.f32 %v2669, %v2680
        %v2683 = vmul.f32 %v2671, %v2680
        %v2684 = vmul.f32 %v2673, %v2680
        %v2685 = vadd.f32 %v2681, 1e-06
        %v2686 = vadd.f32 %v2682, 1e-06
        %v2687 = vadd.f32 %v2683, 1e-06
        %v2688 = vadd.f32 %v2684, 1e-06
        %v2689 = vrsqrt.pop %v2685
        %v2690 = vmul.f32 %v2689, %v2685
        %v2691 = vmul.f32 %v2690, %v2689
        %v2692 = vmul.f32 0.5, %v2691
        %v2693 = vsub.f32 1.5, %v2692
        %v2694 = vmul.f32 %v2689, %v2693
        %vm2695 = vweird.f32 %v2685
        %vm2696 = vweird.f32 %v2689
        %vm2697 = vmor %vm2695, %vm2696
        %v2698 = vsel %vm2697, %v2689, %v2694
        %v2699 = vrsqrt.pop %v2686
        %v2700 = vmul.f32 %v2699, %v2686
        %v2701 = vmul.f32 %v2700, %v2699
        %v2702 = vmul.f32 0.5, %v2701
        %v2703 = vsub.f32 1.5, %v2702
        %v2704 = vmul.f32 %v2699, %v2703
        %vm2705 = vweird.f32 %v2686
        %vm2706 = vweird.f32 %v2699
        %vm2707 = vmor %vm2705, %vm2706
        %v2708 = vsel %vm2707, %v2699, %v2704
        %v2709 = vrsqrt.pop %v2687
        %v2710 = vmul.f32 %v2709, %v2687
        %v2711 = vmul.f32 %v2710, %v2709
        %v2712 = vmul.f32 0.5, %v2711
        %v2713 = vsub.f32 1.5, %v2712
        %v2714 = vmul.f32 %v2709, %v2713
        %vm2715 = vweird.f32 %v2687
        %vm2716 = vweird.f32 %v2709
        %vm2717 = vmor %vm2715, %vm2716
        %v2718 = vsel %vm2717, %v2709, %v2714
        %v2719 = vrsqrt.pop %v2688
        %v2720 = vmul.f32 %v2719, %v2688
        %v2721 = vmul.f32 %v2720, %v2719
        %v2722 = vmul.f32 0.5, %v2721
        %v2723 = vsub.f32 1.5, %v2722
        %v2724 = vmul.f32 %v2719, %v2723
        %vm2725 = vweird.f32 %v2688
        %vm2726 = vweird.f32 %v2719
        %vm2727 = vmor %vm2725, %vm2726
        %v2728 = vsel %vm2727, %v2719, %v2724
        %v2729 = vmul.f32 %v2648, %v2698
        %v2730 = vmul.f32 %v2652, %v2708
        %v2731 = vmul.f32 %v2656, %v2718
        %v2732 = vmul.f32 %v2660, %v2728
        %v2733 = vperm.slane %v356, 0
        %v2734 = vmul.f32 %v2729, %v2733
        %v2735 = vmul.f32 %v2730, %v2733
        %v2736 = vmul.f32 %v2731, %v2733
        %v2737 = vmul.f32 %v2732, %v2733
        %v2738 = vxor.u32 %v2734, 2147483648
        %v2739 = vxor.u32 %v2735, 2147483648
        %v2740 = vxor.u32 %v2736, 2147483648
        %v2741 = vxor.u32 %v2737, 2147483648
        %v2742 = vmul.f32 %v2738, 1.442695
        %v2743 = vpow.pop %v2742
        %v2744 = vmul.f32 %v2739, 1.442695
        %v2745 = vpow.pop %v2744
        %v2746 = vmul.f32 %v2740, 1.442695
        %v2747 = vpow.pop %v2746
        %v2748 = vmul.f32 %v2741, 1.442695
        %v2749 = vpow.pop %v2748
        %v2750 = vadd.f32 %v2743, 1.0
        %v2751 = vadd.f32 %v2745, 1.0
        %v2752 = vadd.f32 %v2747, 1.0
        %v2753 = vadd.f32 %v2749, 1.0
        %v2754 = vrcp.pop %v2750
        %v2755 = vmul.f32 %v2750, %v2754
        %v2756 = vsub.f32 1.0, %v2755
        %v2757 = vmul.f32 %v2754, %v2756
        %v2758 = vadd.f32 %v2754, %v2757
        %vm2759 = vweird.f32 %v2750
        %vm2760 = vweird.f32 %v2754
        %vm2761 = vmor %vm2759, %vm2760
        %v2762 = vsel %vm2761, %v2754, %v2758
        %v2763 = vand.u32 2147483647, %v2750
        %vm2764 = vcmp.eq.f32.partialorder %v2763, 8.507059e+37
        %v2765 = vand.u32 %v2750, 2147483648
        %v2766 = vor.u32 1.1754944e-38, %v2765
        %v2767 = vsel %vm2764, %v2766, %v2762
        %v2768 = vmul.f32 1.0, %v2767
        %v2769 = vrcp.pop %v2751
        %v2770 = vmul.f32 %v2751, %v2769
        %v2771 = vsub.f32 1.0, %v2770
        %v2772 = vmul.f32 %v2769, %v2771
        %v2773 = vadd.f32 %v2769, %v2772
        %vm2774 = vweird.f32 %v2751
        %vm2775 = vweird.f32 %v2769
        %vm2776 = vmor %vm2774, %vm2775
        %v2777 = vsel %vm2776, %v2769, %v2773
        %v2778 = vand.u32 2147483647, %v2751
        %vm2779 = vcmp.eq.f32.partialorder %v2778, 8.507059e+37
        %v2780 = vand.u32 %v2751, 2147483648
        %v2781 = vor.u32 1.1754944e-38, %v2780
        %v2782 = vsel %vm2779, %v2781, %v2777
        %v2783 = vmul.f32 1.0, %v2782
        %v2784 = vrcp.pop %v2752
        %v2785 = vmul.f32 %v2752, %v2784
        %v2786 = vsub.f32 1.0, %v2785
        %v2787 = vmul.f32 %v2784, %v2786
        %v2788 = vadd.f32 %v2784, %v2787
        %vm2789 = vweird.f32 %v2752
        %vm2790 = vweird.f32 %v2784
        %vm2791 = vmor %vm2789, %vm2790
        %v2792 = vsel %vm2791, %v2784, %v2788
        %v2793 = vand.u32 2147483647, %v2752
        %vm2794 = vcmp.eq.f32.partialorder %v2793, 8.507059e+37
        %v2795 = vand.u32 %v2752, 2147483648
        %v2796 = vor.u32 1.1754944e-38, %v2795
        %v2797 = vsel %vm2794, %v2796, %v2792
        %v2798 = vmul.f32 1.0, %v2797
        %v2799 = vrcp.pop %v2753
        %v2800 = vmul.f32 %v2753, %v2799
        %v2801 = vsub.f32 1.0, %v2800
        %v2802 = vmul.f32 %v2799, %v2801
        %v2803 = vadd.f32 %v2799, %v2802
        %vm2804 = vweird.f32 %v2753
        %vm2805 = vweird.f32 %v2799
        %vm2806 = vmor %vm2804, %vm2805
        %v2807 = vsel %vm2806, %v2799, %v2803
        %v2808 = vand.u32 2147483647, %v2753
        %vm2809 = vcmp.eq.f32.partialorder %v2808, 8.507059e+37
        %v2810 = vand.u32 %v2753, 2147483648
        %v2811 = vor.u32 1.1754944e-38, %v2810
        %v2812 = vsel %vm2809, %v2811, %v2807
        %v2813 = vmul.f32 1.0, %v2812
        %v2814 = vmul.f32 %v2734, %v2768
        %v2815 = vmul.f32 %v2735, %v2783
        %v2816 = vmul.f32 %v2736, %v2798
        %v2817 = vmul.f32 %v2737, %v2813
        %v2818 = vrot.slane %v2814, 7
        %v2819 = vrot.slane %v2815, 7
        %v2820 = vrot.slane %v2816, 7
        %v2821 = vrot.slane %v2817, 7
        %v2822 = vsel %vm376, %v2820, %v2821
        %v2823 = vsel %vm376, %v2819, %v2820
        %v2824 = vsel %vm376, %v2818, %v2819
        %v2825 = vsel %vm376, %v2821, %v2818
        %v2826 = vmul.f32 %v2825, %v303
        %v2827 = vmul.f32 %v2824, %v304
        %v2828 = vmul.f32 %v2823, %v305
        %v2829 = vmul.f32 %v2822, %v306
        %v2830 = vrot.slane %v2814, 1
        %v2831 = vrot.slane %v2815, 1
        %v2832 = vrot.slane %v2816, 1
        %v2833 = vrot.slane %v2817, 1
        %v2834 = vsel %vm389, %v2832, %v2833
        %v2835 = vsel %vm389, %v2831, %v2832
        %v2836 = vsel %vm389, %v2830, %v2831
        %v2837 = vsel %vm389, %v2833, %v2830
        %v2838 = vmul.f32 %v2836, %v327
        %v2839 = vmul.f32 %v2835, %v328
        %v2840 = vmul.f32 %v2834, %v329
        %v2841 = vmul.f32 %v2837, %v330
        %v2842 = vld [vmem:[%s2] sm:$0xff]
        %v2843 = vld [vmem:[%s2 + $0x8] sm:$0xff]
        %v2844 = vld [vmem:[%s2 + $0x10] sm:$0xff]
        %v2845 = vld [vmem:[%s2 + $0x18] sm:$0xff]
        %v2846 = vld [vmem:[%s2 + $0x20] sm:$0xff]
        %v2847 = vld [vmem:[%s2 + $0x28] sm:$0xff]
        %v2848 = vld [vmem:[%s2 + $0x30] sm:$0xff]
        %v2849 = vld [vmem:[%s2 + $0x38] sm:$0xff]
        %v2850 = vld [vmem:[%s2 + $0x40] sm:$0xff]
        %v2851 = vld [vmem:[%s2 + $0x48] sm:$0xff]
        %v2852 = vld [vmem:[%s2 + $0x50] sm:$0xff]
        %v2853 = vld [vmem:[%s2 + $0x58] sm:$0xff]
        %v2854 = vld [vmem:[%s2 + $0x60] sm:$0xff]
        %v2855 = vld [vmem:[%s2 + $0x68] sm:$0xff]
        %v2856 = vld [vmem:[%s2 + $0x70] sm:$0xff]
        %v2857 = vld [vmem:[%s2 + $0x78] sm:$0xff]
        %v2858 = vld [vmem:[%s2 + $0x80] sm:$0xff]
        %v2859 = vld [vmem:[%s2 + $0x88] sm:$0xff]
        %v2860 = vld [vmem:[%s2 + $0x90] sm:$0xff]
        %v2861 = vld [vmem:[%s2 + $0x98] sm:$0xff]
        %v2862 = vld [vmem:[%s2 + $0xa0] sm:$0xff]
        %v2863 = vld [vmem:[%s2 + $0xa8] sm:$0xff]
        %v2864 = vld [vmem:[%s2 + $0xb0] sm:$0xff]
        %v2865 = vld [vmem:[%s2 + $0xb8] sm:$0xff]
        %v2866 = vld [vmem:[%s2 + $0xc0] sm:$0xff]
        %v2867 = vld [vmem:[%s2 + $0xc8] sm:$0xff]
        %v2868 = vld [vmem:[%s2 + $0xd0] sm:$0xff]
        %v2869 = vld [vmem:[%s2 + $0xd8] sm:$0xff]
        %v2870 = vld [vmem:[%s2 + $0xe0] sm:$0xff]
        %v2871 = vld [vmem:[%s2 + $0xe8] sm:$0xff]
        %v2872 = vld [vmem:[%s2 + $0xf0] sm:$0xff]
        %v2873 = vld [vmem:[%s2 + $0xf8] sm:$0xff]
        %v2874 = vld [vmem:[%s2 + $0x100] sm:$0xff]
        %v2875 = vld [vmem:[%s2 + $0x108] sm:$0xff]
        %v2876 = vld [vmem:[%s2 + $0x110] sm:$0xff]
        %v2877 = vld [vmem:[%s2 + $0x118] sm:$0xff]
        %v2878 = vld [vmem:[%s2 + $0x120] sm:$0xff]
        %v2879 = vld [vmem:[%s2 + $0x128] sm:$0xff]
        %v2880 = vld [vmem:[%s2 + $0x130] sm:$0xff]
        %v2881 = vld [vmem:[%s2 + $0x138] sm:$0xff]
        %v2882 = vld [vmem:[%s2 + $0x140] sm:$0xff]
        %v2883 = vld [vmem:[%s2 + $0x148] sm:$0xff]
        %v2884 = vld [vmem:[%s2 + $0x150] sm:$0xff]
        %v2885 = vld [vmem:[%s2 + $0x158] sm:$0xff]
        %v2886 = vld [vmem:[%s2 + $0x160] sm:$0xff]
        %v2887 = vld [vmem:[%s2 + $0x168] sm:$0xff]
        %v2888 = vld [vmem:[%s2 + $0x170] sm:$0xff]
        %v2889 = vld [vmem:[%s2 + $0x178] sm:$0xff]
        %v2890 = vand.u32 %v2857, 4294901760
        %2891 = vmatpush.msra.mxu0 %v2890
        %v2892 = vand.u32 %v2856, 4294901760
        %2893 = vmatpush.msra.mxu0 %v2892
        %v2894 = vand.u32 %v2855, 4294901760
        %2895 = vmatpush.msra.mxu0 %v2894
        %v2896 = vand.u32 %v2854, 4294901760
        %2897 = vmatpush.msra.mxu0 %v2896
        %v2898 = vand.u32 %v2853, 4294901760
        %2899 = vmatpush.msra.mxu0 %v2898
        %v2900 = vand.u32 %v2852, 4294901760
        %2901 = vmatpush.msra.mxu0 %v2900
        %v2902 = vand.u32 %v2851, 4294901760
        %2903 = vmatpush.msra.mxu0 %v2902
        %v2904 = vand.u32 %v2850, 4294901760
        %2905 = vmatpush.msra.mxu0 %v2904
        %v2906 = vand.u32 %v2849, 4294901760
        %2907 = vmatpush.msra.mxu0 %v2906
        %v2908 = vand.u32 %v2848, 4294901760
        %2909 = vmatpush.msra.mxu0 %v2908
        %v2910 = vand.u32 %v2847, 4294901760
        %2911 = vmatpush.msra.mxu0 %v2910
        %v2912 = vand.u32 %v2846, 4294901760
        %2913 = vmatpush.msra.mxu0 %v2912
        %v2914 = vand.u32 %v2845, 4294901760
        %2915 = vmatpush.msra.mxu0 %v2914
        %v2916 = vand.u32 %v2844, 4294901760
        %2917 = vmatpush.msra.mxu0 %v2916
        %v2918 = vand.u32 %v2843, 4294901760
        %2919 = vmatpush.msra.mxu0 %v2918
        %v2920 = vand.u32 %v2842, 4294901760
        %2921 = vmatpush.msra.mxu0 %v2920
        %v2922 = vand.u32 %v2826, 4294901760
        %v2923 = vsub.f32 %v2826, %v2922
        %v2924 = vand.u32 %v2923, 4294901760
        %v2925 = vsub.f32 %v2923, %v2924
        %v2926 = vand.u32 %v2925, 4294901760
        %2927 = vmatmul.f32.gmra.mxu0 %v2926
        %v2928 = vpop.f32.mrf.mxu0
        %v2929 = vadd.f32 %v202, %v2928
        %v2930 = vand.u32 %v2827, 4294901760
        %v2931 = vsub.f32 %v2827, %v2930
        %v2932 = vand.u32 %v2931, 4294901760
        %v2933 = vsub.f32 %v2931, %v2932
        %v2934 = vand.u32 %v2933, 4294901760
        %2935 = vmatmul.f32.gmra.mxu0 %v2934
        %v2936 = vpop.f32.mrf.mxu0
        %v2937 = vadd.f32 %v203, %v2936
        %v2938 = vand.u32 %v2828, 4294901760
        %v2939 = vsub.f32 %v2828, %v2938
        %v2940 = vand.u32 %v2939, 4294901760
        %v2941 = vsub.f32 %v2939, %v2940
        %v2942 = vand.u32 %v2941, 4294901760
        %2943 = vmatmul.f32.gmra.mxu0 %v2942
        %v2944 = vpop.f32.mrf.mxu0
        %v2945 = vadd.f32 %v204, %v2944
        %v2946 = vand.u32 %v2829, 4294901760
        %v2947 = vsub.f32 %v2829, %v2946
        %v2948 = vand.u32 %v2947, 4294901760
        %v2949 = vsub.f32 %v2947, %v2948
        %v2950 = vand.u32 %v2949, 4294901760
        %2951 = vmatmul.f32.gmra.mxu0 %v2950
        %v2952 = vpop.f32.mrf.mxu0
        %v2953 = vadd.f32 %v205, %v2952
        %2954 = vdwg.mxu0
        %v2955 = vand.u32 %v2857, 4294901760
        %v2956 = vsub.f32 %v2857, %v2955
        %v2957 = vand.u32 %v2956, 4294901760
        %v2958 = vsub.f32 %v2956, %v2957
        %v2959 = vand.u32 %v2958, 4294901760
        %2960 = vmatpush.msra.mxu0 %v2959
        %v2961 = vand.u32 %v2856, 4294901760
        %v2962 = vsub.f32 %v2856, %v2961
        %v2963 = vand.u32 %v2962, 4294901760
        %v2964 = vsub.f32 %v2962, %v2963
        %v2965 = vand.u32 %v2964, 4294901760
        %2966 = vmatpush.msra.mxu0 %v2965
        %v2967 = vand.u32 %v2855, 4294901760
        %v2968 = vsub.f32 %v2855, %v2967
        %v2969 = vand.u32 %v2968, 4294901760
        %v2970 = vsub.f32 %v2968, %v2969
        %v2971 = vand.u32 %v2970, 4294901760
        %2972 = vmatpush.msra.mxu0 %v2971
        %v2973 = vand.u32 %v2854, 4294901760
        %v2974 = vsub.f32 %v2854, %v2973
        %v2975 = vand.u32 %v2974, 4294901760
        %v2976 = vsub.f32 %v2974, %v2975
        %v2977 = vand.u32 %v2976, 4294901760
        %2978 = vmatpush.msra.mxu0 %v2977
        %v2979 = vand.u32 %v2853, 4294901760
        %v2980 = vsub.f32 %v2853, %v2979
        %v2981 = vand.u32 %v2980, 4294901760
        %v2982 = vsub.f32 %v2980, %v2981
        %v2983 = vand.u32 %v2982, 4294901760
        %2984 = vmatpush.msra.mxu0 %v2983
        %v2985 = vand.u32 %v2852, 4294901760
        %v2986 = vsub.f32 %v2852, %v2985
        %v2987 = vand.u32 %v2986, 4294901760
        %v2988 = vsub.f32 %v2986, %v2987
        %v2989 = vand.u32 %v2988, 4294901760
        %2990 = vmatpush.msra.mxu0 %v2989
        %v2991 = vand.u32 %v2851, 4294901760
        %v2992 = vsub.f32 %v2851, %v2991
        %v2993 = vand.u32 %v2992, 4294901760
        %v2994 = vsub.f32 %v2992, %v2993
        %v2995 = vand.u32 %v2994, 4294901760
        %2996 = vmatpush.msra.mxu0 %v2995
        %v2997 = vand.u32 %v2850, 4294901760
        %v2998 = vsub.f32 %v2850, %v2997
        %v2999 = vand.u32 %v2998, 4294901760
        %v3000 = vsub.f32 %v2998, %v2999
        %v3001 = vand.u32 %v3000, 4294901760
        %3002 = vmatpush.msra.mxu0 %v3001
        %v3003 = vand.u32 %v2849, 4294901760
        %v3004 = vsub.f32 %v2849, %v3003
        %v3005 = vand.u32 %v3004, 4294901760
        %v3006 = vsub.f32 %v3004, %v3005
        %v3007 = vand.u32 %v3006, 4294901760
        %3008 = vmatpush.msra.mxu0 %v3007
        %v3009 = vand.u32 %v2848, 4294901760
        %v3010 = vsub.f32 %v2848, %v3009
        %v3011 = vand.u32 %v3010, 4294901760
        %v3012 = vsub.f32 %v3010, %v3011
        %v3013 = vand.u32 %v3012, 4294901760
        %3014 = vmatpush.msra.mxu0 %v3013
        %v3015 = vand.u32 %v2847, 4294901760
        %v3016 = vsub.f32 %v2847, %v3015
        %v3017 = vand.u32 %v3016, 4294901760
        %v3018 = vsub.f32 %v3016, %v3017
        %v3019 = vand.u32 %v3018, 4294901760
        %3020 = vmatpush.msra.mxu0 %v3019
        %v3021 = vand.u32 %v2846, 4294901760
        %v3022 = vsub.f32 %v2846, %v3021
        %v3023 = vand.u32 %v3022, 4294901760
        %v3024 = vsub.f32 %v3022, %v3023
        %v3025 = vand.u32 %v3024, 4294901760
        %3026 = vmatpush.msra.mxu0 %v3025
        %v3027 = vand.u32 %v2845, 4294901760
        %v3028 = vsub.f32 %v2845, %v3027
        %v3029 = vand.u32 %v3028, 4294901760
        %v3030 = vsub.f32 %v3028, %v3029
        %v3031 = vand.u32 %v3030, 4294901760
        %3032 = vmatpush.msra.mxu0 %v3031
        %v3033 = vand.u32 %v2844, 4294901760
        %v3034 = vsub.f32 %v2844, %v3033
        %v3035 = vand.u32 %v3034, 4294901760
        %v3036 = vsub.f32 %v3034, %v3035
        %v3037 = vand.u32 %v3036, 4294901760
        %3038 = vmatpush.msra.mxu0 %v3037
        %v3039 = vand.u32 %v2843, 4294901760
        %v3040 = vsub.f32 %v2843, %v3039
        %v3041 = vand.u32 %v3040, 4294901760
        %v3042 = vsub.f32 %v3040, %v3041
        %v3043 = vand.u32 %v3042, 4294901760
        %3044 = vmatpush.msra.mxu0 %v3043
        %v3045 = vand.u32 %v2842, 4294901760
        %v3046 = vsub.f32 %v2842, %v3045
        %v3047 = vand.u32 %v3046, 4294901760
        %v3048 = vsub.f32 %v3046, %v3047
        %v3049 = vand.u32 %v3048, 4294901760
        %3050 = vmatpush.msra.mxu0 %v3049
        %v3051 = vand.u32 %v2826, 4294901760
        %3052 = vmatmul.f32.gmra.mxu0 %v3051
        %v3053 = vpop.f32.mrf.mxu0
        %v3054 = vadd.f32 %v2929, %v3053
        %v3055 = vand.u32 %v2827, 4294901760
        %3056 = vmatmul.f32.gmra.mxu0 %v3055
        %v3057 = vpop.f32.mrf.mxu0
        %v3058 = vadd.f32 %v2937, %v3057
        %v3059 = vand.u32 %v2828, 4294901760
        %3060 = vmatmul.f32.gmra.mxu0 %v3059
        %v3061 = vpop.f32.mrf.mxu0
        %v3062 = vadd.f32 %v2945, %v3061
        %v3063 = vand.u32 %v2829, 4294901760
        %3064 = vmatmul.f32.gmra.mxu0 %v3063
        %v3065 = vpop.f32.mrf.mxu0
        %v3066 = vadd.f32 %v2953, %v3065
        %3067 = vdwg.mxu0
        %v3068 = vand.u32 %v2857, 4294901760
        %v3069 = vsub.f32 %v2857, %v3068
        %3070 = vmatpush.msra.mxu0 %v3069
        %v3071 = vand.u32 %v2856, 4294901760
        %v3072 = vsub.f32 %v2856, %v3071
        %3073 = vmatpush.msra.mxu0 %v3072
        %v3074 = vand.u32 %v2855, 4294901760
        %v3075 = vsub.f32 %v2855, %v3074
        %3076 = vmatpush.msra.mxu0 %v3075
        %v3077 = vand.u32 %v2854, 4294901760
        %v3078 = vsub.f32 %v2854, %v3077
        %3079 = vmatpush.msra.mxu0 %v3078
        %v3080 = vand.u32 %v2853, 4294901760
        %v3081 = vsub.f32 %v2853, %v3080
        %3082 = vmatpush.msra.mxu0 %v3081
        %v3083 = vand.u32 %v2852, 4294901760
        %v3084 = vsub.f32 %v2852, %v3083
        %3085 = vmatpush.msra.mxu0 %v3084
        %v3086 = vand.u32 %v2851, 4294901760
        %v3087 = vsub.f32 %v2851, %v3086
        %3088 = vmatpush.msra.mxu0 %v3087
        %v3089 = vand.u32 %v2850, 4294901760
        %v3090 = vsub.f32 %v2850, %v3089
        %3091 = vmatpush.msra.mxu0 %v3090
        %v3092 = vand.u32 %v2849, 4294901760
        %v3093 = vsub.f32 %v2849, %v3092
        %3094 = vmatpush.msra.mxu0 %v3093
        %v3095 = vand.u32 %v2848, 4294901760
        %v3096 = vsub.f32 %v2848, %v3095
        %3097 = vmatpush.msra.mxu0 %v3096
        %v3098 = vand.u32 %v2847, 4294901760
        %v3099 = vsub.f32 %v2847, %v3098
        %3100 = vmatpush.msra.mxu0 %v3099
        %v3101 = vand.u32 %v2846, 4294901760
        %v3102 = vsub.f32 %v2846, %v3101
        %3103 = vmatpush.msra.mxu0 %v3102
        %v3104 = vand.u32 %v2845, 4294901760
        %v3105 = vsub.f32 %v2845, %v3104
        %3106 = vmatpush.msra.mxu0 %v3105
        %v3107 = vand.u32 %v2844, 4294901760
        %v3108 = vsub.f32 %v2844, %v3107
        %3109 = vmatpush.msra.mxu0 %v3108
        %v3110 = vand.u32 %v2843, 4294901760
        %v3111 = vsub.f32 %v2843, %v3110
        %3112 = vmatpush.msra.mxu0 %v3111
        %v3113 = vand.u32 %v2842, 4294901760
        %v3114 = vsub.f32 %v2842, %v3113
        %3115 = vmatpush.msra.mxu0 %v3114
        %v3116 = vand.u32 %v2826, 4294901760
        %v3117 = vsub.f32 %v2826, %v3116
        %3118 = vmatmul.f32.gmra.mxu0 %v3117
        %v3119 = vpop.f32.mrf.mxu0
        %v3120 = vadd.f32 %v3054, %v3119
        %v3121 = vand.u32 %v2827, 4294901760
        %v3122 = vsub.f32 %v2827, %v3121
        %3123 = vmatmul.f32.gmra.mxu0 %v3122
        %v3124 = vpop.f32.mrf.mxu0
        %v3125 = vadd.f32 %v3058, %v3124
        %v3126 = vand.u32 %v2828, 4294901760
        %v3127 = vsub.f32 %v2828, %v3126
        %3128 = vmatmul.f32.gmra.mxu0 %v3127
        %v3129 = vpop.f32.mrf.mxu0
        %v3130 = vadd.f32 %v3062, %v3129
        %v3131 = vand.u32 %v2829, 4294901760
        %v3132 = vsub.f32 %v2829, %v3131
        %3133 = vmatmul.f32.gmra.mxu0 %v3132
        %v3134 = vpop.f32.mrf.mxu0
        %v3135 = vadd.f32 %v3066, %v3134
        %3136 = vdwg.mxu0
        %v3137 = vand.u32 %v2857, 4294901760
        %3138 = vmatpush.msra.mxu0 %v3137
        %v3139 = vand.u32 %v2856, 4294901760
        %3140 = vmatpush.msra.mxu0 %v3139
        %v3141 = vand.u32 %v2855, 4294901760
        %3142 = vmatpush.msra.mxu0 %v3141
        %v3143 = vand.u32 %v2854, 4294901760
        %3144 = vmatpush.msra.mxu0 %v3143
        %v3145 = vand.u32 %v2853, 4294901760
        %3146 = vmatpush.msra.mxu0 %v3145
        %v3147 = vand.u32 %v2852, 4294901760
        %3148 = vmatpush.msra.mxu0 %v3147
        %v3149 = vand.u32 %v2851, 4294901760
        %3150 = vmatpush.msra.mxu0 %v3149
        %v3151 = vand.u32 %v2850, 4294901760
        %3152 = vmatpush.msra.mxu0 %v3151
        %v3153 = vand.u32 %v2849, 4294901760
        %3154 = vmatpush.msra.mxu0 %v3153
        %v3155 = vand.u32 %v2848, 4294901760
        %3156 = vmatpush.msra.mxu0 %v3155
        %v3157 = vand.u32 %v2847, 4294901760
        %3158 = vmatpush.msra.mxu0 %v3157
        %v3159 = vand.u32 %v2846, 4294901760
        %3160 = vmatpush.msra.mxu0 %v3159
        %v3161 = vand.u32 %v2845, 4294901760
        %3162 = vmatpush.msra.mxu0 %v3161
        %v3163 = vand.u32 %v2844, 4294901760
        %3164 = vmatpush.msra.mxu0 %v3163
        %v3165 = vand.u32 %v2843, 4294901760
        %3166 = vmatpush.msra.mxu0 %v3165
        %v3167 = vand.u32 %v2842, 4294901760
        %3168 = vmatpush.msra.mxu0 %v3167
        %v3169 = vand.u32 %v2826, 4294901760
        %v3170 = vsub.f32 %v2826, %v3169
        %v3171 = vand.u32 %v3170, 4294901760
        %3172 = vmatmul.f32.gmra.mxu0 %v3171
        %v3173 = vpop.f32.mrf.mxu0
        %v3174 = vadd.f32 %v3120, %v3173
        %v3175 = vand.u32 %v2827, 4294901760
        %v3176 = vsub.f32 %v2827, %v3175
        %v3177 = vand.u32 %v3176, 4294901760
        %3178 = vmatmul.f32.gmra.mxu0 %v3177
        %v3179 = vpop.f32.mrf.mxu0
        %v3180 = vadd.f32 %v3125, %v3179
        %v3181 = vand.u32 %v2828, 4294901760
        %v3182 = vsub.f32 %v2828, %v3181
        %v3183 = vand.u32 %v3182, 4294901760
        %3184 = vmatmul.f32.gmra.mxu0 %v3183
        %v3185 = vpop.f32.mrf.mxu0
        %v3186 = vadd.f32 %v3130, %v3185
        %v3187 = vand.u32 %v2829, 4294901760
        %v3188 = vsub.f32 %v2829, %v3187
        %v3189 = vand.u32 %v3188, 4294901760
        %3190 = vmatmul.f32.gmra.mxu0 %v3189
        %v3191 = vpop.f32.mrf.mxu0
        %v3192 = vadd.f32 %v3135, %v3191
        %3193 = vdwg.mxu0
        %v3194 = vand.u32 %v2857, 4294901760
        %v3195 = vsub.f32 %v2857, %v3194
        %v3196 = vand.u32 %v3195, 4294901760
        %3197 = vmatpush.msra.mxu0 %v3196
        %v3198 = vand.u32 %v2856, 4294901760
        %v3199 = vsub.f32 %v2856, %v3198
        %v3200 = vand.u32 %v3199, 4294901760
        %3201 = vmatpush.msra.mxu0 %v3200
        %v3202 = vand.u32 %v2855, 4294901760
        %v3203 = vsub.f32 %v2855, %v3202
        %v3204 = vand.u32 %v3203, 4294901760
        %3205 = vmatpush.msra.mxu0 %v3204
        %v3206 = vand.u32 %v2854, 4294901760
        %v3207 = vsub.f32 %v2854, %v3206
        %v3208 = vand.u32 %v3207, 4294901760
        %3209 = vmatpush.msra.mxu0 %v3208
        %v3210 = vand.u32 %v2853, 4294901760
        %v3211 = vsub.f32 %v2853, %v3210
        %v3212 = vand.u32 %v3211, 4294901760
        %3213 = vmatpush.msra.mxu0 %v3212
        %v3214 = vand.u32 %v2852, 4294901760
        %v3215 = vsub.f32 %v2852, %v3214
        %v3216 = vand.u32 %v3215, 4294901760
        %3217 = vmatpush.msra.mxu0 %v3216
        %v3218 = vand.u32 %v2851, 4294901760
        %v3219 = vsub.f32 %v2851, %v3218
        %v3220 = vand.u32 %v3219, 4294901760
        %3221 = vmatpush.msra.mxu0 %v3220
        %v3222 = vand.u32 %v2850, 4294901760
        %v3223 = vsub.f32 %v2850, %v3222
        %v3224 = vand.u32 %v3223, 4294901760
        %3225 = vmatpush.msra.mxu0 %v3224
        %v3226 = vand.u32 %v2849, 4294901760
        %v3227 = vsub.f32 %v2849, %v3226
        %v3228 = vand.u32 %v3227, 4294901760
        %3229 = vmatpush.msra.mxu0 %v3228
        %v3230 = vand.u32 %v2848, 4294901760
        %v3231 = vsub.f32 %v2848, %v3230
        %v3232 = vand.u32 %v3231, 4294901760
        %3233 = vmatpush.msra.mxu0 %v3232
        %v3234 = vand.u32 %v2847, 4294901760
        %v3235 = vsub.f32 %v2847, %v3234
        %v3236 = vand.u32 %v3235, 4294901760
        %3237 = vmatpush.msra.mxu0 %v3236
        %v3238 = vand.u32 %v2846, 4294901760
        %v3239 = vsub.f32 %v2846, %v3238
        %v3240 = vand.u32 %v3239, 4294901760
        %3241 = vmatpush.msra.mxu0 %v3240
        %v3242 = vand.u32 %v2845, 4294901760
        %v3243 = vsub.f32 %v2845, %v3242
        %v3244 = vand.u32 %v3243, 4294901760
        %3245 = vmatpush.msra.mxu0 %v3244
        %v3246 = vand.u32 %v2844, 4294901760
        %v3247 = vsub.f32 %v2844, %v3246
        %v3248 = vand.u32 %v3247, 4294901760
        %3249 = vmatpush.msra.mxu0 %v3248
        %v3250 = vand.u32 %v2843, 4294901760
        %v3251 = vsub.f32 %v2843, %v3250
        %v3252 = vand.u32 %v3251, 4294901760
        %3253 = vmatpush.msra.mxu0 %v3252
        %v3254 = vand.u32 %v2842, 4294901760
        %v3255 = vsub.f32 %v2842, %v3254
        %v3256 = vand.u32 %v3255, 4294901760
        %3257 = vmatpush.msra.mxu0 %v3256
        %v3258 = vand.u32 %v2826, 4294901760
        %3259 = vmatmul.f32.gmra.mxu0 %v3258
        %v3260 = vpop.f32.mrf.mxu0
        %v3261 = vadd.f32 %v3174, %v3260
        %v3262 = vand.u32 %v2827, 4294901760
        %3263 = vmatmul.f32.gmra.mxu0 %v3262
        %v3264 = vpop.f32.mrf.mxu0
        %v3265 = vadd.f32 %v3180, %v3264
        %v3266 = vand.u32 %v2828, 4294901760
        %3267 = vmatmul.f32.gmra.mxu0 %v3266
        %v3268 = vpop.f32.mrf.mxu0
        %v3269 = vadd.f32 %v3186, %v3268
        %v3270 = vand.u32 %v2829, 4294901760
        %3271 = vmatmul.f32.gmra.mxu0 %v3270
        %v3272 = vpop.f32.mrf.mxu0
        %v3273 = vadd.f32 %v3192, %v3272
        %3274 = vdwg.mxu0
        %v3275 = vand.u32 %v2857, 4294901760
        %3276 = vmatpush.msra.mxu0 %v3275
        %v3277 = vand.u32 %v2856, 4294901760
        %3278 = vmatpush.msra.mxu0 %v3277
        %v3279 = vand.u32 %v2855, 4294901760
        %3280 = vmatpush.msra.mxu0 %v3279
        %v3281 = vand.u32 %v2854, 4294901760
        %3282 = vmatpush.msra.mxu0 %v3281
        %v3283 = vand.u32 %v2853, 4294901760
        %3284 = vmatpush.msra.mxu0 %v3283
        %v3285 = vand.u32 %v2852, 4294901760
        %3286 = vmatpush.msra.mxu0 %v3285
        %v3287 = vand.u32 %v2851, 4294901760
        %3288 = vmatpush.msra.mxu0 %v3287
        %v3289 = vand.u32 %v2850, 4294901760
        %3290 = vmatpush.msra.mxu0 %v3289
        %v3291 = vand.u32 %v2849, 4294901760
        %3292 = vmatpush.msra.mxu0 %v3291
        %v3293 = vand.u32 %v2848, 4294901760
        %3294 = vmatpush.msra.mxu0 %v3293
        %v3295 = vand.u32 %v2847, 4294901760
        %3296 = vmatpush.msra.mxu0 %v3295
        %v3297 = vand.u32 %v2846, 4294901760
        %3298 = vmatpush.msra.mxu0 %v3297
        %v3299 = vand.u32 %v2845, 4294901760
        %3300 = vmatpush.msra.mxu0 %v3299
        %v3301 = vand.u32 %v2844, 4294901760
        %3302 = vmatpush.msra.mxu0 %v3301
        %v3303 = vand.u32 %v2843, 4294901760
        %3304 = vmatpush.msra.mxu0 %v3303
        %v3305 = vand.u32 %v2842, 4294901760
        %3306 = vmatpush.msra.mxu0 %v3305
        %v3307 = vand.u32 %v2826, 4294901760
        %3308 = vmatmul.f32.gmra.mxu0 %v3307
        %v3309 = vpop.f32.mrf.mxu0
        %v3310 = vadd.f32 %v3261, %v3309
        %v3311 = vand.u32 %v2827, 4294901760
        %3312 = vmatmul.f32.gmra.mxu0 %v3311
        %v3313 = vpop.f32.mrf.mxu0
        %v3314 = vadd.f32 %v3265, %v3313
        %v3315 = vand.u32 %v2828, 4294901760
        %3316 = vmatmul.f32.gmra.mxu0 %v3315
        %v3317 = vpop.f32.mrf.mxu0
        %v3318 = vadd.f32 %v3269, %v3317
        %v3319 = vand.u32 %v2829, 4294901760
        %3320 = vmatmul.f32.gmra.mxu0 %v3319
        %v3321 = vpop.f32.mrf.mxu0
        %v3322 = vadd.f32 %v3273, %v3321
        %3323 = vdwg.mxu0
        %v3324 = vand.u32 %v2873, 4294901760
        %3325 = vmatpush.msra.mxu0 %v3324
        %v3326 = vand.u32 %v2872, 4294901760
        %3327 = vmatpush.msra.mxu0 %v3326
        %v3328 = vand.u32 %v2871, 4294901760
        %3329 = vmatpush.msra.mxu0 %v3328
        %v3330 = vand.u32 %v2870, 4294901760
        %3331 = vmatpush.msra.mxu0 %v3330
        %v3332 = vand.u32 %v2869, 4294901760
        %3333 = vmatpush.msra.mxu0 %v3332
        %v3334 = vand.u32 %v2868, 4294901760
        %3335 = vmatpush.msra.mxu0 %v3334
        %v3336 = vand.u32 %v2867, 4294901760
        %3337 = vmatpush.msra.mxu0 %v3336
        %v3338 = vand.u32 %v2866, 4294901760
        %3339 = vmatpush.msra.mxu0 %v3338
        %v3340 = vand.u32 %v2865, 4294901760
        %3341 = vmatpush.msra.mxu0 %v3340
        %v3342 = vand.u32 %v2864, 4294901760
        %3343 = vmatpush.msra.mxu0 %v3342
        %v3344 = vand.u32 %v2863, 4294901760
        %3345 = vmatpush.msra.mxu0 %v3344
        %v3346 = vand.u32 %v2862, 4294901760
        %3347 = vmatpush.msra.mxu0 %v3346
        %v3348 = vand.u32 %v2861, 4294901760
        %3349 = vmatpush.msra.mxu0 %v3348
        %v3350 = vand.u32 %v2860, 4294901760
        %3351 = vmatpush.msra.mxu0 %v3350
        %v3352 = vand.u32 %v2859, 4294901760
        %3353 = vmatpush.msra.mxu0 %v3352
        %v3354 = vand.u32 %v2858, 4294901760
        %3355 = vmatpush.msra.mxu0 %v3354
        %v3356 = vand.u32 %v2814, 4294901760
        %v3357 = vsub.f32 %v2814, %v3356
        %v3358 = vand.u32 %v3357, 4294901760
        %v3359 = vsub.f32 %v3357, %v3358
        %v3360 = vand.u32 %v3359, 4294901760
        %3361 = vmatmul.f32.gmra.mxu0 %v3360
        %v3362 = vpop.f32.mrf.mxu0
        %v3363 = vadd.f32 %v3310, %v3362
        %v3364 = vand.u32 %v2815, 4294901760
        %v3365 = vsub.f32 %v2815, %v3364
        %v3366 = vand.u32 %v3365, 4294901760
        %v3367 = vsub.f32 %v3365, %v3366
        %v3368 = vand.u32 %v3367, 4294901760
        %3369 = vmatmul.f32.gmra.mxu0 %v3368
        %v3370 = vpop.f32.mrf.mxu0
        %v3371 = vadd.f32 %v3314, %v3370
        %v3372 = vand.u32 %v2816, 4294901760
        %v3373 = vsub.f32 %v2816, %v3372
        %v3374 = vand.u32 %v3373, 4294901760
        %v3375 = vsub.f32 %v3373, %v3374
        %v3376 = vand.u32 %v3375, 4294901760
        %3377 = vmatmul.f32.gmra.mxu0 %v3376
        %v3378 = vpop.f32.mrf.mxu0
        %v3379 = vadd.f32 %v3318, %v3378
        %v3380 = vand.u32 %v2817, 4294901760
        %v3381 = vsub.f32 %v2817, %v3380
        %v3382 = vand.u32 %v3381, 4294901760
        %v3383 = vsub.f32 %v3381, %v3382
        %v3384 = vand.u32 %v3383, 4294901760
        %3385 = vmatmul.f32.gmra.mxu0 %v3384
        %v3386 = vpop.f32.mrf.mxu0
        %v3387 = vadd.f32 %v3322, %v3386
        %3388 = vdwg.mxu0
        %v3389 = vand.u32 %v2873, 4294901760
        %v3390 = vsub.f32 %v2873, %v3389
        %v3391 = vand.u32 %v3390, 4294901760
        %v3392 = vsub.f32 %v3390, %v3391
        %v3393 = vand.u32 %v3392, 4294901760
        %3394 = vmatpush.msra.mxu0 %v3393
        %v3395 = vand.u32 %v2872, 4294901760
        %v3396 = vsub.f32 %v2872, %v3395
        %v3397 = vand.u32 %v3396, 4294901760
        %v3398 = vsub.f32 %v3396, %v3397
        %v3399 = vand.u32 %v3398, 4294901760
        %3400 = vmatpush.msra.mxu0 %v3399
        %v3401 = vand.u32 %v2871, 4294901760
        %v3402 = vsub.f32 %v2871, %v3401
        %v3403 = vand.u32 %v3402, 4294901760
        %v3404 = vsub.f32 %v3402, %v3403
        %v3405 = vand.u32 %v3404, 4294901760
        %3406 = vmatpush.msra.mxu0 %v3405
        %v3407 = vand.u32 %v2870, 4294901760
        %v3408 = vsub.f32 %v2870, %v3407
        %v3409 = vand.u32 %v3408, 4294901760
        %v3410 = vsub.f32 %v3408, %v3409
        %v3411 = vand.u32 %v3410, 4294901760
        %3412 = vmatpush.msra.mxu0 %v3411
        %v3413 = vand.u32 %v2869, 4294901760
        %v3414 = vsub.f32 %v2869, %v3413
        %v3415 = vand.u32 %v3414, 4294901760
        %v3416 = vsub.f32 %v3414, %v3415
        %v3417 = vand.u32 %v3416, 4294901760
        %3418 = vmatpush.msra.mxu0 %v3417
        %v3419 = vand.u32 %v2868, 4294901760
        %v3420 = vsub.f32 %v2868, %v3419
        %v3421 = vand.u32 %v3420, 4294901760
        %v3422 = vsub.f32 %v3420, %v3421
        %v3423 = vand.u32 %v3422, 4294901760
        %3424 = vmatpush.msra.mxu0 %v3423
        %v3425 = vand.u32 %v2867, 4294901760
        %v3426 = vsub.f32 %v2867, %v3425
        %v3427 = vand.u32 %v3426, 4294901760
        %v3428 = vsub.f32 %v3426, %v3427
        %v3429 = vand.u32 %v3428, 4294901760
        %3430 = vmatpush.msra.mxu0 %v3429
        %v3431 = vand.u32 %v2866, 4294901760
        %v3432 = vsub.f32 %v2866, %v3431
        %v3433 = vand.u32 %v3432, 4294901760
        %v3434 = vsub.f32 %v3432, %v3433
        %v3435 = vand.u32 %v3434, 4294901760
        %3436 = vmatpush.msra.mxu0 %v3435
        %v3437 = vand.u32 %v2865, 4294901760
        %v3438 = vsub.f32 %v2865, %v3437
        %v3439 = vand.u32 %v3438, 4294901760
        %v3440 = vsub.f32 %v3438, %v3439
        %v3441 = vand.u32 %v3440, 4294901760
        %3442 = vmatpush.msra.mxu0 %v3441
        %v3443 = vand.u32 %v2864, 4294901760
        %v3444 = vsub.f32 %v2864, %v3443
        %v3445 = vand.u32 %v3444, 4294901760
        %v3446 = vsub.f32 %v3444, %v3445
        %v3447 = vand.u32 %v3446, 4294901760
        %3448 = vmatpush.msra.mxu0 %v3447
        %v3449 = vand.u32 %v2863, 4294901760
        %v3450 = vsub.f32 %v2863, %v3449
        %v3451 = vand.u32 %v3450, 4294901760
        %v3452 = vsub.f32 %v3450, %v3451
        %v3453 = vand.u32 %v3452, 4294901760
        %3454 = vmatpush.msra.mxu0 %v3453
        %v3455 = vand.u32 %v2862, 4294901760
        %v3456 = vsub.f32 %v2862, %v3455
        %v3457 = vand.u32 %v3456, 4294901760
        %v3458 = vsub.f32 %v3456, %v3457
        %v3459 = vand.u32 %v3458, 4294901760
        %3460 = vmatpush.msra.mxu0 %v3459
        %v3461 = vand.u32 %v2861, 4294901760
        %v3462 = vsub.f32 %v2861, %v3461
        %v3463 = vand.u32 %v3462, 4294901760
        %v3464 = vsub.f32 %v3462, %v3463
        %v3465 = vand.u32 %v3464, 4294901760
        %3466 = vmatpush.msra.mxu0 %v3465
        %v3467 = vand.u32 %v2860, 4294901760
        %v3468 = vsub.f32 %v2860, %v3467
        %v3469 = vand.u32 %v3468, 4294901760
        %v3470 = vsub.f32 %v3468, %v3469
        %v3471 = vand.u32 %v3470, 4294901760
        %3472 = vmatpush.msra.mxu0 %v3471
        %v3473 = vand.u32 %v2859, 4294901760
        %v3474 = vsub.f32 %v2859, %v3473
        %v3475 = vand.u32 %v3474, 4294901760
        %v3476 = vsub.f32 %v3474, %v3475
        %v3477 = vand.u32 %v3476, 4294901760
        %3478 = vmatpush.msra.mxu0 %v3477
        %v3479 = vand.u32 %v2858, 4294901760
        %v3480 = vsub.f32 %v2858, %v3479
        %v3481 = vand.u32 %v3480, 4294901760
        %v3482 = vsub.f32 %v3480, %v3481
        %v3483 = vand.u32 %v3482, 4294901760
        %3484 = vmatpush.msra.mxu0 %v3483
        %v3485 = vand.u32 %v2814, 4294901760
        %3486 = vmatmul.f32.gmra.mxu0 %v3485
        %v3487 = vpop.f32.mrf.mxu0
        %v3488 = vadd.f32 %v3363, %v3487
        %v3489 = vand.u32 %v2815, 4294901760
        %3490 = vmatmul.f32.gmra.mxu0 %v3489
        %v3491 = vpop.f32.mrf.mxu0
        %v3492 = vadd.f32 %v3371, %v3491
        %v3493 = vand.u32 %v2816, 4294901760
        %3494 = vmatmul.f32.gmra.mxu0 %v3493
        %v3495 = vpop.f32.mrf.mxu0
        %v3496 = vadd.f32 %v3379, %v3495
        %v3497 = vand.u32 %v2817, 4294901760
        %3498 = vmatmul.f32.gmra.mxu0 %v3497
        %v3499 = vpop.f32.mrf.mxu0
        %v3500 = vadd.f32 %v3387, %v3499
        %3501 = vdwg.mxu0
        %v3502 = vand.u32 %v2873, 4294901760
        %v3503 = vsub.f32 %v2873, %v3502
        %3504 = vmatpush.msra.mxu0 %v3503
        %v3505 = vand.u32 %v2872, 4294901760
        %v3506 = vsub.f32 %v2872, %v3505
        %3507 = vmatpush.msra.mxu0 %v3506
        %v3508 = vand.u32 %v2871, 4294901760
        %v3509 = vsub.f32 %v2871, %v3508
        %3510 = vmatpush.msra.mxu0 %v3509
        %v3511 = vand.u32 %v2870, 4294901760
        %v3512 = vsub.f32 %v2870, %v3511
        %3513 = vmatpush.msra.mxu0 %v3512
        %v3514 = vand.u32 %v2869, 4294901760
        %v3515 = vsub.f32 %v2869, %v3514
        %3516 = vmatpush.msra.mxu0 %v3515
        %v3517 = vand.u32 %v2868, 4294901760
        %v3518 = vsub.f32 %v2868, %v3517
        %3519 = vmatpush.msra.mxu0 %v3518
        %v3520 = vand.u32 %v2867, 4294901760
        %v3521 = vsub.f32 %v2867, %v3520
        %3522 = vmatpush.msra.mxu0 %v3521
        %v3523 = vand.u32 %v2866, 4294901760
        %v3524 = vsub.f32 %v2866, %v3523
        %3525 = vmatpush.msra.mxu0 %v3524
        %v3526 = vand.u32 %v2865, 4294901760
        %v3527 = vsub.f32 %v2865, %v3526
        %3528 = vmatpush.msra.mxu0 %v3527
        %v3529 = vand.u32 %v2864, 4294901760
        %v3530 = vsub.f32 %v2864, %v3529
        %3531 = vmatpush.msra.mxu0 %v3530
        %v3532 = vand.u32 %v2863, 4294901760
        %v3533 = vsub.f32 %v2863, %v3532
        %3534 = vmatpush.msra.mxu0 %v3533
        %v3535 = vand.u32 %v2862, 4294901760
        %v3536 = vsub.f32 %v2862, %v3535
        %3537 = vmatpush.msra.mxu0 %v3536
        %v3538 = vand.u32 %v2861, 4294901760
        %v3539 = vsub.f32 %v2861, %v3538
        %3540 = vmatpush.msra.mxu0 %v3539
        %v3541 = vand.u32 %v2860, 4294901760
        %v3542 = vsub.f32 %v2860, %v3541
        %3543 = vmatpush.msra.mxu0 %v3542
        %v3544 = vand.u32 %v2859, 4294901760
        %v3545 = vsub.f32 %v2859, %v3544
        %3546 = vmatpush.msra.mxu0 %v3545
        %v3547 = vand.u32 %v2858, 4294901760
        %v3548 = vsub.f32 %v2858, %v3547
        %3549 = vmatpush.msra.mxu0 %v3548
        %v3550 = vand.u32 %v2814, 4294901760
        %v3551 = vsub.f32 %v2814, %v3550
        %3552 = vmatmul.f32.gmra.mxu0 %v3551
        %v3553 = vpop.f32.mrf.mxu0
        %v3554 = vadd.f32 %v3488, %v3553
        %v3555 = vand.u32 %v2815, 4294901760
        %v3556 = vsub.f32 %v2815, %v3555
        %3557 = vmatmul.f32.gmra.mxu0 %v3556
        %v3558 = vpop.f32.mrf.mxu0
        %v3559 = vadd.f32 %v3492, %v3558
        %v3560 = vand.u32 %v2816, 4294901760
        %v3561 = vsub.f32 %v2816, %v3560
        %3562 = vmatmul.f32.gmra.mxu0 %v3561
        %v3563 = vpop.f32.mrf.mxu0
        %v3564 = vadd.f32 %v3496, %v3563
        %v3565 = vand.u32 %v2817, 4294901760
        %v3566 = vsub.f32 %v2817, %v3565
        %3567 = vmatmul.f32.gmra.mxu0 %v3566
        %v3568 = vpop.f32.mrf.mxu0
        %v3569 = vadd.f32 %v3500, %v3568
        %3570 = vdwg.mxu0
        %v3571 = vand.u32 %v2873, 4294901760
        %3572 = vmatpush.msra.mxu0 %v3571
        %v3573 = vand.u32 %v2872, 4294901760
        %3574 = vmatpush.msra.mxu0 %v3573
        %v3575 = vand.u32 %v2871, 4294901760
        %3576 = vmatpush.msra.mxu0 %v3575
        %v3577 = vand.u32 %v2870, 4294901760
        %3578 = vmatpush.msra.mxu0 %v3577
        %v3579 = vand.u32 %v2869, 4294901760
        %3580 = vmatpush.msra.mxu0 %v3579
        %v3581 = vand.u32 %v2868, 4294901760
        %3582 = vmatpush.msra.mxu0 %v3581
        %v3583 = vand.u32 %v2867, 4294901760
        %3584 = vmatpush.msra.mxu0 %v3583
        %v3585 = vand.u32 %v2866, 4294901760
        %3586 = vmatpush.msra.mxu0 %v3585
        %v3587 = vand.u32 %v2865, 4294901760
        %3588 = vmatpush.msra.mxu0 %v3587
        %v3589 = vand.u32 %v2864, 4294901760
        %3590 = vmatpush.msra.mxu0 %v3589
        %v3591 = vand.u32 %v2863, 4294901760
        %3592 = vmatpush.msra.mxu0 %v3591
        %v3593 = vand.u32 %v2862, 4294901760
        %3594 = vmatpush.msra.mxu0 %v3593
        %v3595 = vand.u32 %v2861, 4294901760
        %3596 = vmatpush.msra.mxu0 %v3595
        %v3597 = vand.u32 %v2860, 4294901760
        %3598 = vmatpush.msra.mxu0 %v3597
        %v3599 = vand.u32 %v2859, 4294901760
        %3600 = vmatpush.msra.mxu0 %v3599
        %v3601 = vand.u32 %v2858, 4294901760
        %3602 = vmatpush.msra.mxu0 %v3601
        %v3603 = vand.u32 %v2814, 4294901760
        %v3604 = vsub.f32 %v2814, %v3603
        %v3605 = vand.u32 %v3604, 4294901760
        %3606 = vmatmul.f32.gmra.mxu0 %v3605
        %v3607 = vpop.f32.mrf.mxu0
        %v3608 = vadd.f32 %v3554, %v3607
        %v3609 = vand.u32 %v2815, 4294901760
        %v3610 = vsub.f32 %v2815, %v3609
        %v3611 = vand.u32 %v3610, 4294901760
        %3612 = vmatmul.f32.gmra.mxu0 %v3611
        %v3613 = vpop.f32.mrf.mxu0
        %v3614 = vadd.f32 %v3559, %v3613
        %v3615 = vand.u32 %v2816, 4294901760
        %v3616 = vsub.f32 %v2816, %v3615
        %v3617 = vand.u32 %v3616, 4294901760
        %3618 = vmatmul.f32.gmra.mxu0 %v3617
        %v3619 = vpop.f32.mrf.mxu0
        %v3620 = vadd.f32 %v3564, %v3619
        %v3621 = vand.u32 %v2817, 4294901760
        %v3622 = vsub.f32 %v2817, %v3621
        %v3623 = vand.u32 %v3622, 4294901760
        %3624 = vmatmul.f32.gmra.mxu0 %v3623
        %v3625 = vpop.f32.mrf.mxu0
        %v3626 = vadd.f32 %v3569, %v3625
        %3627 = vdwg.mxu0
        %v3628 = vand.u32 %v2873, 4294901760
        %v3629 = vsub.f32 %v2873, %v3628
        %v3630 = vand.u32 %v3629, 4294901760
        %3631 = vmatpush.msra.mxu0 %v3630
        %v3632 = vand.u32 %v2872, 4294901760
        %v3633 = vsub.f32 %v2872, %v3632
        %v3634 = vand.u32 %v3633, 4294901760
        %3635 = vmatpush.msra.mxu0 %v3634
        %v3636 = vand.u32 %v2871, 4294901760
        %v3637 = vsub.f32 %v2871, %v3636
        %v3638 = vand.u32 %v3637, 4294901760
        %3639 = vmatpush.msra.mxu0 %v3638
        %v3640 = vand.u32 %v2870, 4294901760
        %v3641 = vsub.f32 %v2870, %v3640
        %v3642 = vand.u32 %v3641, 4294901760
        %3643 = vmatpush.msra.mxu0 %v3642
        %v3644 = vand.u32 %v2869, 4294901760
        %v3645 = vsub.f32 %v2869, %v3644
        %v3646 = vand.u32 %v3645, 4294901760
        %3647 = vmatpush.msra.mxu0 %v3646
        %v3648 = vand.u32 %v2868, 4294901760
        %v3649 = vsub.f32 %v2868, %v3648
        %v3650 = vand.u32 %v3649, 4294901760
        %3651 = vmatpush.msra.mxu0 %v3650
        %v3652 = vand.u32 %v2867, 4294901760
        %v3653 = vsub.f32 %v2867, %v3652
        %v3654 = vand.u32 %v3653, 4294901760
        %3655 = vmatpush.msra.mxu0 %v3654
        %v3656 = vand.u32 %v2866, 4294901760
        %v3657 = vsub.f32 %v2866, %v3656
        %v3658 = vand.u32 %v3657, 4294901760
        %3659 = vmatpush.msra.mxu0 %v3658
        %v3660 = vand.u32 %v2865, 4294901760
        %v3661 = vsub.f32 %v2865, %v3660
        %v3662 = vand.u32 %v3661, 4294901760
        %3663 = vmatpush.msra.mxu0 %v3662
        %v3664 = vand.u32 %v2864, 4294901760
        %v3665 = vsub.f32 %v2864, %v3664
        %v3666 = vand.u32 %v3665, 4294901760
        %3667 = vmatpush.msra.mxu0 %v3666
        %v3668 = vand.u32 %v2863, 4294901760
        %v3669 = vsub.f32 %v2863, %v3668
        %v3670 = vand.u32 %v3669, 4294901760
        %3671 = vmatpush.msra.mxu0 %v3670
        %v3672 = vand.u32 %v2862, 4294901760
        %v3673 = vsub.f32 %v2862, %v3672
        %v3674 = vand.u32 %v3673, 4294901760
        %3675 = vmatpush.msra.mxu0 %v3674
        %v3676 = vand.u32 %v2861, 4294901760
        %v3677 = vsub.f32 %v2861, %v3676
        %v3678 = vand.u32 %v3677, 4294901760
        %3679 = vmatpush.msra.mxu0 %v3678
        %v3680 = vand.u32 %v2860, 4294901760
        %v3681 = vsub.f32 %v2860, %v3680
        %v3682 = vand.u32 %v3681, 4294901760
        %3683 = vmatpush.msra.mxu0 %v3682
        %v3684 = vand.u32 %v2859, 4294901760
        %v3685 = vsub.f32 %v2859, %v3684
        %v3686 = vand.u32 %v3685, 4294901760
        %3687 = vmatpush.msra.mxu0 %v3686
        %v3688 = vand.u32 %v2858, 4294901760
        %v3689 = vsub.f32 %v2858, %v3688
        %v3690 = vand.u32 %v3689, 4294901760
        %3691 = vmatpush.msra.mxu0 %v3690
        %v3692 = vand.u32 %v2814, 4294901760
        %3693 = vmatmul.f32.gmra.mxu0 %v3692
        %v3694 = vpop.f32.mrf.mxu0
        %v3695 = vadd.f32 %v3608, %v3694
        %v3696 = vand.u32 %v2815, 4294901760
        %3697 = vmatmul.f32.gmra.mxu0 %v3696
        %v3698 = vpop.f32.mrf.mxu0
        %v3699 = vadd.f32 %v3614, %v3698
        %v3700 = vand.u32 %v2816, 4294901760
        %3701 = vmatmul.f32.gmra.mxu0 %v3700
        %v3702 = vpop.f32.mrf.mxu0
        %v3703 = vadd.f32 %v3620, %v3702
        %v3704 = vand.u32 %v2817, 4294901760
        %3705 = vmatmul.f32.gmra.mxu0 %v3704
        %v3706 = vpop.f32.mrf.mxu0
        %v3707 = vadd.f32 %v3626, %v3706
        %3708 = vdwg.mxu0
        %v3709 = vand.u32 %v2873, 4294901760
        %3710 = vmatpush.msra.mxu0 %v3709
        %v3711 = vand.u32 %v2872, 4294901760
        %3712 = vmatpush.msra.mxu0 %v3711
        %v3713 = vand.u32 %v2871, 4294901760
        %3714 = vmatpush.msra.mxu0 %v3713
        %v3715 = vand.u32 %v2870, 4294901760
        %3716 = vmatpush.msra.mxu0 %v3715
        %v3717 = vand.u32 %v2869, 4294901760
        %3718 = vmatpush.msra.mxu0 %v3717
        %v3719 = vand.u32 %v2868, 4294901760
        %3720 = vmatpush.msra.mxu0 %v3719
        %v3721 = vand.u32 %v2867, 4294901760
        %3722 = vmatpush.msra.mxu0 %v3721
        %v3723 = vand.u32 %v2866, 4294901760
        %3724 = vmatpush.msra.mxu0 %v3723
        %v3725 = vand.u32 %v2865, 4294901760
        %3726 = vmatpush.msra.mxu0 %v3725
        %v3727 = vand.u32 %v2864, 4294901760
        %3728 = vmatpush.msra.mxu0 %v3727
        %v3729 = vand.u32 %v2863, 4294901760
        %3730 = vmatpush.msra.mxu0 %v3729
        %v3731 = vand.u32 %v2862, 4294901760
        %3732 = vmatpush.msra.mxu0 %v3731
        %v3733 = vand.u32 %v2861, 4294901760
        %3734 = vmatpush.msra.mxu0 %v3733
        %v3735 = vand.u32 %v2860, 4294901760
        %3736 = vmatpush.msra.mxu0 %v3735
        %v3737 = vand.u32 %v2859, 4294901760
        %3738 = vmatpush.msra.mxu0 %v3737
        %v3739 = vand.u32 %v2858, 4294901760
        %3740 = vmatpush.msra.mxu0 %v3739
        %v3741 = vand.u32 %v2814, 4294901760
        %3742 = vmatmul.f32.gmra.mxu0 %v3741
        %v3743 = vpop.f32.mrf.mxu0
        %v3744 = vadd.f32 %v3695, %v3743
        %v3745 = vand.u32 %v2815, 4294901760
        %3746 = vmatmul.f32.gmra.mxu0 %v3745
        %v3747 = vpop.f32.mrf.mxu0
        %v3748 = vadd.f32 %v3699, %v3747
        %v3749 = vand.u32 %v2816, 4294901760
        %3750 = vmatmul.f32.gmra.mxu0 %v3749
        %v3751 = vpop.f32.mrf.mxu0
        %v3752 = vadd.f32 %v3703, %v3751
        %v3753 = vand.u32 %v2817, 4294901760
        %3754 = vmatmul.f32.gmra.mxu0 %v3753
        %v3755 = vpop.f32.mrf.mxu0
        %v3756 = vadd.f32 %v3707, %v3755
        %3757 = vdwg.mxu0
        %v3758 = vand.u32 %v2889, 4294901760
        %3759 = vmatpush.msra.mxu0 %v3758
        %v3760 = vand.u32 %v2888, 4294901760
        %3761 = vmatpush.msra.mxu0 %v3760
        %v3762 = vand.u32 %v2887, 4294901760
        %3763 = vmatpush.msra.mxu0 %v3762
        %v3764 = vand.u32 %v2886, 4294901760
        %3765 = vmatpush.msra.mxu0 %v3764
        %v3766 = vand.u32 %v2885, 4294901760
        %3767 = vmatpush.msra.mxu0 %v3766
        %v3768 = vand.u32 %v2884, 4294901760
        %3769 = vmatpush.msra.mxu0 %v3768
        %v3770 = vand.u32 %v2883, 4294901760
        %3771 = vmatpush.msra.mxu0 %v3770
        %v3772 = vand.u32 %v2882, 4294901760
        %3773 = vmatpush.msra.mxu0 %v3772
        %v3774 = vand.u32 %v2881, 4294901760
        %3775 = vmatpush.msra.mxu0 %v3774
        %v3776 = vand.u32 %v2880, 4294901760
        %3777 = vmatpush.msra.mxu0 %v3776
        %v3778 = vand.u32 %v2879, 4294901760
        %3779 = vmatpush.msra.mxu0 %v3778
        %v3780 = vand.u32 %v2878, 4294901760
        %3781 = vmatpush.msra.mxu0 %v3780
        %v3782 = vand.u32 %v2877, 4294901760
        %3783 = vmatpush.msra.mxu0 %v3782
        %v3784 = vand.u32 %v2876, 4294901760
        %3785 = vmatpush.msra.mxu0 %v3784
        %v3786 = vand.u32 %v2875, 4294901760
        %3787 = vmatpush.msra.mxu0 %v3786
        %v3788 = vand.u32 %v2874, 4294901760
        %3789 = vmatpush.msra.mxu0 %v3788
        %v3790 = vand.u32 %v2838, 4294901760
        %v3791 = vsub.f32 %v2838, %v3790
        %v3792 = vand.u32 %v3791, 4294901760
        %v3793 = vsub.f32 %v3791, %v3792
        %v3794 = vand.u32 %v3793, 4294901760
        %3795 = vmatmul.f32.gmra.mxu0 %v3794
        %v3796 = vpop.f32.mrf.mxu0
        %v3797 = vadd.f32 %v3744, %v3796
        %v3798 = vand.u32 %v2839, 4294901760
        %v3799 = vsub.f32 %v2839, %v3798
        %v3800 = vand.u32 %v3799, 4294901760
        %v3801 = vsub.f32 %v3799, %v3800
        %v3802 = vand.u32 %v3801, 4294901760
        %3803 = vmatmul.f32.gmra.mxu0 %v3802
        %v3804 = vpop.f32.mrf.mxu0
        %v3805 = vadd.f32 %v3748, %v3804
        %v3806 = vand.u32 %v2840, 4294901760
        %v3807 = vsub.f32 %v2840, %v3806
        %v3808 = vand.u32 %v3807, 4294901760
        %v3809 = vsub.f32 %v3807, %v3808
        %v3810 = vand.u32 %v3809, 4294901760
        %3811 = vmatmul.f32.gmra.mxu0 %v3810
        %v3812 = vpop.f32.mrf.mxu0
        %v3813 = vadd.f32 %v3752, %v3812
        %v3814 = vand.u32 %v2841, 4294901760
        %v3815 = vsub.f32 %v2841, %v3814
        %v3816 = vand.u32 %v3815, 4294901760
        %v3817 = vsub.f32 %v3815, %v3816
        %v3818 = vand.u32 %v3817, 4294901760
        %3819 = vmatmul.f32.gmra.mxu0 %v3818
        %v3820 = vpop.f32.mrf.mxu0
        %v3821 = vadd.f32 %v3756, %v3820
        %3822 = vdwg.mxu0
        %v3823 = vand.u32 %v2889, 4294901760
        %v3824 = vsub.f32 %v2889, %v3823
        %v3825 = vand.u32 %v3824, 4294901760
        %v3826 = vsub.f32 %v3824, %v3825
        %v3827 = vand.u32 %v3826, 4294901760
        %3828 = vmatpush.msra.mxu0 %v3827
        %v3829 = vand.u32 %v2888, 4294901760
        %v3830 = vsub.f32 %v2888, %v3829
        %v3831 = vand.u32 %v3830, 4294901760
        %v3832 = vsub.f32 %v3830, %v3831
        %v3833 = vand.u32 %v3832, 4294901760
        %3834 = vmatpush.msra.mxu0 %v3833
        %v3835 = vand.u32 %v2887, 4294901760
        %v3836 = vsub.f32 %v2887, %v3835
        %v3837 = vand.u32 %v3836, 4294901760
        %v3838 = vsub.f32 %v3836, %v3837
        %v3839 = vand.u32 %v3838, 4294901760
        %3840 = vmatpush.msra.mxu0 %v3839
        %v3841 = vand.u32 %v2886, 4294901760
        %v3842 = vsub.f32 %v2886, %v3841
        %v3843 = vand.u32 %v3842, 4294901760
        %v3844 = vsub.f32 %v3842, %v3843
        %v3845 = vand.u32 %v3844, 4294901760
        %3846 = vmatpush.msra.mxu0 %v3845
        %v3847 = vand.u32 %v2885, 4294901760
        %v3848 = vsub.f32 %v2885, %v3847
        %v3849 = vand.u32 %v3848, 4294901760
        %v3850 = vsub.f32 %v3848, %v3849
        %v3851 = vand.u32 %v3850, 4294901760
        %3852 = vmatpush.msra.mxu0 %v3851
        %v3853 = vand.u32 %v2884, 4294901760
        %v3854 = vsub.f32 %v2884, %v3853
        %v3855 = vand.u32 %v3854, 4294901760
        %v3856 = vsub.f32 %v3854, %v3855
        %v3857 = vand.u32 %v3856, 4294901760
        %3858 = vmatpush.msra.mxu0 %v3857
        %v3859 = vand.u32 %v2883, 4294901760
        %v3860 = vsub.f32 %v2883, %v3859
        %v3861 = vand.u32 %v3860, 4294901760
        %v3862 = vsub.f32 %v3860, %v3861
        %v3863 = vand.u32 %v3862, 4294901760
        %3864 = vmatpush.msra.mxu0 %v3863
        %v3865 = vand.u32 %v2882, 4294901760
        %v3866 = vsub.f32 %v2882, %v3865
        %v3867 = vand.u32 %v3866, 4294901760
        %v3868 = vsub.f32 %v3866, %v3867
        %v3869 = vand.u32 %v3868, 4294901760
        %3870 = vmatpush.msra.mxu0 %v3869
        %v3871 = vand.u32 %v2881, 4294901760
        %v3872 = vsub.f32 %v2881, %v3871
        %v3873 = vand.u32 %v3872, 4294901760
        %v3874 = vsub.f32 %v3872, %v3873
        %v3875 = vand.u32 %v3874, 4294901760
        %3876 = vmatpush.msra.mxu0 %v3875
        %v3877 = vand.u32 %v2880, 4294901760
        %v3878 = vsub.f32 %v2880, %v3877
        %v3879 = vand.u32 %v3878, 4294901760
        %v3880 = vsub.f32 %v3878, %v3879
        %v3881 = vand.u32 %v3880, 4294901760
        %3882 = vmatpush.msra.mxu0 %v3881
        %v3883 = vand.u32 %v2879, 4294901760
        %v3884 = vsub.f32 %v2879, %v3883
        %v3885 = vand.u32 %v3884, 4294901760
        %v3886 = vsub.f32 %v3884, %v3885
        %v3887 = vand.u32 %v3886, 4294901760
        %3888 = vmatpush.msra.mxu0 %v3887
        %v3889 = vand.u32 %v2878, 4294901760
        %v3890 = vsub.f32 %v2878, %v3889
        %v3891 = vand.u32 %v3890, 4294901760
        %v3892 = vsub.f32 %v3890, %v3891
        %v3893 = vand.u32 %v3892, 4294901760
        %3894 = vmatpush.msra.mxu0 %v3893
        %v3895 = vand.u32 %v2877, 4294901760
        %v3896 = vsub.f32 %v2877, %v3895
        %v3897 = vand.u32 %v3896, 4294901760
        %v3898 = vsub.f32 %v3896, %v3897
        %v3899 = vand.u32 %v3898, 4294901760
        %3900 = vmatpush.msra.mxu0 %v3899
        %v3901 = vand.u32 %v2876, 4294901760
        %v3902 = vsub.f32 %v2876, %v3901
        %v3903 = vand.u32 %v3902, 4294901760
        %v3904 = vsub.f32 %v3902, %v3903
        %v3905 = vand.u32 %v3904, 4294901760
        %3906 = vmatpush.msra.mxu0 %v3905
        %v3907 = vand.u32 %v2875, 4294901760
        %v3908 = vsub.f32 %v2875, %v3907
        %v3909 = vand.u32 %v3908, 4294901760
        %v3910 = vsub.f32 %v3908, %v3909
        %v3911 = vand.u32 %v3910, 4294901760
        %3912 = vmatpush.msra.mxu0 %v3911
        %v3913 = vand.u32 %v2874, 4294901760
        %v3914 = vsub.f32 %v2874, %v3913
        %v3915 = vand.u32 %v3914, 4294901760
        %v3916 = vsub.f32 %v3914, %v3915
        %v3917 = vand.u32 %v3916, 4294901760
        %3918 = vmatpush.msra.mxu0 %v3917
        %v3919 = vand.u32 %v2838, 4294901760
        %3920 = vmatmul.f32.gmra.mxu0 %v3919
        %v3921 = vpop.f32.mrf.mxu0
        %v3922 = vadd.f32 %v3797, %v3921
        %v3923 = vand.u32 %v2839, 4294901760
        %3924 = vmatmul.f32.gmra.mxu0 %v3923
        %v3925 = vpop.f32.mrf.mxu0
        %v3926 = vadd.f32 %v3805, %v3925
        %v3927 = vand.u32 %v2840, 4294901760
        %3928 = vmatmul.f32.gmra.mxu0 %v3927
        %v3929 = vpop.f32.mrf.mxu0
        %v3930 = vadd.f32 %v3813, %v3929
        %v3931 = vand.u32 %v2841, 4294901760
        %3932 = vmatmul.f32.gmra.mxu0 %v3931
        %v3933 = vpop.f32.mrf.mxu0
        %v3934 = vadd.f32 %v3821, %v3933
        %3935 = vdwg.mxu0
        %v3936 = vand.u32 %v2889, 4294901760
        %v3937 = vsub.f32 %v2889, %v3936
        %3938 = vmatpush.msra.mxu0 %v3937
        %v3939 = vand.u32 %v2888, 4294901760
        %v3940 = vsub.f32 %v2888, %v3939
        %3941 = vmatpush.msra.mxu0 %v3940
        %v3942 = vand.u32 %v2887, 4294901760
        %v3943 = vsub.f32 %v2887, %v3942
        %3944 = vmatpush.msra.mxu0 %v3943
        %v3945 = vand.u32 %v2886, 4294901760
        %v3946 = vsub.f32 %v2886, %v3945
        %3947 = vmatpush.msra.mxu0 %v3946
        %v3948 = vand.u32 %v2885, 4294901760
        %v3949 = vsub.f32 %v2885, %v3948
        %3950 = vmatpush.msra.mxu0 %v3949
        %v3951 = vand.u32 %v2884, 4294901760
        %v3952 = vsub.f32 %v2884, %v3951
        %3953 = vmatpush.msra.mxu0 %v3952
        %v3954 = vand.u32 %v2883, 4294901760
        %v3955 = vsub.f32 %v2883, %v3954
        %3956 = vmatpush.msra.mxu0 %v3955
        %v3957 = vand.u32 %v2882, 4294901760
        %v3958 = vsub.f32 %v2882, %v3957
        %3959 = vmatpush.msra.mxu0 %v3958
        %v3960 = vand.u32 %v2881, 4294901760
        %v3961 = vsub.f32 %v2881, %v3960
        %3962 = vmatpush.msra.mxu0 %v3961
        %v3963 = vand.u32 %v2880, 4294901760
        %v3964 = vsub.f32 %v2880, %v3963
        %3965 = vmatpush.msra.mxu0 %v3964
        %v3966 = vand.u32 %v2879, 4294901760
        %v3967 = vsub.f32 %v2879, %v3966
        %3968 = vmatpush.msra.mxu0 %v3967
        %v3969 = vand.u32 %v2878, 4294901760
        %v3970 = vsub.f32 %v2878, %v3969
        %3971 = vmatpush.msra.mxu0 %v3970
        %v3972 = vand.u32 %v2877, 4294901760
        %v3973 = vsub.f32 %v2877, %v3972
        %3974 = vmatpush.msra.mxu0 %v3973
        %v3975 = vand.u32 %v2876, 4294901760
        %v3976 = vsub.f32 %v2876, %v3975
        %3977 = vmatpush.msra.mxu0 %v3976
        %v3978 = vand.u32 %v2875, 4294901760
        %v3979 = vsub.f32 %v2875, %v3978
        %3980 = vmatpush.msra.mxu0 %v3979
        %v3981 = vand.u32 %v2874, 4294901760
        %v3982 = vsub.f32 %v2874, %v3981
        %3983 = vmatpush.msra.mxu0 %v3982
        %v3984 = vand.u32 %v2838, 4294901760
        %v3985 = vsub.f32 %v2838, %v3984
        %3986 = vmatmul.f32.gmra.mxu0 %v3985
        %v3987 = vpop.f32.mrf.mxu0
        %v3988 = vadd.f32 %v3922, %v3987
        %v3989 = vand.u32 %v2839, 4294901760
        %v3990 = vsub.f32 %v2839, %v3989
        %3991 = vmatmul.f32.gmra.mxu0 %v3990
        %v3992 = vpop.f32.mrf.mxu0
        %v3993 = vadd.f32 %v3926, %v3992
        %v3994 = vand.u32 %v2840, 4294901760
        %v3995 = vsub.f32 %v2840, %v3994
        %3996 = vmatmul.f32.gmra.mxu0 %v3995
        %v3997 = vpop.f32.mrf.mxu0
        %v3998 = vadd.f32 %v3930, %v3997
        %v3999 = vand.u32 %v2841, 4294901760
        %v4000 = vsub.f32 %v2841, %v3999
        %4001 = vmatmul.f32.gmra.mxu0 %v4000
        %v4002 = vpop.f32.mrf.mxu0
        %v4003 = vadd.f32 %v3934, %v4002
        %4004 = vdwg.mxu0
        %v4005 = vand.u32 %v2889, 4294901760
        %4006 = vmatpush.msra.mxu0 %v4005
        %v4007 = vand.u32 %v2888, 4294901760
        %4008 = vmatpush.msra.mxu0 %v4007
        %v4009 = vand.u32 %v2887, 4294901760
        %4010 = vmatpush.msra.mxu0 %v4009
        %v4011 = vand.u32 %v2886, 4294901760
        %4012 = vmatpush.msra.mxu0 %v4011
        %v4013 = vand.u32 %v2885, 4294901760
        %4014 = vmatpush.msra.mxu0 %v4013
        %v4015 = vand.u32 %v2884, 4294901760
        %4016 = vmatpush.msra.mxu0 %v4015
        %v4017 = vand.u32 %v2883, 4294901760
        %4018 = vmatpush.msra.mxu0 %v4017
        %v4019 = vand.u32 %v2882, 4294901760
        %4020 = vmatpush.msra.mxu0 %v4019
        %v4021 = vand.u32 %v2881, 4294901760
        %4022 = vmatpush.msra.mxu0 %v4021
        %v4023 = vand.u32 %v2880, 4294901760
        %4024 = vmatpush.msra.mxu0 %v4023
        %v4025 = vand.u32 %v2879, 4294901760
        %4026 = vmatpush.msra.mxu0 %v4025
        %v4027 = vand.u32 %v2878, 4294901760
        %4028 = vmatpush.msra.mxu0 %v4027
        %v4029 = vand.u32 %v2877, 4294901760
        %4030 = vmatpush.msra.mxu0 %v4029
        %v4031 = vand.u32 %v2876, 4294901760
        %4032 = vmatpush.msra.mxu0 %v4031
        %v4033 = vand.u32 %v2875, 4294901760
        %4034 = vmatpush.msra.mxu0 %v4033
        %v4035 = vand.u32 %v2874, 4294901760
        %4036 = vmatpush.msra.mxu0 %v4035
        %v4037 = vand.u32 %v2838, 4294901760
        %v4038 = vsub.f32 %v2838, %v4037
        %v4039 = vand.u32 %v4038, 4294901760
        %4040 = vmatmul.f32.gmra.mxu0 %v4039
        %v4041 = vpop.f32.mrf.mxu0
        %v4042 = vadd.f32 %v3988, %v4041
        %v4043 = vand.u32 %v2839, 4294901760
        %v4044 = vsub.f32 %v2839, %v4043
        %v4045 = vand.u32 %v4044, 4294901760
        %4046 = vmatmul.f32.gmra.mxu0 %v4045
        %v4047 = vpop.f32.mrf.mxu0
        %v4048 = vadd.f32 %v3993, %v4047
        %v4049 = vand.u32 %v2840, 4294901760
        %v4050 = vsub.f32 %v2840, %v4049
        %v4051 = vand.u32 %v4050, 4294901760
        %4052 = vmatmul.f32.gmra.mxu0 %v4051
        %v4053 = vpop.f32.mrf.mxu0
        %v4054 = vadd.f32 %v3998, %v4053
        %v4055 = vand.u32 %v2841, 4294901760
        %v4056 = vsub.f32 %v2841, %v4055
        %v4057 = vand.u32 %v4056, 4294901760
        %4058 = vmatmul.f32.gmra.mxu0 %v4057
        %v4059 = vpop.f32.mrf.mxu0
        %v4060 = vadd.f32 %v4003, %v4059
        %4061 = vdwg.mxu0
        %v4062 = vand.u32 %v2889, 4294901760
        %v4063 = vsub.f32 %v2889, %v4062
        %v4064 = vand.u32 %v4063, 4294901760
        %4065 = vmatpush.msra.mxu0 %v4064
        %v4066 = vand.u32 %v2888, 4294901760
        %v4067 = vsub.f32 %v2888, %v4066
        %v4068 = vand.u32 %v4067, 4294901760
        %4069 = vmatpush.msra.mxu0 %v4068
        %v4070 = vand.u32 %v2887, 4294901760
        %v4071 = vsub.f32 %v2887, %v4070
        %v4072 = vand.u32 %v4071, 4294901760
        %4073 = vmatpush.msra.mxu0 %v4072
        %v4074 = vand.u32 %v2886, 4294901760
        %v4075 = vsub.f32 %v2886, %v4074
        %v4076 = vand.u32 %v4075, 4294901760
        %4077 = vmatpush.msra.mxu0 %v4076
        %v4078 = vand.u32 %v2885, 4294901760
        %v4079 = vsub.f32 %v2885, %v4078
        %v4080 = vand.u32 %v4079, 4294901760
        %4081 = vmatpush.msra.mxu0 %v4080
        %v4082 = vand.u32 %v2884, 4294901760
        %v4083 = vsub.f32 %v2884, %v4082
        %v4084 = vand.u32 %v4083, 4294901760
        %4085 = vmatpush.msra.mxu0 %v4084
        %v4086 = vand.u32 %v2883, 4294901760
        %v4087 = vsub.f32 %v2883, %v4086
        %v4088 = vand.u32 %v4087, 4294901760
        %4089 = vmatpush.msra.mxu0 %v4088
        %v4090 = vand.u32 %v2882, 4294901760
        %v4091 = vsub.f32 %v2882, %v4090
        %v4092 = vand.u32 %v4091, 4294901760
        %4093 = vmatpush.msra.mxu0 %v4092
        %v4094 = vand.u32 %v2881, 4294901760
        %v4095 = vsub.f32 %v2881, %v4094
        %v4096 = vand.u32 %v4095, 4294901760
        %4097 = vmatpush.msra.mxu0 %v4096
        %v4098 = vand.u32 %v2880, 4294901760
        %v4099 = vsub.f32 %v2880, %v4098
        %v4100 = vand.u32 %v4099, 4294901760
        %4101 = vmatpush.msra.mxu0 %v4100
        %v4102 = vand.u32 %v2879, 4294901760
        %v4103 = vsub.f32 %v2879, %v4102
        %v4104 = vand.u32 %v4103, 4294901760
        %4105 = vmatpush.msra.mxu0 %v4104
        %v4106 = vand.u32 %v2878, 4294901760
        %v4107 = vsub.f32 %v2878, %v4106
        %v4108 = vand.u32 %v4107, 4294901760
        %4109 = vmatpush.msra.mxu0 %v4108
        %v4110 = vand.u32 %v2877, 4294901760
        %v4111 = vsub.f32 %v2877, %v4110
        %v4112 = vand.u32 %v4111, 4294901760
        %4113 = vmatpush.msra.mxu0 %v4112
        %v4114 = vand.u32 %v2876, 4294901760
        %v4115 = vsub.f32 %v2876, %v4114
        %v4116 = vand.u32 %v4115, 4294901760
        %4117 = vmatpush.msra.mxu0 %v4116
        %v4118 = vand.u32 %v2875, 4294901760
        %v4119 = vsub.f32 %v2875, %v4118
        %v4120 = vand.u32 %v4119, 4294901760
        %4121 = vmatpush.msra.mxu0 %v4120
        %v4122 = vand.u32 %v2874, 4294901760
        %v4123 = vsub.f32 %v2874, %v4122
        %v4124 = vand.u32 %v4123, 4294901760
        %4125 = vmatpush.msra.mxu0 %v4124
        %v4126 = vand.u32 %v2838, 4294901760
        %4127 = vmatmul.f32.gmra.mxu0 %v4126
        %v4128 = vpop.f32.mrf.mxu0
        %v4129 = vadd.f32 %v4042, %v4128
        %v4130 = vand.u32 %v2839, 4294901760
        %4131 = vmatmul.f32.gmra.mxu0 %v4130
        %v4132 = vpop.f32.mrf.mxu0
        %v4133 = vadd.f32 %v4048, %v4132
        %v4134 = vand.u32 %v2840, 4294901760
        %4135 = vmatmul.f32.gmra.mxu0 %v4134
        %v4136 = vpop.f32.mrf.mxu0
        %v4137 = vadd.f32 %v4054, %v4136
        %v4138 = vand.u32 %v2841, 4294901760
        %4139 = vmatmul.f32.gmra.mxu0 %v4138
        %v4140 = vpop.f32.mrf.mxu0
        %v4141 = vadd.f32 %v4060, %v4140
        %4142 = vdwg.mxu0
        %v4143 = vand.u32 %v2889, 4294901760
        %4144 = vmatpush.msra.mxu0 %v4143
        %v4145 = vand.u32 %v2888, 4294901760
        %4146 = vmatpush.msra.mxu0 %v4145
        %v4147 = vand.u32 %v2887, 4294901760
        %4148 = vmatpush.msra.mxu0 %v4147
        %v4149 = vand.u32 %v2886, 4294901760
        %4150 = vmatpush.msra.mxu0 %v4149
        %v4151 = vand.u32 %v2885, 4294901760
        %4152 = vmatpush.msra.mxu0 %v4151
        %v4153 = vand.u32 %v2884, 4294901760
        %4154 = vmatpush.msra.mxu0 %v4153
        %v4155 = vand.u32 %v2883, 4294901760
        %4156 = vmatpush.msra.mxu0 %v4155
        %v4157 = vand.u32 %v2882, 4294901760
        %4158 = vmatpush.msra.mxu0 %v4157
        %v4159 = vand.u32 %v2881, 4294901760
        %4160 = vmatpush.msra.mxu0 %v4159
        %v4161 = vand.u32 %v2880, 4294901760
        %4162 = vmatpush.msra.mxu0 %v4161
        %v4163 = vand.u32 %v2879, 4294901760
        %4164 = vmatpush.msra.mxu0 %v4163
        %v4165 = vand.u32 %v2878, 4294901760
        %4166 = vmatpush.msra.mxu0 %v4165
        %v4167 = vand.u32 %v2877, 4294901760
        %4168 = vmatpush.msra.mxu0 %v4167
        %v4169 = vand.u32 %v2876, 4294901760
        %4170 = vmatpush.msra.mxu0 %v4169
        %v4171 = vand.u32 %v2875, 4294901760
        %4172 = vmatpush.msra.mxu0 %v4171
        %v4173 = vand.u32 %v2874, 4294901760
        %4174 = vmatpush.msra.mxu0 %v4173
        %v4175 = vand.u32 %v2838, 4294901760
        %4176 = vmatmul.f32.gmra.mxu0 %v4175
        %v4177 = vpop.f32.mrf.mxu0
        %v4178 = vadd.f32 %v4129, %v4177
        %v4179 = vand.u32 %v2839, 4294901760
        %4180 = vmatmul.f32.gmra.mxu0 %v4179
        %v4181 = vpop.f32.mrf.mxu0
        %v4182 = vadd.f32 %v4133, %v4181
        %v4183 = vand.u32 %v2840, 4294901760
        %4184 = vmatmul.f32.gmra.mxu0 %v4183
        %v4185 = vpop.f32.mrf.mxu0
        %v4186 = vadd.f32 %v4137, %v4185
        %v4187 = vand.u32 %v2841, 4294901760
        %4188 = vmatmul.f32.gmra.mxu0 %v4187
        %v4189 = vpop.f32.mrf.mxu0
        %v4190 = vadd.f32 %v4141, %v4189
        %4191 = vdwg.mxu0
        %v4192 = vmul.f32 %v4178, %v4178
        %v4193 = vmul.f32 %v4182, %v4182
        %v4194 = vmul.f32 %v4186, %v4186
        %v4195 = vmul.f32 %v4190, %v4190
        %4196 = vadd.xlane.f32.xlu0 %v4192
        %v4197 = vpop.xlane.xlu0 %4196
        %4198 = vadd.xlane.f32.xlu0 %v4193
        %v4199 = vpop.xlane.xlu0 %4198
        %4200 = vadd.xlane.f32.xlu0 %v4194
        %v4201 = vpop.xlane.xlu0 %4200
        %4202 = vadd.xlane.f32.xlu0 %v4195
        %v4203 = vpop.xlane.xlu0 %4202
        %v4204 = vmul.f32 %v4197, %v2680
        %v4205 = vmul.f32 %v4199, %v2680
        %v4206 = vmul.f32 %v4201, %v2680
        %v4207 = vmul.f32 %v4203, %v2680
        %v4208 = vadd.f32 %v4204, 1e-06
        %v4209 = vadd.f32 %v4205, 1e-06
        %v4210 = vadd.f32 %v4206, 1e-06
        %v4211 = vadd.f32 %v4207, 1e-06
        %v4212 = vrsqrt.pop %v4208
        %v4213 = vmul.f32 %v4212, %v4208
        %v4214 = vmul.f32 %v4213, %v4212
        %v4215 = vmul.f32 0.5, %v4214
        %v4216 = vsub.f32 1.5, %v4215
        %v4217 = vmul.f32 %v4212, %v4216
        %vm4218 = vweird.f32 %v4208
        %vm4219 = vweird.f32 %v4212
        %vm4220 = vmor %vm4218, %vm4219
        %v4221 = vsel %vm4220, %v4212, %v4217
        %v4222 = vrsqrt.pop %v4209
        %v4223 = vmul.f32 %v4222, %v4209
        %v4224 = vmul.f32 %v4223, %v4222
        %v4225 = vmul.f32 0.5, %v4224
        %v4226 = vsub.f32 1.5, %v4225
        %v4227 = vmul.f32 %v4222, %v4226
        %vm4228 = vweird.f32 %v4209
        %vm4229 = vweird.f32 %v4222
        %vm4230 = vmor %vm4228, %vm4229
        %v4231 = vsel %vm4230, %v4222, %v4227
        %v4232 = vrsqrt.pop %v4210
        %v4233 = vmul.f32 %v4232, %v4210
        %v4234 = vmul.f32 %v4233, %v4232
        %v4235 = vmul.f32 0.5, %v4234
        %v4236 = vsub.f32 1.5, %v4235
        %v4237 = vmul.f32 %v4232, %v4236
        %vm4238 = vweird.f32 %v4210
        %vm4239 = vweird.f32 %v4232
        %vm4240 = vmor %vm4238, %vm4239
        %v4241 = vsel %vm4240, %v4232, %v4237
        %v4242 = vrsqrt.pop %v4211
        %v4243 = vmul.f32 %v4242, %v4211
        %v4244 = vmul.f32 %v4243, %v4242
        %v4245 = vmul.f32 0.5, %v4244
        %v4246 = vsub.f32 1.5, %v4245
        %v4247 = vmul.f32 %v4242, %v4246
        %vm4248 = vweird.f32 %v4211
        %vm4249 = vweird.f32 %v4242
        %vm4250 = vmor %vm4248, %vm4249
        %v4251 = vsel %vm4250, %v4242, %v4247
        %v4252 = vmul.f32 %v4178, %v4221
        %v4253 = vmul.f32 %v4182, %v4231
        %v4254 = vmul.f32 %v4186, %v4241
        %v4255 = vmul.f32 %v4190, %v4251
        %v4256 = vperm.slane %v357, 0
        %v4257 = vmul.f32 %v4252, %v4256
        %v4258 = vmul.f32 %v4253, %v4256
        %v4259 = vmul.f32 %v4254, %v4256
        %v4260 = vmul.f32 %v4255, %v4256
        %v4261 = vperm.slane %v358, 0
        %v4262 = vadd.f32 %v4257, %v4261
        %v4263 = vadd.f32 %v4258, %v4261
        %v4264 = vadd.f32 %v4259, %v4261
        %v4265 = vadd.f32 %v4260, %v4261
        %v4270 = vrot.slane %v4262, 2
        %v4271 = vrot.slane %v4262, 4
        %v4272 = vrot.slane %v4262, 6
        %v4273 = vrot.slane %v4263, 2
        %v4274 = vrot.slane %v4263, 4
        %v4275 = vrot.slane %v4263, 6
        %v4276 = vrot.slane %v4264, 2
        %v4277 = vrot.slane %v4264, 4
        %v4278 = vrot.slane %v4264, 6
        %v4279 = vrot.slane %v4265, 2
        %v4280 = vrot.slane %v4265, 4
        %v4281 = vrot.slane %v4265, 6
        %vm4294 = vcmask 1041408
        %v4295 = vsel %vm4294, %v4262, 0.0
        %v4296 = vrot.slane %v4295, 4
        %v4297 = vadd.f32 %v4295, %v4296
        %v4298 = vrot.slane %v4297, 2
        %v4299 = vadd.f32 %v4297, %v4298
        %v4300 = vrot.slane %v4299, 1
        %v4301 = vadd.f32 %v4299, %v4300
        %v4302 = vsel %vm4294, %v4270, 0.0
        %v4303 = vrot.slane %v4302, 4
        %v4304 = vadd.f32 %v4302, %v4303
        %v4305 = vrot.slane %v4304, 2
        %v4306 = vadd.f32 %v4304, %v4305
        %v4307 = vrot.slane %v4306, 1
        %v4308 = vadd.f32 %v4306, %v4307
        %v4309 = vsel %vm4294, %v4271, 0.0
        %v4310 = vrot.slane %v4309, 4
        %v4311 = vadd.f32 %v4309, %v4310
        %v4312 = vrot.slane %v4311, 2
        %v4313 = vadd.f32 %v4311, %v4312
        %v4314 = vrot.slane %v4313, 1
        %v4315 = vadd.f32 %v4313, %v4314
        %v4316 = vsel %vm4294, %v4272, 0.0
        %v4317 = vrot.slane %v4316, 4
        %v4318 = vadd.f32 %v4316, %v4317
        %v4319 = vrot.slane %v4318, 2
        %v4320 = vadd.f32 %v4318, %v4319
        %v4321 = vrot.slane %v4320, 1
        %v4322 = vadd.f32 %v4320, %v4321
        %v4323 = vsel %vm4294, %v4263, 0.0
        %v4324 = vrot.slane %v4323, 4
        %v4325 = vadd.f32 %v4323, %v4324
        %v4326 = vrot.slane %v4325, 2
        %v4327 = vadd.f32 %v4325, %v4326
        %v4328 = vrot.slane %v4327, 1
        %v4329 = vadd.f32 %v4327, %v4328
        %v4330 = vsel %vm4294, %v4273, 0.0
        %v4331 = vrot.slane %v4330, 4
        %v4332 = vadd.f32 %v4330, %v4331
        %v4333 = vrot.slane %v4332, 2
        %v4334 = vadd.f32 %v4332, %v4333
        %v4335 = vrot.slane %v4334, 1
        %v4336 = vadd.f32 %v4334, %v4335
        %v4337 = vsel %vm4294, %v4274, 0.0
        %v4338 = vrot.slane %v4337, 4
        %v4339 = vadd.f32 %v4337, %v4338
        %v4340 = vrot.slane %v4339, 2
        %v4341 = vadd.f32 %v4339, %v4340
        %v4342 = vrot.slane %v4341, 1
        %v4343 = vadd.f32 %v4341, %v4342
        %v4344 = vsel %vm4294, %v4275, 0.0
        %v4345 = vrot.slane %v4344, 4
        %v4346 = vadd.f32 %v4344, %v4345
        %v4347 = vrot.slane %v4346, 2
        %v4348 = vadd.f32 %v4346, %v4347
        %v4349 = vrot.slane %v4348, 1
        %v4350 = vadd.f32 %v4348, %v4349
        %v4351 = vsel %vm4294, %v4264, 0.0
        %v4352 = vrot.slane %v4351, 4
        %v4353 = vadd.f32 %v4351, %v4352
        %v4354 = vrot.slane %v4353, 2
        %v4355 = vadd.f32 %v4353, %v4354
        %v4356 = vrot.slane %v4355, 1
        %v4357 = vadd.f32 %v4355, %v4356
        %v4358 = vsel %vm4294, %v4276, 0.0
        %v4359 = vrot.slane %v4358, 4
        %v4360 = vadd.f32 %v4358, %v4359
        %v4361 = vrot.slane %v4360, 2
        %v4362 = vadd.f32 %v4360, %v4361
        %v4363 = vrot.slane %v4362, 1
        %v4364 = vadd.f32 %v4362, %v4363
        %v4365 = vsel %vm4294, %v4277, 0.0
        %v4366 = vrot.slane %v4365, 4
        %v4367 = vadd.f32 %v4365, %v4366
        %v4368 = vrot.slane %v4367, 2
        %v4369 = vadd.f32 %v4367, %v4368
        %v4370 = vrot.slane %v4369, 1
        %v4371 = vadd.f32 %v4369, %v4370
        %v4372 = vsel %vm4294, %v4278, 0.0
        %v4373 = vrot.slane %v4372, 4
        %v4374 = vadd.f32 %v4372, %v4373
        %v4375 = vrot.slane %v4374, 2
        %v4376 = vadd.f32 %v4374, %v4375
        %v4377 = vrot.slane %v4376, 1
        %v4378 = vadd.f32 %v4376, %v4377
        %v4379 = vsel %vm4294, %v4265, 0.0
        %v4380 = vrot.slane %v4379, 4
        %v4381 = vadd.f32 %v4379, %v4380
        %v4382 = vrot.slane %v4381, 2
        %v4383 = vadd.f32 %v4381, %v4382
        %v4384 = vrot.slane %v4383, 1
        %v4385 = vadd.f32 %v4383, %v4384
        %v4386 = vsel %vm4294, %v4279, 0.0
        %v4387 = vrot.slane %v4386, 4
        %v4388 = vadd.f32 %v4386, %v4387
        %v4389 = vrot.slane %v4388, 2
        %v4390 = vadd.f32 %v4388, %v4389
        %v4391 = vrot.slane %v4390, 1
        %v4392 = vadd.f32 %v4390, %v4391
        %v4393 = vsel %vm4294, %v4280, 0.0
        %v4394 = vrot.slane %v4393, 4
        %v4395 = vadd.f32 %v4393, %v4394
        %v4396 = vrot.slane %v4395, 2
        %v4397 = vadd.f32 %v4395, %v4396
        %v4398 = vrot.slane %v4397, 1
        %v4399 = vadd.f32 %v4397, %v4398
        %v4400 = vsel %vm4294, %v4281, 0.0
        %v4401 = vrot.slane %v4400, 4
        %v4402 = vadd.f32 %v4400, %v4401
        %v4403 = vrot.slane %v4402, 2
        %v4404 = vadd.f32 %v4402, %v4403
        %v4405 = vrot.slane %v4404, 1
        %v4406 = vadd.f32 %v4404, %v4405
        %v4407 = vmul.f32 %v4301, 0.5
        %v4408 = vmul.f32 %v4308, 0.5
        %v4409 = vmul.f32 %v4315, 0.5
        %v4410 = vmul.f32 %v4322, 0.5
        %v4411 = vmul.f32 %v4329, 0.5
        %v4412 = vmul.f32 %v4336, 0.5
        %v4413 = vmul.f32 %v4343, 0.5
        %v4414 = vmul.f32 %v4350, 0.5
        %v4415 = vmul.f32 %v4357, 0.5
        %v4416 = vmul.f32 %v4364, 0.5
        %v4417 = vmul.f32 %v4371, 0.5
        %v4418 = vmul.f32 %v4378, 0.5
        %v4419 = vmul.f32 %v4385, 0.5
        %v4420 = vmul.f32 %v4392, 0.5
        %v4421 = vmul.f32 %v4399, 0.5
        %v4422 = vmul.f32 %v4406, 0.5
        %vm4439 = vcmask 1041409
        %v4440 = vsel %vm4439, %v4408, %v4407
        %vm4441 = vcmask 1042434
        %v4442 = vsel %vm4441, %v4409, %v4440
        %vm4443 = vcmask 1043459
        %v4444 = vsel %vm4443, %v4410, %v4442
        %vm4445 = vcmask 1044484
        %v4446 = vsel %vm4445, %v4411, %v4444
        %vm4447 = vcmask 1045509
        %v4448 = vsel %vm4447, %v4412, %v4446
        %vm4449 = vcmask 1046534
        %v4450 = vsel %vm4449, %v4413, %v4448
        %vm4451 = vcmask 1047559
        %v4452 = vsel %vm4451, %v4414, %v4450
        %v4453 = vsel %vm4439, %v4416, %v4415
        %v4454 = vsel %vm4441, %v4417, %v4453
        %v4455 = vsel %vm4443, %v4418, %v4454
        %v4456 = vsel %vm4445, %v4419, %v4455
        %v4457 = vsel %vm4447, %v4420, %v4456
        %v4458 = vsel %vm4449, %v4421, %v4457
        %v4459 = vsel %vm4451, %v4422, %v4458
        %4462 = vst [vmem:[%s193] sm:$0xff] %v4452
        %4463 = vst [vmem:[%s193 + $0x8] sm:$0xff] %v4459
        %s4464 = sand.u32 %s115, 1
        %s4465 = scalar_lea.sflag [#allocation3], %s4464
        %s4466 = sand.u32 %s115, 1
        %s4467 = smul.addr %s4466, 16
        %s4468 = scalar_lea.vmem [#allocation2], %s4467
        // Predicated region
        $region37: #{conv_block.1} parent=35 // pred_check
          %p4469 = pneg %p125
        $region38: #{conv_block.1} parent=35 // pred_check_branch
          %4471 = sbr.rel (%p4469) target = $region40
        $region39: #{conv_block.1} parent=35 // pred_region
          %s4472 = smul.u32 2, %s18
          %4474 = vsyncadd %s4465, 0
          %s4475 = smul.addr %s4472, 8
          %s4476 = scalar_lea.hbm %s4, %s4475
          %s4477 = sshll.u32 %s4468, 4
          %s4478 = int_to_ptr.vmem [resolvable:$true] %s4477
          %s4479 = sshll.u32 %s4476, 4
          %s4480 = int_to_ptr.hbm [resolvable:$true] %s4479
          %4485 = dma.vmem_to_hbm [thread:$0]  %s4478, 256, %s4480, %s4465, 128, 128, 8
        $region40: #{conv_block.1} parent=35 // pred_fallthru
          _
      $region36: #{conv_block.1} parent=5 // pred_fallthru
        _
      %p4486 = scmp.le.s32.totalorder 2, %s13
      // Predicated region
      $region41: #{conv_block.1} parent=5 // pred_check
        %p4487 = pneg %p4486
      $region42: #{conv_block.1} parent=5 // pred_check_branch
        %4489 = sbr.rel (%p4487) target = $region44
      $region43: #{conv_block.1} parent=5 // pred_region
        %s4490 = ssub.s32 %s13, 2
        // Predicated region
        $region45: #{conv_block.1} parent=43 // pred_check
          %p4491 = pneg %p131
        $region46: #{conv_block.1} parent=43 // pred_check_branch
          %4493 = sbr.rel (%p4491) target = $region48
        $region47: #{conv_block.1} parent=43 // pred_region
          %s4494 = sand.u32 %s116, 1
          %s4495 = scalar_lea.sflag [#allocation3], %s4494
          %s4496 = sand.u32 %s116, 1
          %s4497 = smul.addr %s4496, 16
          %s4498 = scalar_lea.vmem [#allocation2], %s4497
          %4500 = dma.done %s4495, 256
        $region48: #{conv_block.1} parent=43 // pred_fallthru
          _
      $region44: #{conv_block.1} parent=5 // pred_fallthru
        _
    $region6: #{conv_block.1} parent=1 // loop_footer
      %s17 = sadd.s32 1, %s13
    $region7: #{conv_block.1} parent=1 // loop_footer_branch
      %12 = sbr.rel target = $region3
    $region8: #{conv_block.1} parent=1 // loop_exit
      _
    %4501 = vsyncpa [#allocation3], 1
    %s4502 = scalar_lea.sflag [#allocation3], 1
    %4503 = vsyncpa %s4502, 1

</llo_original>
